<compile_context>
chip_gen: v6e
topology: v6e:2x2x1
jax: 0.10.0
libtpu: 0.0.40
codegen_flags: <defaults>
</compile_context>

<pallas_src>
import functools

import jax
import jax.numpy as jnp
from jax import lax
from jax.experimental import pallas as pl
from jax.experimental.pallas import tpu as pltpu


# ---------------------------------------------------------------------------
# packed-parameter layout helpers (offsets are static Python ints shared by
# the packer in __init__ and the kernel's static slicing)
# ---------------------------------------------------------------------------
def _make_layout(entries):
    layout, off = {}, 0
    width = max(c for _, _, c in entries)
    for name, r, c in entries:
        layout[name] = (off, r, c)
        off += r
    return layout, off, width


def _pack_slab(layout, rows, width, dtype, tensors):
    slab = jnp.zeros((rows, width), dtype)
    for name, arr in tensors.items():
        off, r, c = layout[name]
        assert arr.shape == (r, c), (name, arr.shape, (r, c))
        slab = slab.at[off:off + r, 0:c].set(arr.astype(dtype))
    return slab


# ---------------------------------------------------------------------------
# Pallas kernel: whole PoseEncoder forward for ONE batch element (grid step)
# ---------------------------------------------------------------------------
def _pose_encoder_kernel(x_ref, wq_ref, pf_ref, o_ref, *, layout, H1, W1, H2, W2):
    """x_ref : (1, 27, H1*W1) bf16  stem im2col slab (rows: tap*3+cin, cols: i*W1+j)
    wq_ref: (Rq, Wq)     bf16   packed matmul weights, (Cout, K) orientation
    pf_ref: (Rp, 9)      f32    packed biases + depthwise weights
    o_ref : (1, 6, 1)    f32    pose_cam column for this batch element
    """
    f32, bf16 = jnp.float32, jnp.bfloat16
    qoff, poff = layout["q"], layout["p"]

    def qw(name):                                   # bf16 matmul weight slice
        o, r, c = qoff[name]
        return wq_ref[o:o + r, 0:c]

    def pf(name):                                   # f32 bias / dw weight slice
        o, r, c = poff[name]
        return pf_ref[o:o + r, 0:c]

    def mxu(w, x):                                  # (Cout, K) x (K, M) on MXU
        return jnp.dot(w, x.astype(bf16), preferred_element_type=f32)

    def dw3x3(x, w_dw, b_dw, hs, ws, ho, wo, stride):
        """Depthwise 3x3, pad=1.  Per-tap neighbours are gathered with 0/1
        selection matrices (built from iota) on the MXU so `x` stays a
        lane-dense (C, M) slab; the MAC / bias stay f32 on the VPU."""
        ms, mo = hs * ws, ho * wo
        assert wo & (wo - 1) == 0, "wo must be a power of two"
        sh = wo.bit_length() - 1
        row = lax.broadcasted_iota(jnp.int32, (ms, mo), 0)
        col = lax.broadcasted_iota(jnp.int32, (ms, mo), 1)
        io, jo = col >> sh, col & (wo - 1)
        acc = jnp.zeros((x.shape[0], mo), f32)
        for ki in range(3):
            for kj in range(3):
                t = 3 * ki + kj
                r = stride * io + (ki - 1)
                c = stride * jo + (kj - 1)
                ok = (r >= 0) & (r < hs) & (c >= 0) & (c < ws)
                sel = jnp.where(ok & (row == r * ws + c), 1.0, 0.0).astype(f32)
                acc = acc + jnp.dot(x, sel, preferred_element_type=f32) * w_dw[:, t:t + 1]
        return acc + b_dw

    # ---- stem: 3x3 / stride-2 conv as ONE K=27 GEMM, bias + ReLU ----
    s = jnp.maximum(
        jnp.dot(qw("stem"), x_ref[0], preferred_element_type=f32) + pf("stem_b"),
        0.0)                                                     # (c1, H1*W1)

    # ---- block 1: depthwise 3x3 / s2 + ReLU, pointwise 1x1 + ReLU ----
    h0 = jnp.maximum(dw3x3(s, pf("dw1_w"), pf("dw1_b"), H1, W1, H2, W2, 2), 0.0)
    h1 = jnp.maximum(mxu(qw("pw1"), h0) + pf("pw1_b"), 0.0)      # (c2, M2)

    # ---- block 2: inverted residual (expand -> dw 3x3/s1 -> project + skip) ----
    e = jnp.maximum(mxu(qw("exp"), h1) + pf("exp_b"), 0.0)       # (ce, M2)
    d = jnp.maximum(dw3x3(e, pf("dw2_w"), pf("dw2_b"), H2, W2, H2, W2, 1), 0.0)
    xr = h1 + (mxu(qw("prj"), d) + pf("prj_b"))                  # (c2, M2)

    # ---- feature 1x1 + ReLU ----
    f = jnp.maximum(mxu(qw("feat"), xr) + pf("feat_b"), 0.0)     # (cf, M2)

    # ---- adaptive_avg_pool2d((1,1)) + Linear(cf, 6) ----
    pooled = jnp.sum(f, axis=1, keepdims=True) * (1.0 / (H2 * W2))   # (cf, 1)
    o_ref[0] = mxu(qw("fc"), pooled) + pf("fc_b")                # (6, 1)


# ---------------------------------------------------------------------------
# forward (one pallas_call)
# ---------------------------------------------------------------------------
def _forward(wq_slab, pf_slab, img, *, layout):
    B, Cin, H, W = img.shape
    assert H % 4 == 0 and W % 4 == 0, "toy backbone expects H, W divisible by 4"
    assert layout["q"]["stem"][2] == 9 * Cin
    H1, W1 = (H - 1) // 2 + 1, (W - 1) // 2 + 1
    H2, W2 = (H1 - 1) // 2 + 1, (W1 - 1) // 2 + 1

    # stem im2col slab (B, 27, H1*W1): rows ordered tap*Cin + cin, columns are
    # the folded spatial dim.  Built once from the tiny input image and cast to
    # bf16 once (input-side layout plumbing only; no HBM intermediates later).
    xp = jnp.pad(img.astype(jnp.float32), ((0, 0), (0, 0), (1, 1), (1, 1)))
    taps = []
    for ki in range(3):
        for kj in range(3):
            taps.append(xp[:, :, ki:ki + 2 * H1 - 1:2, kj:kj + 2 * W1 - 1:2])
    slab = jnp.stack(taps, axis=1).reshape(B, 9 * Cin, H1 * W1).astype(jnp.bfloat16)

    kernel = functools.partial(_pose_encoder_kernel, layout=layout,
                               H1=H1, W1=W1, H2=H2, W2=W2)
    out = pl.pallas_call(
        kernel,
        out_shape=jax.ShapeDtypeStruct((B, 6, 1), jnp.float32),
        grid=(B,),
        in_specs=[
            pl.BlockSpec((1, 9 * Cin, H1 * W1), lambda b: (b, 0, 0)),
            pl.BlockSpec(wq_slab.shape, lambda b: (0, 0)),
            pl.BlockSpec(pf_slab.shape, lambda b: (0, 0)),
        ],
        out_specs=pl.BlockSpec((1, 6, 1), lambda b: (b, 0, 0)),
        compiler_params=pltpu.CompilerParams(
            dimension_semantics=("parallel",),      # v7x: one TC per batch element
            vmem_limit_bytes=32 * 1024 * 1024),
    )(slab, wq_slab, pf_slab)
    # TODO(synk): at production resolutions re-grid over (B x H2-row) tiles and
    # re-derive the VMEM budget for v7x's 64 MiB before scaling past toy sizes.
    return out.reshape(B, 6)


# ---------------------------------------------------------------------------
# pure-JAX reference (same op semantics; same bf16 casts on the MXU matmuls,
# depthwise / bias / relu / pooling stay f32)
# ---------------------------------------------------------------------------
def _reference_forward(p, img):
    f32, bf16 = jnp.float32, jnp.bfloat16

    def mm(a, w):
        return jnp.dot(a.astype(bf16), w.astype(bf16), preferred_element_type=f32)

    def conv3x3(x, w, b, stride, relu):
        Bx, H, W, C = x.shape
        xp = jnp.pad(x, ((0, 0), (1, 1), (1, 1), (0, 0)))
        Ho, Wo = (H - 1) // stride + 1, (W - 1) // stride + 1
        acc = jnp.zeros((Bx * Ho * Wo, w.shape[-1]), f32)
        for ki in range(3):
            for kj in range(3):
                tap = xp[:, ki:ki + stride * (Ho - 1) + 1:stride,
                         kj:kj + stride * (Wo - 1) + 1:stride, :]
                acc = acc + mm(tap.reshape(-1, C), w[ki, kj])
        y = acc + b[None, :]
        if relu:
            y = jnp.maximum(y, 0.0)
        return y.reshape(Bx, Ho, Wo, -1)

    def dw3x3(x, w, b, stride, relu):
        Bx, H, W, C = x.shape
        xp = jnp.pad(x, ((0, 0), (1, 1), (1, 1), (0, 0)))
        Ho, Wo = (H - 1) // stride + 1, (W - 1) // stride + 1
        acc = jnp.broadcast_to(b[None, None, None, :], (Bx, Ho, Wo, C)).astype(f32)
        for ki in range(3):
            for kj in range(3):
                tap = xp[:, ki:ki + stride * (Ho - 1) + 1:stride,
                         kj:kj + stride * (Wo - 1) + 1:stride, :]
                acc = acc + tap * w[ki, kj][None, None, None, :]
        if relu:
            acc = jnp.maximum(acc, 0.0)
        return acc

    def conv1x1(x, w, b, relu):
        Bx, H, W, C = x.shape
        y = mm(x.reshape(-1, C), w) + b[None, :]
        if relu:
            y = jnp.maximum(y, 0.0)
        return y.reshape(Bx, H, W, -1)

    x = jnp.transpose(img, (0, 2, 3, 1)).astype(f32)
    B = x.shape[0]
    x = conv3x3(x, p["stem_w"], p["stem_b"], 2, True)
    x = dw3x3(x, p["dw1_w"], p["dw1_b"], 2, True)
    x = conv1x1(x, p["pw1_w"], p["pw1_b"], True)
    y = conv1x1(x, p["exp_w"], p["exp_b"], True)
    y = dw3x3(y, p["dw2_w"], p["dw2_b"], 1, True)
    y = conv1x1(y, p["prj_w"], p["prj_b"], False)
    x = x + y
    f = conv1x1(x, p["feat_w"], p["feat_b"], True)
    pooled = jnp.mean(f.reshape(B, -1, f.shape[-1]), axis=1)
    return mm(pooled, p["fc_w"].T) + p["fc_b"][None, :]


# ---------------------------------------------------------------------------
# PoseEncoder
# ---------------------------------------------------------------------------
def _he(key, shape, fan_in):
    return jax.random.normal(key, shape, jnp.float32) * jnp.sqrt(2.0 / fan_in)


class PoseEncoderPallas:
    """Scaled-down PoseEncoder: MobileNetV3-minimal-style backbone + pose/cam head."""

    def __init__(self, key, feature_dim=32):
        c1, c2, ce = 8, 16, 32
        cf = feature_dim
        self.feature_dim = feature_dim
        ks = jax.random.split(key, 9)
        p = {}
        # stem: 3x3 stride-2 conv, 3 -> c1
        p["stem_w"] = _he(ks[0], (3, 3, 3, c1), 3 * 9)
        p["stem_b"] = jnp.zeros((c1,), jnp.float32)
        # block 1: depthwise 3x3 stride-2 + pointwise c1 -> c2
        p["dw1_w"] = _he(ks[1], (3, 3, c1), 9)
        p["dw1_b"] = jnp.zeros((c1,), jnp.float32)
        p["pw1_w"] = _he(ks[2], (c1, c2), c1)
        p["pw1_b"] = jnp.zeros((c2,), jnp.float32)
        # block 2: inverted residual (expand -> dw -> project) + skip
        p["exp_w"] = _he(ks[3], (c2, ce), c2)
        p["exp_b"] = jnp.zeros((ce,), jnp.float32)
        p["dw2_w"] = _he(ks[4], (3, 3, ce), 9)
        p["dw2_b"] = jnp.zeros((ce,), jnp.float32)
        p["prj_w"] = _he(ks[5], (ce, c2), ce)
        p["prj_b"] = jnp.zeros((c2,), jnp.float32)
        # final 1x1 feature conv -> feature_dim (stand-in for the 576-ch stage)
        p["feat_w"] = _he(ks[6], (c2, cf), c2)
        p["feat_b"] = jnp.zeros((cf,), jnp.float32)
        # pose_cam_layers = nn.Linear(feature_dim, 6)  (weight: (6, feature_dim))
        bound = 1.0 / float(cf) ** 0.5
        fc_w = jax.random.uniform(ks[7], (6, cf), jnp.float32, -bound, bound)
        fc_b = jax.random.uniform(ks[8], (6,), jnp.float32, -bound, bound)
        # init_weights(): exact replication of the PyTorch module
        fc_w = (fc_w * 0.001).at[3].set(0.0)
        fc_b = (fc_b * 0.001).at[3].set(7.0)
        p["fc_w"], p["fc_b"] = fc_w, fc_b
        self.params = p

        # ---- pack all weights once: one bf16 slab + one f32 slab (2 DMAs) ----
        q_layout, q_rows, q_width = _make_layout([
            ("stem", c1, 27), ("pw1", c2, c1), ("exp", ce, c2),
            ("prj", c2, ce), ("feat", cf, c2), ("fc", 6, cf)])
        p_layout, p_rows, p_width = _make_layout([
            ("stem_b", c1, 1), ("dw1_w", c1, 9), ("dw1_b", c1, 1),
            ("pw1_b", c2, 1), ("exp_b", ce, 1), ("dw2_w", ce, 9),
            ("dw2_b", ce, 1), ("prj_b", c2, 1), ("feat_b", cf, 1),
            ("fc_b", 6, 1)])
        self._layout = {"q": q_layout, "p": p_layout}
        self.wq_slab = _pack_slab(q_layout, q_rows, q_width, jnp.bfloat16, {
            # (Cout, K) orientation so the kernel feeds the MXU as (Cout,K)x(K,M)
            "stem": jnp.transpose(p["stem_w"], (3, 0, 1, 2)).reshape(c1, 27),
            "pw1": p["pw1_w"].T,
            "exp": p["exp_w"].T,
            "prj": p["prj_w"].T,
            "feat": p["feat_w"].T,
            "fc": p["fc_w"],                    # already (6, cf): no per-call .T
        })
        self.pf_slab = _pack_slab(p_layout, p_rows, p_width, jnp.float32, {
            "stem_b": p["stem_b"].reshape(c1, 1),
            "dw1_w": p["dw1_w"].reshape(9, c1).T,
            "dw1_b": p["dw1_b"].reshape(c1, 1),
            "pw1_b": p["pw1_b"].reshape(c2, 1),
            "exp_b": p["exp_b"].reshape(ce, 1),
            "dw2_w": p["dw2_w"].reshape(9, ce).T,
            "dw2_b": p["dw2_b"].reshape(ce, 1),
            "prj_b": p["prj_b"].reshape(c2, 1),
            "feat_b": p["feat_b"].reshape(cf, 1),
            "fc_b": p["fc_b"].reshape(6, 1),
        })
        self._fwd = jax.jit(functools.partial(_forward, layout=self._layout))

    def __call__(self, img):
        # img: (B, 3, H, W) NCHW, float32 (PyTorch convention)
        pose_cam = self._fwd(self.wq_slab, self.pf_slab, img)
        return {"pose_params": pose_cam[..., :3], "cam": pose_cam[..., 3:]}


if __name__ == "__main__":
    img = jax.random.normal(jax.random.PRNGKey(0), (2, 3, 16, 16), jnp.float32)
    model = PoseEncoderPallas(jax.random.PRNGKey(42), feature_dim=32)
    out = model(img)
    jax.block_until_ready(out)

    assert out["pose_params"].shape == (2, 3)
    assert out["cam"].shape == (2, 3)
    # init_weights sets fc weight row 3 to zero and bias[3]=7 -> cam scale == 7
    assert jnp.allclose(out["cam"][:, 0], 7.0, atol=1e-4)

    # pure-JAX reference (matching bf16 matmul casts) for end-to-end correctness
    ref = jax.jit(_reference_forward)(model.params, img)
    got = jnp.concatenate([out["pose_params"], out["cam"]], axis=-1)
    assert jnp.allclose(got, ref, atol=1e-4, rtol=1e-3), "mismatch vs JAX reference"
    print("KERNEL_OK")
</pallas_src>

<mosaic_0001>
module attributes {stable_mosaic.version = 11 : i64} {
  func.func @_pose_encoder_kernel(%arg0: i32, %arg1: memref<1x27x64xbf16, #tpu.memory_space<vmem>>, %arg2: memref<110x32xbf16, #tpu.memory_space<vmem>>, %arg3: memref<190x9xf32, #tpu.memory_space<vmem>>, %arg4: memref<1x6x1xf32, #tpu.memory_space<vmem>>) attributes {dimension_semantics = [#tpu.dimension_semantics<parallel>], iteration_bounds = array<i64: 2>, scalar_prefetch = 0 : i64, scratch_operands = 0 : i64, tpu.core_type = #tpu.core_type<tc>, window_params = [{transform_indices = @transform_0, window_bounds = array<i64: 1, 27, 64>}, {pipeline_mode = #tpu.pipeline_mode<synchronous>, transform_indices = @transform_1, window_bounds = array<i64: 110, 32>}, {pipeline_mode = #tpu.pipeline_mode<synchronous>, transform_indices = @transform_2, window_bounds = array<i64: 190, 9>}, {transform_indices = @transform_3, window_bounds = array<i64: 1, 6, 1>}]} {
    %c0 = arith.constant 0 : index
    %c0_0 = arith.constant 0 : index
    %0 = vector.load %arg2[%c0, %c0_0] : memref<110x32xbf16, #tpu.memory_space<vmem>>, vector<8x27xbf16>
    %c0_1 = arith.constant 0 : index
    %c0_2 = arith.constant 0 : index
    %c0_3 = arith.constant 0 : index
    %1 = vector.load %arg1[%c0_1, %c0_2, %c0_3] : memref<1x27x64xbf16, #tpu.memory_space<vmem>>, vector<1x27x64xbf16>
    %2 = vector.shape_cast %1 : vector<1x27x64xbf16> to vector<27x64xbf16>
    %cst = arith.constant dense<0.000000e+00> : vector<8x64xf32>
    %3 = tpu.matmul %0, %2, %cst {dimension_numbers = #tpu.dot_dimension_numbers<[1], [0], [0], [1], [0, 0, 1, 1], [], []>} : vector<8x27xbf16>, vector<27x64xbf16>, vector<8x64xf32> -> vector<8x64xf32>
    %c0_4 = arith.constant 0 : index
    %c0_5 = arith.constant 0 : index
    %4 = vector.load %arg3[%c0_4, %c0_5] : memref<190x9xf32, #tpu.memory_space<vmem>>, vector<8x1xf32>
    %5 = vector.broadcast %4 : vector<8x1xf32> to vector<8x64xf32>
    %6 = arith.addf %3, %5 : vector<8x64xf32>
    %cst_6 = arith.constant 0.000000e+00 : f32
    %7 = vector.broadcast %cst_6 : f32 to vector<8x64xf32>
    %8 = arith.maximumf %6, %7 : vector<8x64xf32>
    %c8 = arith.constant 8 : index
    %c0_7 = arith.constant 0 : index
    %9 = vector.load %arg3[%c8, %c0_7] : memref<190x9xf32, #tpu.memory_space<vmem>>, vector<8x9xf32>
    %c16 = arith.constant 16 : index
    %c0_8 = arith.constant 0 : index
    %10 = vector.load %arg3[%c16, %c0_8] : memref<190x9xf32, #tpu.memory_space<vmem>>, vector<8x1xf32>
    %11 = tpu.iota {dimensions = array<i32: 0>} : vector<64x16xi32>
    %12 = tpu.iota {dimensions = array<i32: 1>} : vector<64x16xi32>
    %c2_i32 = arith.constant 2 : i32
    %13 = vector.broadcast %c2_i32 : i32 to vector<64x16xi32>
    %14 = arith.shrsi %12, %13 : vector<64x16xi32>
    %c3_i32 = arith.constant 3 : i32
    %15 = vector.broadcast %c3_i32 : i32 to vector<64x16xi32>
    %16 = arith.andi %12, %15 : vector<64x16xi32>
    %cst_9 = arith.constant 0.000000e+00 : f32
    %17 = vector.broadcast %cst_9 : f32 to vector<8x16xf32>
    %c2_i32_10 = arith.constant 2 : i32
    %18 = vector.broadcast %c2_i32_10 : i32 to vector<64x16xi32>
    %19 = arith.muli %18, %14 : vector<64x16xi32>
    %c-1_i32 = arith.constant -1 : i32
    %20 = vector.broadcast %c-1_i32 : i32 to vector<64x16xi32>
    %21 = arith.addi %19, %20 : vector<64x16xi32>
    %c2_i32_11 = arith.constant 2 : i32
    %22 = vector.broadcast %c2_i32_11 : i32 to vector<64x16xi32>
    %23 = arith.muli %22, %16 : vector<64x16xi32>
    %c-1_i32_12 = arith.constant -1 : i32
    %24 = vector.broadcast %c-1_i32_12 : i32 to vector<64x16xi32>
    %25 = arith.addi %23, %24 : vector<64x16xi32>
    %c0_i32 = arith.constant 0 : i32
    %26 = vector.broadcast %c0_i32 : i32 to vector<64x16xi32>
    %27 = arith.cmpi sge, %21, %26 : vector<64x16xi32>
    %c8_i32 = arith.constant 8 : i32
    %28 = vector.broadcast %c8_i32 : i32 to vector<64x16xi32>
    %29 = arith.cmpi slt, %21, %28 : vector<64x16xi32>
    %30 = arith.andi %27, %29 : vector<64x16xi1>
    %c0_i32_13 = arith.constant 0 : i32
    %31 = vector.broadcast %c0_i32_13 : i32 to vector<64x16xi32>
    %32 = arith.cmpi sge, %25, %31 : vector<64x16xi32>
    %33 = arith.andi %30, %32 : vector<64x16xi1>
    %c8_i32_14 = arith.constant 8 : i32
    %34 = vector.broadcast %c8_i32_14 : i32 to vector<64x16xi32>
    %35 = arith.cmpi slt, %25, %34 : vector<64x16xi32>
    %36 = arith.andi %33, %35 : vector<64x16xi1>
    %c8_i32_15 = arith.constant 8 : i32
    %37 = vector.broadcast %c8_i32_15 : i32 to vector<64x16xi32>
    %38 = arith.muli %21, %37 : vector<64x16xi32>
    %39 = arith.addi %38, %25 : vector<64x16xi32>
    %40 = arith.cmpi eq, %11, %39 : vector<64x16xi32>
    %41 = arith.andi %36, %40 : vector<64x16xi1>
    %cst_16 = arith.constant 1.000000e+00 : f32
    %cst_17 = arith.constant 0.000000e+00 : f32
    %42 = vector.broadcast %cst_16 : f32 to vector<64x16xf32>
    %43 = vector.broadcast %cst_17 : f32 to vector<64x16xf32>
    %44 = arith.select %41, %42, %43 : vector<64x16xi1>, vector<64x16xf32>
    %cst_18 = arith.constant dense<0.000000e+00> : vector<8x16xf32>
    %45 = tpu.matmul %8, %44, %cst_18 {dimension_numbers = #tpu.dot_dimension_numbers<[1], [0], [0], [1], [0, 0, 1, 1], [], []>} : vector<8x64xf32>, vector<64x16xf32>, vector<8x16xf32> -> vector<8x16xf32>
    %46 = vector.extract_strided_slice %9 {offsets = [0, 0], sizes = [8, 1], strides = [1, 1]} : vector<8x9xf32> to vector<8x1xf32>
    %47 = vector.broadcast %46 : vector<8x1xf32> to vector<8x16xf32>
    %48 = arith.mulf %45, %47 : vector<8x16xf32>
    %49 = arith.addf %17, %48 : vector<8x16xf32>
    %c2_i32_19 = arith.constant 2 : i32
    %50 = vector.broadcast %c2_i32_19 : i32 to vector<64x16xi32>
    %51 = arith.muli %50, %14 : vector<64x16xi32>
    %c-1_i32_20 = arith.constant -1 : i32
    %52 = vector.broadcast %c-1_i32_20 : i32 to vector<64x16xi32>
    %53 = arith.addi %51, %52 : vector<64x16xi32>
    %c2_i32_21 = arith.constant 2 : i32
    %54 = vector.broadcast %c2_i32_21 : i32 to vector<64x16xi32>
    %55 = arith.muli %54, %16 : vector<64x16xi32>
    %c0_i32_22 = arith.constant 0 : i32
    %56 = vector.broadcast %c0_i32_22 : i32 to vector<64x16xi32>
    %57 = arith.addi %55, %56 : vector<64x16xi32>
    %c0_i32_23 = arith.constant 0 : i32
    %58 = vector.broadcast %c0_i32_23 : i32 to vector<64x16xi32>
    %59 = arith.cmpi sge, %53, %58 : vector<64x16xi32>
    %c8_i32_24 = arith.constant 8 : i32
    %60 = vector.broadcast %c8_i32_24 : i32 to vector<64x16xi32>
    %61 = arith.cmpi slt, %53, %60 : vector<64x16xi32>
    %62 = arith.andi %59, %61 : vector<64x16xi1>
    %c0_i32_25 = arith.constant 0 : i32
    %63 = vector.broadcast %c0_i32_25 : i32 to vector<64x16xi32>
    %64 = arith.cmpi sge, %57, %63 : vector<64x16xi32>
    %65 = arith.andi %62, %64 : vector<64x16xi1>
    %c8_i32_26 = arith.constant 8 : i32
    %66 = vector.broadcast %c8_i32_26 : i32 to vector<64x16xi32>
    %67 = arith.cmpi slt, %57, %66 : vector<64x16xi32>
    %68 = arith.andi %65, %67 : vector<64x16xi1>
    %c8_i32_27 = arith.constant 8 : i32
    %69 = vector.broadcast %c8_i32_27 : i32 to vector<64x16xi32>
    %70 = arith.muli %53, %69 : vector<64x16xi32>
    %71 = arith.addi %70, %57 : vector<64x16xi32>
    %72 = arith.cmpi eq, %11, %71 : vector<64x16xi32>
    %73 = arith.andi %68, %72 : vector<64x16xi1>
    %cst_28 = arith.constant 1.000000e+00 : f32
    %cst_29 = arith.constant 0.000000e+00 : f32
    %74 = vector.broadcast %cst_28 : f32 to vector<64x16xf32>
    %75 = vector.broadcast %cst_29 : f32 to vector<64x16xf32>
    %76 = arith.select %73, %74, %75 : vector<64x16xi1>, vector<64x16xf32>
    %cst_30 = arith.constant dense<0.000000e+00> : vector<8x16xf32>
    %77 = tpu.matmul %8, %76, %cst_30 {dimension_numbers = #tpu.dot_dimension_numbers<[1], [0], [0], [1], [0, 0, 1, 1], [], []>} : vector<8x64xf32>, vector<64x16xf32>, vector<8x16xf32> -> vector<8x16xf32>
    %78 = vector.extract_strided_slice %9 {offsets = [0, 1], sizes = [8, 1], strides = [1, 1]} : vector<8x9xf32> to vector<8x1xf32>
    %79 = vector.broadcast %78 : vector<8x1xf32> to vector<8x16xf32>
    %80 = arith.mulf %77, %79 : vector<8x16xf32>
    %81 = arith.addf %49, %80 : vector<8x16xf32>
    %c2_i32_31 = arith.constant 2 : i32
    %82 = vector.broadcast %c2_i32_31 : i32 to vector<64x16xi32>
    %83 = arith.muli %82, %14 : vector<64x16xi32>
    %c-1_i32_32 = arith.constant -1 : i32
    %84 = vector.broadcast %c-1_i32_32 : i32 to vector<64x16xi32>
    %85 = arith.addi %83, %84 : vector<64x16xi32>
    %c2_i32_33 = arith.constant 2 : i32
    %86 = vector.broadcast %c2_i32_33 : i32 to vector<64x16xi32>
    %87 = arith.muli %86, %16 : vector<64x16xi32>
    %c1_i32 = arith.constant 1 : i32
    %88 = vector.broadcast %c1_i32 : i32 to vector<64x16xi32>
    %89 = arith.addi %87, %88 : vector<64x16xi32>
    %c0_i32_34 = arith.constant 0 : i32
    %90 = vector.broadcast %c0_i32_34 : i32 to vector<64x16xi32>
    %91 = arith.cmpi sge, %85, %90 : vector<64x16xi32>
    %c8_i32_35 = arith.constant 8 : i32
    %92 = vector.broadcast %c8_i32_35 : i32 to vector<64x16xi32>
    %93 = arith.cmpi slt, %85, %92 : vector<64x16xi32>
    %94 = arith.andi %91, %93 : vector<64x16xi1>
    %c0_i32_36 = arith.constant 0 : i32
    %95 = vector.broadcast %c0_i32_36 : i32 to vector<64x16xi32>
    %96 = arith.cmpi sge, %89, %95 : vector<64x16xi32>
    %97 = arith.andi %94, %96 : vector<64x16xi1>
    %c8_i32_37 = arith.constant 8 : i32
    %98 = vector.broadcast %c8_i32_37 : i32 to vector<64x16xi32>
    %99 = arith.cmpi slt, %89, %98 : vector<64x16xi32>
    %100 = arith.andi %97, %99 : vector<64x16xi1>
    %c8_i32_38 = arith.constant 8 : i32
    %101 = vector.broadcast %c8_i32_38 : i32 to vector<64x16xi32>
    %102 = arith.muli %85, %101 : vector<64x16xi32>
    %103 = arith.addi %102, %89 : vector<64x16xi32>
    %104 = arith.cmpi eq, %11, %103 : vector<64x16xi32>
    %105 = arith.andi %100, %104 : vector<64x16xi1>
    %cst_39 = arith.constant 1.000000e+00 : f32
    %cst_40 = arith.constant 0.000000e+00 : f32
    %106 = vector.broadcast %cst_39 : f32 to vector<64x16xf32>
    %107 = vector.broadcast %cst_40 : f32 to vector<64x16xf32>
    %108 = arith.select %105, %106, %107 : vector<64x16xi1>, vector<64x16xf32>
    %cst_41 = arith.constant dense<0.000000e+00> : vector<8x16xf32>
    %109 = tpu.matmul %8, %108, %cst_41 {dimension_numbers = #tpu.dot_dimension_numbers<[1], [0], [0], [1], [0, 0, 1, 1], [], []>} : vector<8x64xf32>, vector<64x16xf32>, vector<8x16xf32> -> vector<8x16xf32>
    %110 = vector.extract_strided_slice %9 {offsets = [0, 2], sizes = [8, 1], strides = [1, 1]} : vector<8x9xf32> to vector<8x1xf32>
    %111 = vector.broadcast %110 : vector<8x1xf32> to vector<8x16xf32>
    %112 = arith.mulf %109, %111 : vector<8x16xf32>
    %113 = arith.addf %81, %112 : vector<8x16xf32>
    %c2_i32_42 = arith.constant 2 : i32
    %114 = vector.broadcast %c2_i32_42 : i32 to vector<64x16xi32>
    %115 = arith.muli %114, %14 : vector<64x16xi32>
    %c0_i32_43 = arith.constant 0 : i32
    %116 = vector.broadcast %c0_i32_43 : i32 to vector<64x16xi32>
    %117 = arith.addi %115, %116 : vector<64x16xi32>
    %c2_i32_44 = arith.constant 2 : i32
    %118 = vector.broadcast %c2_i32_44 : i32 to vector<64x16xi32>
    %119 = arith.muli %118, %16 : vector<64x16xi32>
    %c-1_i32_45 = arith.constant -1 : i32
    %120 = vector.broadcast %c-1_i32_45 : i32 to vector<64x16xi32>
    %121 = arith.addi %119, %120 : vector<64x16xi32>
    %c0_i32_46 = arith.constant 0 : i32
    %122 = vector.broadcast %c0_i32_46 : i32 to vector<64x16xi32>
    %123 = arith.cmpi sge, %117, %122 : vector<64x16xi32>
    %c8_i32_47 = arith.constant 8 : i32
    %124 = vector.broadcast %c8_i32_47 : i32 to vector<64x16xi32>
    %125 = arith.cmpi slt, %117, %124 : vector<64x16xi32>
    %126 = arith.andi %123, %125 : vector<64x16xi1>
    %c0_i32_48 = arith.constant 0 : i32
    %127 = vector.broadcast %c0_i32_48 : i32 to vector<64x16xi32>
    %128 = arith.cmpi sge, %121, %127 : vector<64x16xi32>
    %129 = arith.andi %126, %128 : vector<64x16xi1>
    %c8_i32_49 = arith.constant 8 : i32
    %130 = vector.broadcast %c8_i32_49 : i32 to vector<64x16xi32>
    %131 = arith.cmpi slt, %121, %130 : vector<64x16xi32>
    %132 = arith.andi %129, %131 : vector<64x16xi1>
    %c8_i32_50 = arith.constant 8 : i32
    %133 = vector.broadcast %c8_i32_50 : i32 to vector<64x16xi32>
    %134 = arith.muli %117, %133 : vector<64x16xi32>
    %135 = arith.addi %134, %121 : vector<64x16xi32>
    %136 = arith.cmpi eq, %11, %135 : vector<64x16xi32>
    %137 = arith.andi %132, %136 : vector<64x16xi1>
    %cst_51 = arith.constant 1.000000e+00 : f32
    %cst_52 = arith.constant 0.000000e+00 : f32
    %138 = vector.broadcast %cst_51 : f32 to vector<64x16xf32>
    %139 = vector.broadcast %cst_52 : f32 to vector<64x16xf32>
    %140 = arith.select %137, %138, %139 : vector<64x16xi1>, vector<64x16xf32>
    %cst_53 = arith.constant dense<0.000000e+00> : vector<8x16xf32>
    %141 = tpu.matmul %8, %140, %cst_53 {dimension_numbers = #tpu.dot_dimension_numbers<[1], [0], [0], [1], [0, 0, 1, 1], [], []>} : vector<8x64xf32>, vector<64x16xf32>, vector<8x16xf32> -> vector<8x16xf32>
    %142 = vector.extract_strided_slice %9 {offsets = [0, 3], sizes = [8, 1], strides = [1, 1]} : vector<8x9xf32> to vector<8x1xf32>
    %143 = vector.broadcast %142 : vector<8x1xf32> to vector<8x16xf32>
    %144 = arith.mulf %141, %143 : vector<8x16xf32>
    %145 = arith.addf %113, %144 : vector<8x16xf32>
    %c2_i32_54 = arith.constant 2 : i32
    %146 = vector.broadcast %c2_i32_54 : i32 to vector<64x16xi32>
    %147 = arith.muli %146, %14 : vector<64x16xi32>
    %c0_i32_55 = arith.constant 0 : i32
    %148 = vector.broadcast %c0_i32_55 : i32 to vector<64x16xi32>
    %149 = arith.addi %147, %148 : vector<64x16xi32>
    %c2_i32_56 = arith.constant 2 : i32
    %150 = vector.broadcast %c2_i32_56 : i32 to vector<64x16xi32>
    %151 = arith.muli %150, %16 : vector<64x16xi32>
    %c0_i32_57 = arith.constant 0 : i32
    %152 = vector.broadcast %c0_i32_57 : i32 to vector<64x16xi32>
    %153 = arith.addi %151, %152 : vector<64x16xi32>
    %c0_i32_58 = arith.constant 0 : i32
    %154 = vector.broadcast %c0_i32_58 : i32 to vector<64x16xi32>
    %155 = arith.cmpi sge, %149, %154 : vector<64x16xi32>
    %c8_i32_59 = arith.constant 8 : i32
    %156 = vector.broadcast %c8_i32_59 : i32 to vector<64x16xi32>
    %157 = arith.cmpi slt, %149, %156 : vector<64x16xi32>
    %158 = arith.andi %155, %157 : vector<64x16xi1>
    %c0_i32_60 = arith.constant 0 : i32
    %159 = vector.broadcast %c0_i32_60 : i32 to vector<64x16xi32>
    %160 = arith.cmpi sge, %153, %159 : vector<64x16xi32>
    %161 = arith.andi %158, %160 : vector<64x16xi1>
    %c8_i32_61 = arith.constant 8 : i32
    %162 = vector.broadcast %c8_i32_61 : i32 to vector<64x16xi32>
    %163 = arith.cmpi slt, %153, %162 : vector<64x16xi32>
    %164 = arith.andi %161, %163 : vector<64x16xi1>
    %c8_i32_62 = arith.constant 8 : i32
    %165 = vector.broadcast %c8_i32_62 : i32 to vector<64x16xi32>
    %166 = arith.muli %149, %165 : vector<64x16xi32>
    %167 = arith.addi %166, %153 : vector<64x16xi32>
    %168 = arith.cmpi eq, %11, %167 : vector<64x16xi32>
    %169 = arith.andi %164, %168 : vector<64x16xi1>
    %cst_63 = arith.constant 1.000000e+00 : f32
    %cst_64 = arith.constant 0.000000e+00 : f32
    %170 = vector.broadcast %cst_63 : f32 to vector<64x16xf32>
    %171 = vector.broadcast %cst_64 : f32 to vector<64x16xf32>
    %172 = arith.select %169, %170, %171 : vector<64x16xi1>, vector<64x16xf32>
    %cst_65 = arith.constant dense<0.000000e+00> : vector<8x16xf32>
    %173 = tpu.matmul %8, %172, %cst_65 {dimension_numbers = #tpu.dot_dimension_numbers<[1], [0], [0], [1], [0, 0, 1, 1], [], []>} : vector<8x64xf32>, vector<64x16xf32>, vector<8x16xf32> -> vector<8x16xf32>
    %174 = vector.extract_strided_slice %9 {offsets = [0, 4], sizes = [8, 1], strides = [1, 1]} : vector<8x9xf32> to vector<8x1xf32>
    %175 = vector.broadcast %174 : vector<8x1xf32> to vector<8x16xf32>
    %176 = arith.mulf %173, %175 : vector<8x16xf32>
    %177 = arith.addf %145, %176 : vector<8x16xf32>
    %c2_i32_66 = arith.constant 2 : i32
    %178 = vector.broadcast %c2_i32_66 : i32 to vector<64x16xi32>
    %179 = arith.muli %178, %14 : vector<64x16xi32>
    %c0_i32_67 = arith.constant 0 : i32
    %180 = vector.broadcast %c0_i32_67 : i32 to vector<64x16xi32>
    %181 = arith.addi %179, %180 : vector<64x16xi32>
    %c2_i32_68 = arith.constant 2 : i32
    %182 = vector.broadcast %c2_i32_68 : i32 to vector<64x16xi32>
    %183 = arith.muli %182, %16 : vector<64x16xi32>
    %c1_i32_69 = arith.constant 1 : i32
    %184 = vector.broadcast %c1_i32_69 : i32 to vector<64x16xi32>
    %185 = arith.addi %183, %184 : vector<64x16xi32>
    %c0_i32_70 = arith.constant 0 : i32
    %186 = vector.broadcast %c0_i32_70 : i32 to vector<64x16xi32>
    %187 = arith.cmpi sge, %181, %186 : vector<64x16xi32>
    %c8_i32_71 = arith.constant 8 : i32
    %188 = vector.broadcast %c8_i32_71 : i32 to vector<64x16xi32>
    %189 = arith.cmpi slt, %181, %188 : vector<64x16xi32>
    %190 = arith.andi %187, %189 : vector<64x16xi1>
    %c0_i32_72 = arith.constant 0 : i32
    %191 = vector.broadcast %c0_i32_72 : i32 to vector<64x16xi32>
    %192 = arith.cmpi sge, %185, %191 : vector<64x16xi32>
    %193 = arith.andi %190, %192 : vector<64x16xi1>
    %c8_i32_73 = arith.constant 8 : i32
    %194 = vector.broadcast %c8_i32_73 : i32 to vector<64x16xi32>
    %195 = arith.cmpi slt, %185, %194 : vector<64x16xi32>
    %196 = arith.andi %193, %195 : vector<64x16xi1>
    %c8_i32_74 = arith.constant 8 : i32
    %197 = vector.broadcast %c8_i32_74 : i32 to vector<64x16xi32>
    %198 = arith.muli %181, %197 : vector<64x16xi32>
    %199 = arith.addi %198, %185 : vector<64x16xi32>
    %200 = arith.cmpi eq, %11, %199 : vector<64x16xi32>
    %201 = arith.andi %196, %200 : vector<64x16xi1>
    %cst_75 = arith.constant 1.000000e+00 : f32
    %cst_76 = arith.constant 0.000000e+00 : f32
    %202 = vector.broadcast %cst_75 : f32 to vector<64x16xf32>
    %203 = vector.broadcast %cst_76 : f32 to vector<64x16xf32>
    %204 = arith.select %201, %202, %203 : vector<64x16xi1>, vector<64x16xf32>
    %cst_77 = arith.constant dense<0.000000e+00> : vector<8x16xf32>
    %205 = tpu.matmul %8, %204, %cst_77 {dimension_numbers = #tpu.dot_dimension_numbers<[1], [0], [0], [1], [0, 0, 1, 1], [], []>} : vector<8x64xf32>, vector<64x16xf32>, vector<8x16xf32> -> vector<8x16xf32>
    %206 = vector.extract_strided_slice %9 {offsets = [0, 5], sizes = [8, 1], strides = [1, 1]} : vector<8x9xf32> to vector<8x1xf32>
    %207 = vector.broadcast %206 : vector<8x1xf32> to vector<8x16xf32>
    %208 = arith.mulf %205, %207 : vector<8x16xf32>
    %209 = arith.addf %177, %208 : vector<8x16xf32>
    %c2_i32_78 = arith.constant 2 : i32
    %210 = vector.broadcast %c2_i32_78 : i32 to vector<64x16xi32>
    %211 = arith.muli %210, %14 : vector<64x16xi32>
    %c1_i32_79 = arith.constant 1 : i32
    %212 = vector.broadcast %c1_i32_79 : i32 to vector<64x16xi32>
    %213 = arith.addi %211, %212 : vector<64x16xi32>
    %c2_i32_80 = arith.constant 2 : i32
    %214 = vector.broadcast %c2_i32_80 : i32 to vector<64x16xi32>
    %215 = arith.muli %214, %16 : vector<64x16xi32>
    %c-1_i32_81 = arith.constant -1 : i32
    %216 = vector.broadcast %c-1_i32_81 : i32 to vector<64x16xi32>
    %217 = arith.addi %215, %216 : vector<64x16xi32>
    %c0_i32_82 = arith.constant 0 : i32
    %218 = vector.broadcast %c0_i32_82 : i32 to vector<64x16xi32>
    %219 = arith.cmpi sge, %213, %218 : vector<64x16xi32>
    %c8_i32_83 = arith.constant 8 : i32
    %220 = vector.broadcast %c8_i32_83 : i32 to vector<64x16xi32>
    %221 = arith.cmpi slt, %213, %220 : vector<64x16xi32>
    %222 = arith.andi %219, %221 : vector<64x16xi1>
    %c0_i32_84 = arith.constant 0 : i32
    %223 = vector.broadcast %c0_i32_84 : i32 to vector<64x16xi32>
    %224 = arith.cmpi sge, %217, %223 : vector<64x16xi32>
    %225 = arith.andi %222, %224 : vector<64x16xi1>
    %c8_i32_85 = arith.constant 8 : i32
    %226 = vector.broadcast %c8_i32_85 : i32 to vector<64x16xi32>
    %227 = arith.cmpi slt, %217, %226 : vector<64x16xi32>
    %228 = arith.andi %225, %227 : vector<64x16xi1>
    %c8_i32_86 = arith.constant 8 : i32
    %229 = vector.broadcast %c8_i32_86 : i32 to vector<64x16xi32>
    %230 = arith.muli %213, %229 : vector<64x16xi32>
    %231 = arith.addi %230, %217 : vector<64x16xi32>
    %232 = arith.cmpi eq, %11, %231 : vector<64x16xi32>
    %233 = arith.andi %228, %232 : vector<64x16xi1>
    %cst_87 = arith.constant 1.000000e+00 : f32
    %cst_88 = arith.constant 0.000000e+00 : f32
    %234 = vector.broadcast %cst_87 : f32 to vector<64x16xf32>
    %235 = vector.broadcast %cst_88 : f32 to vector<64x16xf32>
    %236 = arith.select %233, %234, %235 : vector<64x16xi1>, vector<64x16xf32>
    %cst_89 = arith.constant dense<0.000000e+00> : vector<8x16xf32>
    %237 = tpu.matmul %8, %236, %cst_89 {dimension_numbers = #tpu.dot_dimension_numbers<[1], [0], [0], [1], [0, 0, 1, 1], [], []>} : vector<8x64xf32>, vector<64x16xf32>, vector<8x16xf32> -> vector<8x16xf32>
    %238 = vector.extract_strided_slice %9 {offsets = [0, 6], sizes = [8, 1], strides = [1, 1]} : vector<8x9xf32> to vector<8x1xf32>
    %239 = vector.broadcast %238 : vector<8x1xf32> to vector<8x16xf32>
    %240 = arith.mulf %237, %239 : vector<8x16xf32>
    %241 = arith.addf %209, %240 : vector<8x16xf32>
    %c2_i32_90 = arith.constant 2 : i32
    %242 = vector.broadcast %c2_i32_90 : i32 to vector<64x16xi32>
    %243 = arith.muli %242, %14 : vector<64x16xi32>
    %c1_i32_91 = arith.constant 1 : i32
    %244 = vector.broadcast %c1_i32_91 : i32 to vector<64x16xi32>
    %245 = arith.addi %243, %244 : vector<64x16xi32>
    %c2_i32_92 = arith.constant 2 : i32
    %246 = vector.broadcast %c2_i32_92 : i32 to vector<64x16xi32>
    %247 = arith.muli %246, %16 : vector<64x16xi32>
    %c0_i32_93 = arith.constant 0 : i32
    %248 = vector.broadcast %c0_i32_93 : i32 to vector<64x16xi32>
    %249 = arith.addi %247, %248 : vector<64x16xi32>
    %c0_i32_94 = arith.constant 0 : i32
    %250 = vector.broadcast %c0_i32_94 : i32 to vector<64x16xi32>
    %251 = arith.cmpi sge, %245, %250 : vector<64x16xi32>
    %c8_i32_95 = arith.constant 8 : i32
    %252 = vector.broadcast %c8_i32_95 : i32 to vector<64x16xi32>
    %253 = arith.cmpi slt, %245, %252 : vector<64x16xi32>
    %254 = arith.andi %251, %253 : vector<64x16xi1>
    %c0_i32_96 = arith.constant 0 : i32
    %255 = vector.broadcast %c0_i32_96 : i32 to vector<64x16xi32>
    %256 = arith.cmpi sge, %249, %255 : vector<64x16xi32>
    %257 = arith.andi %254, %256 : vector<64x16xi1>
    %c8_i32_97 = arith.constant 8 : i32
    %258 = vector.broadcast %c8_i32_97 : i32 to vector<64x16xi32>
    %259 = arith.cmpi slt, %249, %258 : vector<64x16xi32>
    %260 = arith.andi %257, %259 : vector<64x16xi1>
    %c8_i32_98 = arith.constant 8 : i32
    %261 = vector.broadcast %c8_i32_98 : i32 to vector<64x16xi32>
    %262 = arith.muli %245, %261 : vector<64x16xi32>
    %263 = arith.addi %262, %249 : vector<64x16xi32>
    %264 = arith.cmpi eq, %11, %263 : vector<64x16xi32>
    %265 = arith.andi %260, %264 : vector<64x16xi1>
    %cst_99 = arith.constant 1.000000e+00 : f32
    %cst_100 = arith.constant 0.000000e+00 : f32
    %266 = vector.broadcast %cst_99 : f32 to vector<64x16xf32>
    %267 = vector.broadcast %cst_100 : f32 to vector<64x16xf32>
    %268 = arith.select %265, %266, %267 : vector<64x16xi1>, vector<64x16xf32>
    %cst_101 = arith.constant dense<0.000000e+00> : vector<8x16xf32>
    %269 = tpu.matmul %8, %268, %cst_101 {dimension_numbers = #tpu.dot_dimension_numbers<[1], [0], [0], [1], [0, 0, 1, 1], [], []>} : vector<8x64xf32>, vector<64x16xf32>, vector<8x16xf32> -> vector<8x16xf32>
    %270 = vector.extract_strided_slice %9 {offsets = [0, 7], sizes = [8, 1], strides = [1, 1]} : vector<8x9xf32> to vector<8x1xf32>
    %271 = vector.broadcast %270 : vector<8x1xf32> to vector<8x16xf32>
    %272 = arith.mulf %269, %271 : vector<8x16xf32>
    %273 = arith.addf %241, %272 : vector<8x16xf32>
    %c2_i32_102 = arith.constant 2 : i32
    %274 = vector.broadcast %c2_i32_102 : i32 to vector<64x16xi32>
    %275 = arith.muli %274, %14 : vector<64x16xi32>
    %c1_i32_103 = arith.constant 1 : i32
    %276 = vector.broadcast %c1_i32_103 : i32 to vector<64x16xi32>
    %277 = arith.addi %275, %276 : vector<64x16xi32>
    %c2_i32_104 = arith.constant 2 : i32
    %278 = vector.broadcast %c2_i32_104 : i32 to vector<64x16xi32>
    %279 = arith.muli %278, %16 : vector<64x16xi32>
    %c1_i32_105 = arith.constant 1 : i32
    %280 = vector.broadcast %c1_i32_105 : i32 to vector<64x16xi32>
    %281 = arith.addi %279, %280 : vector<64x16xi32>
    %c0_i32_106 = arith.constant 0 : i32
    %282 = vector.broadcast %c0_i32_106 : i32 to vector<64x16xi32>
    %283 = arith.cmpi sge, %277, %282 : vector<64x16xi32>
    %c8_i32_107 = arith.constant 8 : i32
    %284 = vector.broadcast %c8_i32_107 : i32 to vector<64x16xi32>
    %285 = arith.cmpi slt, %277, %284 : vector<64x16xi32>
    %286 = arith.andi %283, %285 : vector<64x16xi1>
    %c0_i32_108 = arith.constant 0 : i32
    %287 = vector.broadcast %c0_i32_108 : i32 to vector<64x16xi32>
    %288 = arith.cmpi sge, %281, %287 : vector<64x16xi32>
    %289 = arith.andi %286, %288 : vector<64x16xi1>
    %c8_i32_109 = arith.constant 8 : i32
    %290 = vector.broadcast %c8_i32_109 : i32 to vector<64x16xi32>
    %291 = arith.cmpi slt, %281, %290 : vector<64x16xi32>
    %292 = arith.andi %289, %291 : vector<64x16xi1>
    %c8_i32_110 = arith.constant 8 : i32
    %293 = vector.broadcast %c8_i32_110 : i32 to vector<64x16xi32>
    %294 = arith.muli %277, %293 : vector<64x16xi32>
    %295 = arith.addi %294, %281 : vector<64x16xi32>
    %296 = arith.cmpi eq, %11, %295 : vector<64x16xi32>
    %297 = arith.andi %292, %296 : vector<64x16xi1>
    %cst_111 = arith.constant 1.000000e+00 : f32
    %cst_112 = arith.constant 0.000000e+00 : f32
    %298 = vector.broadcast %cst_111 : f32 to vector<64x16xf32>
    %299 = vector.broadcast %cst_112 : f32 to vector<64x16xf32>
    %300 = arith.select %297, %298, %299 : vector<64x16xi1>, vector<64x16xf32>
    %cst_113 = arith.constant dense<0.000000e+00> : vector<8x16xf32>
    %301 = tpu.matmul %8, %300, %cst_113 {dimension_numbers = #tpu.dot_dimension_numbers<[1], [0], [0], [1], [0, 0, 1, 1], [], []>} : vector<8x64xf32>, vector<64x16xf32>, vector<8x16xf32> -> vector<8x16xf32>
    %302 = vector.extract_strided_slice %9 {offsets = [0, 8], sizes = [8, 1], strides = [1, 1]} : vector<8x9xf32> to vector<8x1xf32>
    %303 = vector.broadcast %302 : vector<8x1xf32> to vector<8x16xf32>
    %304 = arith.mulf %301, %303 : vector<8x16xf32>
    %305 = arith.addf %273, %304 : vector<8x16xf32>
    %306 = vector.broadcast %10 : vector<8x1xf32> to vector<8x16xf32>
    %307 = arith.addf %305, %306 : vector<8x16xf32>
    %cst_114 = arith.constant 0.000000e+00 : f32
    %308 = vector.broadcast %cst_114 : f32 to vector<8x16xf32>
    %309 = arith.maximumf %307, %308 : vector<8x16xf32>
    %c8_115 = arith.constant 8 : index
    %c0_116 = arith.constant 0 : index
    %310 = vector.load %arg2[%c8_115, %c0_116] : memref<110x32xbf16, #tpu.memory_space<vmem>>, vector<16x8xbf16>
    %311 = arith.truncf %309 : vector<8x16xf32> to vector<8x16xbf16>
    %cst_117 = arith.constant dense<0.000000e+00> : vector<16x16xf32>
    %312 = tpu.matmul %310, %311, %cst_117 {dimension_numbers = #tpu.dot_dimension_numbers<[1], [0], [0], [1], [0, 0, 1, 1], [], []>} : vector<16x8xbf16>, vector<8x16xbf16>, vector<16x16xf32> -> vector<16x16xf32>
    %c24 = arith.constant 24 : index
    %c0_118 = arith.constant 0 : index
    %313 = vector.load %arg3[%c24, %c0_118] : memref<190x9xf32, #tpu.memory_space<vmem>>, vector<16x1xf32>
    %314 = vector.broadcast %313 : vector<16x1xf32> to vector<16x16xf32>
    %315 = arith.addf %312, %314 : vector<16x16xf32>
    %cst_119 = arith.constant 0.000000e+00 : f32
    %316 = vector.broadcast %cst_119 : f32 to vector<16x16xf32>
    %317 = arith.maximumf %315, %316 : vector<16x16xf32>
    %c24_120 = arith.constant 24 : index
    %c0_121 = arith.constant 0 : index
    %318 = vector.load %arg2[%c24_120, %c0_121] : memref<110x32xbf16, #tpu.memory_space<vmem>>, vector<32x16xbf16>
    %319 = arith.truncf %317 : vector<16x16xf32> to vector<16x16xbf16>
    %cst_122 = arith.constant dense<0.000000e+00> : vector<32x16xf32>
    %320 = tpu.matmul %318, %319, %cst_122 {dimension_numbers = #tpu.dot_dimension_numbers<[1], [0], [0], [1], [0, 0, 1, 1], [], []>} : vector<32x16xbf16>, vector<16x16xbf16>, vector<32x16xf32> -> vector<32x16xf32>
    %c40 = arith.constant 40 : index
    %c0_123 = arith.constant 0 : index
    %321 = vector.load %arg3[%c40, %c0_123] : memref<190x9xf32, #tpu.memory_space<vmem>>, vector<32x1xf32>
    %322 = vector.broadcast %321 : vector<32x1xf32> to vector<32x16xf32>
    %323 = arith.addf %320, %322 : vector<32x16xf32>
    %cst_124 = arith.constant 0.000000e+00 : f32
    %324 = vector.broadcast %cst_124 : f32 to vector<32x16xf32>
    %325 = arith.maximumf %323, %324 : vector<32x16xf32>
    %c72 = arith.constant 72 : index
    %c0_125 = arith.constant 0 : index
    %326 = vector.load %arg3[%c72, %c0_125] : memref<190x9xf32, #tpu.memory_space<vmem>>, vector<32x9xf32>
    %c104 = arith.constant 104 : index
    %c0_126 = arith.constant 0 : index
    %327 = vector.load %arg3[%c104, %c0_126] : memref<190x9xf32, #tpu.memory_space<vmem>>, vector<32x1xf32>
    %328 = tpu.iota {dimensions = array<i32: 0>} : vector<16x16xi32>
    %329 = tpu.iota {dimensions = array<i32: 1>} : vector<16x16xi32>
    %c2_i32_127 = arith.constant 2 : i32
    %330 = vector.broadcast %c2_i32_127 : i32 to vector<16x16xi32>
    %331 = arith.shrsi %329, %330 : vector<16x16xi32>
    %c3_i32_128 = arith.constant 3 : i32
    %332 = vector.broadcast %c3_i32_128 : i32 to vector<16x16xi32>
    %333 = arith.andi %329, %332 : vector<16x16xi32>
    %cst_129 = arith.constant 0.000000e+00 : f32
    %334 = vector.broadcast %cst_129 : f32 to vector<32x16xf32>
    %c1_i32_130 = arith.constant 1 : i32
    %335 = vector.broadcast %c1_i32_130 : i32 to vector<16x16xi32>
    %336 = arith.muli %335, %331 : vector<16x16xi32>
    %c-1_i32_131 = arith.constant -1 : i32
    %337 = vector.broadcast %c-1_i32_131 : i32 to vector<16x16xi32>
    %338 = arith.addi %336, %337 : vector<16x16xi32>
    %c1_i32_132 = arith.constant 1 : i32
    %339 = vector.broadcast %c1_i32_132 : i32 to vector<16x16xi32>
    %340 = arith.muli %339, %333 : vector<16x16xi32>
    %c-1_i32_133 = arith.constant -1 : i32
    %341 = vector.broadcast %c-1_i32_133 : i32 to vector<16x16xi32>
    %342 = arith.addi %340, %341 : vector<16x16xi32>
    %c0_i32_134 = arith.constant 0 : i32
    %343 = vector.broadcast %c0_i32_134 : i32 to vector<16x16xi32>
    %344 = arith.cmpi sge, %338, %343 : vector<16x16xi32>
    %c4_i32 = arith.constant 4 : i32
    %345 = vector.broadcast %c4_i32 : i32 to vector<16x16xi32>
    %346 = arith.cmpi slt, %338, %345 : vector<16x16xi32>
    %347 = arith.andi %344, %346 : vector<16x16xi1>
    %c0_i32_135 = arith.constant 0 : i32
    %348 = vector.broadcast %c0_i32_135 : i32 to vector<16x16xi32>
    %349 = arith.cmpi sge, %342, %348 : vector<16x16xi32>
    %350 = arith.andi %347, %349 : vector<16x16xi1>
    %c4_i32_136 = arith.constant 4 : i32
    %351 = vector.broadcast %c4_i32_136 : i32 to vector<16x16xi32>
    %352 = arith.cmpi slt, %342, %351 : vector<16x16xi32>
    %353 = arith.andi %350, %352 : vector<16x16xi1>
    %c4_i32_137 = arith.constant 4 : i32
    %354 = vector.broadcast %c4_i32_137 : i32 to vector<16x16xi32>
    %355 = arith.muli %338, %354 : vector<16x16xi32>
    %356 = arith.addi %355, %342 : vector<16x16xi32>
    %357 = arith.cmpi eq, %328, %356 : vector<16x16xi32>
    %358 = arith.andi %353, %357 : vector<16x16xi1>
    %cst_138 = arith.constant 1.000000e+00 : f32
    %cst_139 = arith.constant 0.000000e+00 : f32
    %359 = vector.broadcast %cst_138 : f32 to vector<16x16xf32>
    %360 = vector.broadcast %cst_139 : f32 to vector<16x16xf32>
    %361 = arith.select %358, %359, %360 : vector<16x16xi1>, vector<16x16xf32>
    %cst_140 = arith.constant dense<0.000000e+00> : vector<32x16xf32>
    %362 = tpu.matmul %325, %361, %cst_140 {dimension_numbers = #tpu.dot_dimension_numbers<[1], [0], [0], [1], [0, 0, 1, 1], [], []>} : vector<32x16xf32>, vector<16x16xf32>, vector<32x16xf32> -> vector<32x16xf32>
    %363 = vector.extract_strided_slice %326 {offsets = [0, 0], sizes = [32, 1], strides = [1, 1]} : vector<32x9xf32> to vector<32x1xf32>
    %364 = vector.broadcast %363 : vector<32x1xf32> to vector<32x16xf32>
    %365 = arith.mulf %362, %364 : vector<32x16xf32>
    %366 = arith.addf %334, %365 : vector<32x16xf32>
    %c1_i32_141 = arith.constant 1 : i32
    %367 = vector.broadcast %c1_i32_141 : i32 to vector<16x16xi32>
    %368 = arith.muli %367, %331 : vector<16x16xi32>
    %c-1_i32_142 = arith.constant -1 : i32
    %369 = vector.broadcast %c-1_i32_142 : i32 to vector<16x16xi32>
    %370 = arith.addi %368, %369 : vector<16x16xi32>
    %c1_i32_143 = arith.constant 1 : i32
    %371 = vector.broadcast %c1_i32_143 : i32 to vector<16x16xi32>
    %372 = arith.muli %371, %333 : vector<16x16xi32>
    %c0_i32_144 = arith.constant 0 : i32
    %373 = vector.broadcast %c0_i32_144 : i32 to vector<16x16xi32>
    %374 = arith.addi %372, %373 : vector<16x16xi32>
    %c0_i32_145 = arith.constant 0 : i32
    %375 = vector.broadcast %c0_i32_145 : i32 to vector<16x16xi32>
    %376 = arith.cmpi sge, %370, %375 : vector<16x16xi32>
    %c4_i32_146 = arith.constant 4 : i32
    %377 = vector.broadcast %c4_i32_146 : i32 to vector<16x16xi32>
    %378 = arith.cmpi slt, %370, %377 : vector<16x16xi32>
    %379 = arith.andi %376, %378 : vector<16x16xi1>
    %c0_i32_147 = arith.constant 0 : i32
    %380 = vector.broadcast %c0_i32_147 : i32 to vector<16x16xi32>
    %381 = arith.cmpi sge, %374, %380 : vector<16x16xi32>
    %382 = arith.andi %379, %381 : vector<16x16xi1>
    %c4_i32_148 = arith.constant 4 : i32
    %383 = vector.broadcast %c4_i32_148 : i32 to vector<16x16xi32>
    %384 = arith.cmpi slt, %374, %383 : vector<16x16xi32>
    %385 = arith.andi %382, %384 : vector<16x16xi1>
    %c4_i32_149 = arith.constant 4 : i32
    %386 = vector.broadcast %c4_i32_149 : i32 to vector<16x16xi32>
    %387 = arith.muli %370, %386 : vector<16x16xi32>
    %388 = arith.addi %387, %374 : vector<16x16xi32>
    %389 = arith.cmpi eq, %328, %388 : vector<16x16xi32>
    %390 = arith.andi %385, %389 : vector<16x16xi1>
    %cst_150 = arith.constant 1.000000e+00 : f32
    %cst_151 = arith.constant 0.000000e+00 : f32
    %391 = vector.broadcast %cst_150 : f32 to vector<16x16xf32>
    %392 = vector.broadcast %cst_151 : f32 to vector<16x16xf32>
    %393 = arith.select %390, %391, %392 : vector<16x16xi1>, vector<16x16xf32>
    %cst_152 = arith.constant dense<0.000000e+00> : vector<32x16xf32>
    %394 = tpu.matmul %325, %393, %cst_152 {dimension_numbers = #tpu.dot_dimension_numbers<[1], [0], [0], [1], [0, 0, 1, 1], [], []>} : vector<32x16xf32>, vector<16x16xf32>, vector<32x16xf32> -> vector<32x16xf32>
    %395 = vector.extract_strided_slice %326 {offsets = [0, 1], sizes = [32, 1], strides = [1, 1]} : vector<32x9xf32> to vector<32x1xf32>
    %396 = vector.broadcast %395 : vector<32x1xf32> to vector<32x16xf32>
    %397 = arith.mulf %394, %396 : vector<32x16xf32>
    %398 = arith.addf %366, %397 : vector<32x16xf32>
    %c1_i32_153 = arith.constant 1 : i32
    %399 = vector.broadcast %c1_i32_153 : i32 to vector<16x16xi32>
    %400 = arith.muli %399, %331 : vector<16x16xi32>
    %c-1_i32_154 = arith.constant -1 : i32
    %401 = vector.broadcast %c-1_i32_154 : i32 to vector<16x16xi32>
    %402 = arith.addi %400, %401 : vector<16x16xi32>
    %c1_i32_155 = arith.constant 1 : i32
    %403 = vector.broadcast %c1_i32_155 : i32 to vector<16x16xi32>
    %404 = arith.muli %403, %333 : vector<16x16xi32>
    %c1_i32_156 = arith.constant 1 : i32
    %405 = vector.broadcast %c1_i32_156 : i32 to vector<16x16xi32>
    %406 = arith.addi %404, %405 : vector<16x16xi32>
    %c0_i32_157 = arith.constant 0 : i32
    %407 = vector.broadcast %c0_i32_157 : i32 to vector<16x16xi32>
    %408 = arith.cmpi sge, %402, %407 : vector<16x16xi32>
    %c4_i32_158 = arith.constant 4 : i32
    %409 = vector.broadcast %c4_i32_158 : i32 to vector<16x16xi32>
    %410 = arith.cmpi slt, %402, %409 : vector<16x16xi32>
    %411 = arith.andi %408, %410 : vector<16x16xi1>
    %c0_i32_159 = arith.constant 0 : i32
    %412 = vector.broadcast %c0_i32_159 : i32 to vector<16x16xi32>
    %413 = arith.cmpi sge, %406, %412 : vector<16x16xi32>
    %414 = arith.andi %411, %413 : vector<16x16xi1>
    %c4_i32_160 = arith.constant 4 : i32
    %415 = vector.broadcast %c4_i32_160 : i32 to vector<16x16xi32>
    %416 = arith.cmpi slt, %406, %415 : vector<16x16xi32>
    %417 = arith.andi %414, %416 : vector<16x16xi1>
    %c4_i32_161 = arith.constant 4 : i32
    %418 = vector.broadcast %c4_i32_161 : i32 to vector<16x16xi32>
    %419 = arith.muli %402, %418 : vector<16x16xi32>
    %420 = arith.addi %419, %406 : vector<16x16xi32>
    %421 = arith.cmpi eq, %328, %420 : vector<16x16xi32>
    %422 = arith.andi %417, %421 : vector<16x16xi1>
    %cst_162 = arith.constant 1.000000e+00 : f32
    %cst_163 = arith.constant 0.000000e+00 : f32
    %423 = vector.broadcast %cst_162 : f32 to vector<16x16xf32>
    %424 = vector.broadcast %cst_163 : f32 to vector<16x16xf32>
    %425 = arith.select %422, %423, %424 : vector<16x16xi1>, vector<16x16xf32>
    %cst_164 = arith.constant dense<0.000000e+00> : vector<32x16xf32>
    %426 = tpu.matmul %325, %425, %cst_164 {dimension_numbers = #tpu.dot_dimension_numbers<[1], [0], [0], [1], [0, 0, 1, 1], [], []>} : vector<32x16xf32>, vector<16x16xf32>, vector<32x16xf32> -> vector<32x16xf32>
    %427 = vector.extract_strided_slice %326 {offsets = [0, 2], sizes = [32, 1], strides = [1, 1]} : vector<32x9xf32> to vector<32x1xf32>
    %428 = vector.broadcast %427 : vector<32x1xf32> to vector<32x16xf32>
    %429 = arith.mulf %426, %428 : vector<32x16xf32>
    %430 = arith.addf %398, %429 : vector<32x16xf32>
    %c1_i32_165 = arith.constant 1 : i32
    %431 = vector.broadcast %c1_i32_165 : i32 to vector<16x16xi32>
    %432 = arith.muli %431, %331 : vector<16x16xi32>
    %c0_i32_166 = arith.constant 0 : i32
    %433 = vector.broadcast %c0_i32_166 : i32 to vector<16x16xi32>
    %434 = arith.addi %432, %433 : vector<16x16xi32>
    %c1_i32_167 = arith.constant 1 : i32
    %435 = vector.broadcast %c1_i32_167 : i32 to vector<16x16xi32>
    %436 = arith.muli %435, %333 : vector<16x16xi32>
    %c-1_i32_168 = arith.constant -1 : i32
    %437 = vector.broadcast %c-1_i32_168 : i32 to vector<16x16xi32>
    %438 = arith.addi %436, %437 : vector<16x16xi32>
    %c0_i32_169 = arith.constant 0 : i32
    %439 = vector.broadcast %c0_i32_169 : i32 to vector<16x16xi32>
    %440 = arith.cmpi sge, %434, %439 : vector<16x16xi32>
    %c4_i32_170 = arith.constant 4 : i32
    %441 = vector.broadcast %c4_i32_170 : i32 to vector<16x16xi32>
    %442 = arith.cmpi slt, %434, %441 : vector<16x16xi32>
    %443 = arith.andi %440, %442 : vector<16x16xi1>
    %c0_i32_171 = arith.constant 0 : i32
    %444 = vector.broadcast %c0_i32_171 : i32 to vector<16x16xi32>
    %445 = arith.cmpi sge, %438, %444 : vector<16x16xi32>
    %446 = arith.andi %443, %445 : vector<16x16xi1>
    %c4_i32_172 = arith.constant 4 : i32
    %447 = vector.broadcast %c4_i32_172 : i32 to vector<16x16xi32>
    %448 = arith.cmpi slt, %438, %447 : vector<16x16xi32>
    %449 = arith.andi %446, %448 : vector<16x16xi1>
    %c4_i32_173 = arith.constant 4 : i32
    %450 = vector.broadcast %c4_i32_173 : i32 to vector<16x16xi32>
    %451 = arith.muli %434, %450 : vector<16x16xi32>
    %452 = arith.addi %451, %438 : vector<16x16xi32>
    %453 = arith.cmpi eq, %328, %452 : vector<16x16xi32>
    %454 = arith.andi %449, %453 : vector<16x16xi1>
    %cst_174 = arith.constant 1.000000e+00 : f32
    %cst_175 = arith.constant 0.000000e+00 : f32
    %455 = vector.broadcast %cst_174 : f32 to vector<16x16xf32>
    %456 = vector.broadcast %cst_175 : f32 to vector<16x16xf32>
    %457 = arith.select %454, %455, %456 : vector<16x16xi1>, vector<16x16xf32>
    %cst_176 = arith.constant dense<0.000000e+00> : vector<32x16xf32>
    %458 = tpu.matmul %325, %457, %cst_176 {dimension_numbers = #tpu.dot_dimension_numbers<[1], [0], [0], [1], [0, 0, 1, 1], [], []>} : vector<32x16xf32>, vector<16x16xf32>, vector<32x16xf32> -> vector<32x16xf32>
    %459 = vector.extract_strided_slice %326 {offsets = [0, 3], sizes = [32, 1], strides = [1, 1]} : vector<32x9xf32> to vector<32x1xf32>
    %460 = vector.broadcast %459 : vector<32x1xf32> to vector<32x16xf32>
    %461 = arith.mulf %458, %460 : vector<32x16xf32>
    %462 = arith.addf %430, %461 : vector<32x16xf32>
    %c1_i32_177 = arith.constant 1 : i32
    %463 = vector.broadcast %c1_i32_177 : i32 to vector<16x16xi32>
    %464 = arith.muli %463, %331 : vector<16x16xi32>
    %c0_i32_178 = arith.constant 0 : i32
    %465 = vector.broadcast %c0_i32_178 : i32 to vector<16x16xi32>
    %466 = arith.addi %464, %465 : vector<16x16xi32>
    %c1_i32_179 = arith.constant 1 : i32
    %467 = vector.broadcast %c1_i32_179 : i32 to vector<16x16xi32>
    %468 = arith.muli %467, %333 : vector<16x16xi32>
    %c0_i32_180 = arith.constant 0 : i32
    %469 = vector.broadcast %c0_i32_180 : i32 to vector<16x16xi32>
    %470 = arith.addi %468, %469 : vector<16x16xi32>
    %c0_i32_181 = arith.constant 0 : i32
    %471 = vector.broadcast %c0_i32_181 : i32 to vector<16x16xi32>
    %472 = arith.cmpi sge, %466, %471 : vector<16x16xi32>
    %c4_i32_182 = arith.constant 4 : i32
    %473 = vector.broadcast %c4_i32_182 : i32 to vector<16x16xi32>
    %474 = arith.cmpi slt, %466, %473 : vector<16x16xi32>
    %475 = arith.andi %472, %474 : vector<16x16xi1>
    %c0_i32_183 = arith.constant 0 : i32
    %476 = vector.broadcast %c0_i32_183 : i32 to vector<16x16xi32>
    %477 = arith.cmpi sge, %470, %476 : vector<16x16xi32>
    %478 = arith.andi %475, %477 : vector<16x16xi1>
    %c4_i32_184 = arith.constant 4 : i32
    %479 = vector.broadcast %c4_i32_184 : i32 to vector<16x16xi32>
    %480 = arith.cmpi slt, %470, %479 : vector<16x16xi32>
    %481 = arith.andi %478, %480 : vector<16x16xi1>
    %c4_i32_185 = arith.constant 4 : i32
    %482 = vector.broadcast %c4_i32_185 : i32 to vector<16x16xi32>
    %483 = arith.muli %466, %482 : vector<16x16xi32>
    %484 = arith.addi %483, %470 : vector<16x16xi32>
    %485 = arith.cmpi eq, %328, %484 : vector<16x16xi32>
    %486 = arith.andi %481, %485 : vector<16x16xi1>
    %cst_186 = arith.constant 1.000000e+00 : f32
    %cst_187 = arith.constant 0.000000e+00 : f32
    %487 = vector.broadcast %cst_186 : f32 to vector<16x16xf32>
    %488 = vector.broadcast %cst_187 : f32 to vector<16x16xf32>
    %489 = arith.select %486, %487, %488 : vector<16x16xi1>, vector<16x16xf32>
    %cst_188 = arith.constant dense<0.000000e+00> : vector<32x16xf32>
    %490 = tpu.matmul %325, %489, %cst_188 {dimension_numbers = #tpu.dot_dimension_numbers<[1], [0], [0], [1], [0, 0, 1, 1], [], []>} : vector<32x16xf32>, vector<16x16xf32>, vector<32x16xf32> -> vector<32x16xf32>
    %491 = vector.extract_strided_slice %326 {offsets = [0, 4], sizes = [32, 1], strides = [1, 1]} : vector<32x9xf32> to vector<32x1xf32>
    %492 = vector.broadcast %491 : vector<32x1xf32> to vector<32x16xf32>
    %493 = arith.mulf %490, %492 : vector<32x16xf32>
    %494 = arith.addf %462, %493 : vector<32x16xf32>
    %c1_i32_189 = arith.constant 1 : i32
    %495 = vector.broadcast %c1_i32_189 : i32 to vector<16x16xi32>
    %496 = arith.muli %495, %331 : vector<16x16xi32>
    %c0_i32_190 = arith.constant 0 : i32
    %497 = vector.broadcast %c0_i32_190 : i32 to vector<16x16xi32>
    %498 = arith.addi %496, %497 : vector<16x16xi32>
    %c1_i32_191 = arith.constant 1 : i32
    %499 = vector.broadcast %c1_i32_191 : i32 to vector<16x16xi32>
    %500 = arith.muli %499, %333 : vector<16x16xi32>
    %c1_i32_192 = arith.constant 1 : i32
    %501 = vector.broadcast %c1_i32_192 : i32 to vector<16x16xi32>
    %502 = arith.addi %500, %501 : vector<16x16xi32>
    %c0_i32_193 = arith.constant 0 : i32
    %503 = vector.broadcast %c0_i32_193 : i32 to vector<16x16xi32>
    %504 = arith.cmpi sge, %498, %503 : vector<16x16xi32>
    %c4_i32_194 = arith.constant 4 : i32
    %505 = vector.broadcast %c4_i32_194 : i32 to vector<16x16xi32>
    %506 = arith.cmpi slt, %498, %505 : vector<16x16xi32>
    %507 = arith.andi %504, %506 : vector<16x16xi1>
    %c0_i32_195 = arith.constant 0 : i32
    %508 = vector.broadcast %c0_i32_195 : i32 to vector<16x16xi32>
    %509 = arith.cmpi sge, %502, %508 : vector<16x16xi32>
    %510 = arith.andi %507, %509 : vector<16x16xi1>
    %c4_i32_196 = arith.constant 4 : i32
    %511 = vector.broadcast %c4_i32_196 : i32 to vector<16x16xi32>
    %512 = arith.cmpi slt, %502, %511 : vector<16x16xi32>
    %513 = arith.andi %510, %512 : vector<16x16xi1>
    %c4_i32_197 = arith.constant 4 : i32
    %514 = vector.broadcast %c4_i32_197 : i32 to vector<16x16xi32>
    %515 = arith.muli %498, %514 : vector<16x16xi32>
    %516 = arith.addi %515, %502 : vector<16x16xi32>
    %517 = arith.cmpi eq, %328, %516 : vector<16x16xi32>
    %518 = arith.andi %513, %517 : vector<16x16xi1>
    %cst_198 = arith.constant 1.000000e+00 : f32
    %cst_199 = arith.constant 0.000000e+00 : f32
    %519 = vector.broadcast %cst_198 : f32 to vector<16x16xf32>
    %520 = vector.broadcast %cst_199 : f32 to vector<16x16xf32>
    %521 = arith.select %518, %519, %520 : vector<16x16xi1>, vector<16x16xf32>
    %cst_200 = arith.constant dense<0.000000e+00> : vector<32x16xf32>
    %522 = tpu.matmul %325, %521, %cst_200 {dimension_numbers = #tpu.dot_dimension_numbers<[1], [0], [0], [1], [0, 0, 1, 1], [], []>} : vector<32x16xf32>, vector<16x16xf32>, vector<32x16xf32> -> vector<32x16xf32>
    %523 = vector.extract_strided_slice %326 {offsets = [0, 5], sizes = [32, 1], strides = [1, 1]} : vector<32x9xf32> to vector<32x1xf32>
    %524 = vector.broadcast %523 : vector<32x1xf32> to vector<32x16xf32>
    %525 = arith.mulf %522, %524 : vector<32x16xf32>
    %526 = arith.addf %494, %525 : vector<32x16xf32>
    %c1_i32_201 = arith.constant 1 : i32
    %527 = vector.broadcast %c1_i32_201 : i32 to vector<16x16xi32>
    %528 = arith.muli %527, %331 : vector<16x16xi32>
    %c1_i32_202 = arith.constant 1 : i32
    %529 = vector.broadcast %c1_i32_202 : i32 to vector<16x16xi32>
    %530 = arith.addi %528, %529 : vector<16x16xi32>
    %c1_i32_203 = arith.constant 1 : i32
    %531 = vector.broadcast %c1_i32_203 : i32 to vector<16x16xi32>
    %532 = arith.muli %531, %333 : vector<16x16xi32>
    %c-1_i32_204 = arith.constant -1 : i32
    %533 = vector.broadcast %c-1_i32_204 : i32 to vector<16x16xi32>
    %534 = arith.addi %532, %533 : vector<16x16xi32>
    %c0_i32_205 = arith.constant 0 : i32
    %535 = vector.broadcast %c0_i32_205 : i32 to vector<16x16xi32>
    %536 = arith.cmpi sge, %530, %535 : vector<16x16xi32>
    %c4_i32_206 = arith.constant 4 : i32
    %537 = vector.broadcast %c4_i32_206 : i32 to vector<16x16xi32>
    %538 = arith.cmpi slt, %530, %537 : vector<16x16xi32>
    %539 = arith.andi %536, %538 : vector<16x16xi1>
    %c0_i32_207 = arith.constant 0 : i32
    %540 = vector.broadcast %c0_i32_207 : i32 to vector<16x16xi32>
    %541 = arith.cmpi sge, %534, %540 : vector<16x16xi32>
    %542 = arith.andi %539, %541 : vector<16x16xi1>
    %c4_i32_208 = arith.constant 4 : i32
    %543 = vector.broadcast %c4_i32_208 : i32 to vector<16x16xi32>
    %544 = arith.cmpi slt, %534, %543 : vector<16x16xi32>
    %545 = arith.andi %542, %544 : vector<16x16xi1>
    %c4_i32_209 = arith.constant 4 : i32
    %546 = vector.broadcast %c4_i32_209 : i32 to vector<16x16xi32>
    %547 = arith.muli %530, %546 : vector<16x16xi32>
    %548 = arith.addi %547, %534 : vector<16x16xi32>
    %549 = arith.cmpi eq, %328, %548 : vector<16x16xi32>
    %550 = arith.andi %545, %549 : vector<16x16xi1>
    %cst_210 = arith.constant 1.000000e+00 : f32
    %cst_211 = arith.constant 0.000000e+00 : f32
    %551 = vector.broadcast %cst_210 : f32 to vector<16x16xf32>
    %552 = vector.broadcast %cst_211 : f32 to vector<16x16xf32>
    %553 = arith.select %550, %551, %552 : vector<16x16xi1>, vector<16x16xf32>
    %cst_212 = arith.constant dense<0.000000e+00> : vector<32x16xf32>
    %554 = tpu.matmul %325, %553, %cst_212 {dimension_numbers = #tpu.dot_dimension_numbers<[1], [0], [0], [1], [0, 0, 1, 1], [], []>} : vector<32x16xf32>, vector<16x16xf32>, vector<32x16xf32> -> vector<32x16xf32>
    %555 = vector.extract_strided_slice %326 {offsets = [0, 6], sizes = [32, 1], strides = [1, 1]} : vector<32x9xf32> to vector<32x1xf32>
    %556 = vector.broadcast %555 : vector<32x1xf32> to vector<32x16xf32>
    %557 = arith.mulf %554, %556 : vector<32x16xf32>
    %558 = arith.addf %526, %557 : vector<32x16xf32>
    %c1_i32_213 = arith.constant 1 : i32
    %559 = vector.broadcast %c1_i32_213 : i32 to vector<16x16xi32>
    %560 = arith.muli %559, %331 : vector<16x16xi32>
    %c1_i32_214 = arith.constant 1 : i32
    %561 = vector.broadcast %c1_i32_214 : i32 to vector<16x16xi32>
    %562 = arith.addi %560, %561 : vector<16x16xi32>
    %c1_i32_215 = arith.constant 1 : i32
    %563 = vector.broadcast %c1_i32_215 : i32 to vector<16x16xi32>
    %564 = arith.muli %563, %333 : vector<16x16xi32>
    %c0_i32_216 = arith.constant 0 : i32
    %565 = vector.broadcast %c0_i32_216 : i32 to vector<16x16xi32>
    %566 = arith.addi %564, %565 : vector<16x16xi32>
    %c0_i32_217 = arith.constant 0 : i32
    %567 = vector.broadcast %c0_i32_217 : i32 to vector<16x16xi32>
    %568 = arith.cmpi sge, %562, %567 : vector<16x16xi32>
    %c4_i32_218 = arith.constant 4 : i32
    %569 = vector.broadcast %c4_i32_218 : i32 to vector<16x16xi32>
    %570 = arith.cmpi slt, %562, %569 : vector<16x16xi32>
    %571 = arith.andi %568, %570 : vector<16x16xi1>
    %c0_i32_219 = arith.constant 0 : i32
    %572 = vector.broadcast %c0_i32_219 : i32 to vector<16x16xi32>
    %573 = arith.cmpi sge, %566, %572 : vector<16x16xi32>
    %574 = arith.andi %571, %573 : vector<16x16xi1>
    %c4_i32_220 = arith.constant 4 : i32
    %575 = vector.broadcast %c4_i32_220 : i32 to vector<16x16xi32>
    %576 = arith.cmpi slt, %566, %575 : vector<16x16xi32>
    %577 = arith.andi %574, %576 : vector<16x16xi1>
    %c4_i32_221 = arith.constant 4 : i32
    %578 = vector.broadcast %c4_i32_221 : i32 to vector<16x16xi32>
    %579 = arith.muli %562, %578 : vector<16x16xi32>
    %580 = arith.addi %579, %566 : vector<16x16xi32>
    %581 = arith.cmpi eq, %328, %580 : vector<16x16xi32>
    %582 = arith.andi %577, %581 : vector<16x16xi1>
    %cst_222 = arith.constant 1.000000e+00 : f32
    %cst_223 = arith.constant 0.000000e+00 : f32
    %583 = vector.broadcast %cst_222 : f32 to vector<16x16xf32>
    %584 = vector.broadcast %cst_223 : f32 to vector<16x16xf32>
    %585 = arith.select %582, %583, %584 : vector<16x16xi1>, vector<16x16xf32>
    %cst_224 = arith.constant dense<0.000000e+00> : vector<32x16xf32>
    %586 = tpu.matmul %325, %585, %cst_224 {dimension_numbers = #tpu.dot_dimension_numbers<[1], [0], [0], [1], [0, 0, 1, 1], [], []>} : vector<32x16xf32>, vector<16x16xf32>, vector<32x16xf32> -> vector<32x16xf32>
    %587 = vector.extract_strided_slice %326 {offsets = [0, 7], sizes = [32, 1], strides = [1, 1]} : vector<32x9xf32> to vector<32x1xf32>
    %588 = vector.broadcast %587 : vector<32x1xf32> to vector<32x16xf32>
    %589 = arith.mulf %586, %588 : vector<32x16xf32>
    %590 = arith.addf %558, %589 : vector<32x16xf32>
    %c1_i32_225 = arith.constant 1 : i32
    %591 = vector.broadcast %c1_i32_225 : i32 to vector<16x16xi32>
    %592 = arith.muli %591, %331 : vector<16x16xi32>
    %c1_i32_226 = arith.constant 1 : i32
    %593 = vector.broadcast %c1_i32_226 : i32 to vector<16x16xi32>
    %594 = arith.addi %592, %593 : vector<16x16xi32>
    %c1_i32_227 = arith.constant 1 : i32
    %595 = vector.broadcast %c1_i32_227 : i32 to vector<16x16xi32>
    %596 = arith.muli %595, %333 : vector<16x16xi32>
    %c1_i32_228 = arith.constant 1 : i32
    %597 = vector.broadcast %c1_i32_228 : i32 to vector<16x16xi32>
    %598 = arith.addi %596, %597 : vector<16x16xi32>
    %c0_i32_229 = arith.constant 0 : i32
    %599 = vector.broadcast %c0_i32_229 : i32 to vector<16x16xi32>
    %600 = arith.cmpi sge, %594, %599 : vector<16x16xi32>
    %c4_i32_230 = arith.constant 4 : i32
    %601 = vector.broadcast %c4_i32_230 : i32 to vector<16x16xi32>
    %602 = arith.cmpi slt, %594, %601 : vector<16x16xi32>
    %603 = arith.andi %600, %602 : vector<16x16xi1>
    %c0_i32_231 = arith.constant 0 : i32
    %604 = vector.broadcast %c0_i32_231 : i32 to vector<16x16xi32>
    %605 = arith.cmpi sge, %598, %604 : vector<16x16xi32>
    %606 = arith.andi %603, %605 : vector<16x16xi1>
    %c4_i32_232 = arith.constant 4 : i32
    %607 = vector.broadcast %c4_i32_232 : i32 to vector<16x16xi32>
    %608 = arith.cmpi slt, %598, %607 : vector<16x16xi32>
    %609 = arith.andi %606, %608 : vector<16x16xi1>
    %c4_i32_233 = arith.constant 4 : i32
    %610 = vector.broadcast %c4_i32_233 : i32 to vector<16x16xi32>
    %611 = arith.muli %594, %610 : vector<16x16xi32>
    %612 = arith.addi %611, %598 : vector<16x16xi32>
    %613 = arith.cmpi eq, %328, %612 : vector<16x16xi32>
    %614 = arith.andi %609, %613 : vector<16x16xi1>
    %cst_234 = arith.constant 1.000000e+00 : f32
    %cst_235 = arith.constant 0.000000e+00 : f32
    %615 = vector.broadcast %cst_234 : f32 to vector<16x16xf32>
    %616 = vector.broadcast %cst_235 : f32 to vector<16x16xf32>
    %617 = arith.select %614, %615, %616 : vector<16x16xi1>, vector<16x16xf32>
    %cst_236 = arith.constant dense<0.000000e+00> : vector<32x16xf32>
    %618 = tpu.matmul %325, %617, %cst_236 {dimension_numbers = #tpu.dot_dimension_numbers<[1], [0], [0], [1], [0, 0, 1, 1], [], []>} : vector<32x16xf32>, vector<16x16xf32>, vector<32x16xf32> -> vector<32x16xf32>
    %619 = vector.extract_strided_slice %326 {offsets = [0, 8], sizes = [32, 1], strides = [1, 1]} : vector<32x9xf32> to vector<32x1xf32>
    %620 = vector.broadcast %619 : vector<32x1xf32> to vector<32x16xf32>
    %621 = arith.mulf %618, %620 : vector<32x16xf32>
    %622 = arith.addf %590, %621 : vector<32x16xf32>
    %623 = vector.broadcast %327 : vector<32x1xf32> to vector<32x16xf32>
    %624 = arith.addf %622, %623 : vector<32x16xf32>
    %cst_237 = arith.constant 0.000000e+00 : f32
    %625 = vector.broadcast %cst_237 : f32 to vector<32x16xf32>
    %626 = arith.maximumf %624, %625 : vector<32x16xf32>
    %c56 = arith.constant 56 : index
    %c0_238 = arith.constant 0 : index
    %627 = vector.load %arg2[%c56, %c0_238] : memref<110x32xbf16, #tpu.memory_space<vmem>>, vector<16x32xbf16>
    %628 = arith.truncf %626 : vector<32x16xf32> to vector<32x16xbf16>
    %cst_239 = arith.constant dense<0.000000e+00> : vector<16x16xf32>
    %629 = tpu.matmul %627, %628, %cst_239 {dimension_numbers = #tpu.dot_dimension_numbers<[1], [0], [0], [1], [0, 0, 1, 1], [], []>} : vector<16x32xbf16>, vector<32x16xbf16>, vector<16x16xf32> -> vector<16x16xf32>
    %c136 = arith.constant 136 : index
    %c0_240 = arith.constant 0 : index
    %630 = vector.load %arg3[%c136, %c0_240] : memref<190x9xf32, #tpu.memory_space<vmem>>, vector<16x1xf32>
    %631 = vector.broadcast %630 : vector<16x1xf32> to vector<16x16xf32>
    %632 = arith.addf %629, %631 : vector<16x16xf32>
    %633 = arith.addf %317, %632 : vector<16x16xf32>
    %c72_241 = arith.constant 72 : index
    %c0_242 = arith.constant 0 : index
    %634 = vector.load %arg2[%c72_241, %c0_242] : memref<110x32xbf16, #tpu.memory_space<vmem>>, vector<32x16xbf16>
    %635 = arith.truncf %633 : vector<16x16xf32> to vector<16x16xbf16>
    %cst_243 = arith.constant dense<0.000000e+00> : vector<32x16xf32>
    %636 = tpu.matmul %634, %635, %cst_243 {dimension_numbers = #tpu.dot_dimension_numbers<[1], [0], [0], [1], [0, 0, 1, 1], [], []>} : vector<32x16xbf16>, vector<16x16xbf16>, vector<32x16xf32> -> vector<32x16xf32>
    %c152 = arith.constant 152 : index
    %c0_244 = arith.constant 0 : index
    %637 = vector.load %arg3[%c152, %c0_244] : memref<190x9xf32, #tpu.memory_space<vmem>>, vector<32x1xf32>
    %638 = vector.broadcast %637 : vector<32x1xf32> to vector<32x16xf32>
    %639 = arith.addf %636, %638 : vector<32x16xf32>
    %cst_245 = arith.constant 0.000000e+00 : f32
    %640 = vector.broadcast %cst_245 : f32 to vector<32x16xf32>
    %641 = arith.maximumf %639, %640 : vector<32x16xf32>
    %cst_246 = arith.constant dense<0.000000e+00> : vector<32xf32>
    %642 = vector.multi_reduction <add>, %641, %cst_246 [1] : vector<32x16xf32> to vector<32xf32>
    %643 = vector.shape_cast %642 : vector<32xf32> to vector<32x1xf32>
    %cst_247 = arith.constant 6.250000e-02 : f32
    %644 = vector.broadcast %cst_247 : f32 to vector<32x1xf32>
    %645 = arith.mulf %643, %644 : vector<32x1xf32>
    %c104_248 = arith.constant 104 : index
    %c0_249 = arith.constant 0 : index
    %646 = vector.load %arg2[%c104_248, %c0_249] : memref<110x32xbf16, #tpu.memory_space<vmem>>, vector<6x32xbf16>
    %647 = arith.truncf %645 : vector<32x1xf32> to vector<32x1xbf16>
    %cst_250 = arith.constant dense<0.000000e+00> : vector<6x1xf32>
    %648 = tpu.matmul %646, %647, %cst_250 {dimension_numbers = #tpu.dot_dimension_numbers<[1], [0], [0], [1], [0, 0, 1, 1], [], []>} : vector<6x32xbf16>, vector<32x1xbf16>, vector<6x1xf32> -> vector<6x1xf32>
    %c184 = arith.constant 184 : index
    %c0_251 = arith.constant 0 : index
    %649 = vector.load %arg3[%c184, %c0_251] : memref<190x9xf32, #tpu.memory_space<vmem>>, vector<6x1xf32>
    %650 = arith.addf %648, %649 : vector<6x1xf32>
    %c0_252 = arith.constant 0 : index
    %c0_253 = arith.constant 0 : index
    %c0_254 = arith.constant 0 : index
    %651 = vector.load %arg4[%c0_252, %c0_253, %c0_254] : memref<1x6x1xf32, #tpu.memory_space<vmem>>, vector<1x6x1xf32>
    %652 = vector.shape_cast %651 : vector<1x6x1xf32> to vector<6x1xf32>
    %653 = vector.shape_cast %650 : vector<6x1xf32> to vector<1x6x1xf32>
    tpu.vector_store %arg4[%c0_252, %c0_253, %c0_254], %653 {strides = array<i32>} : memref<1x6x1xf32, #tpu.memory_space<vmem>>, vector<1x6x1xf32>,
    return
  }
  func.func @transform_0(%arg0: i32) -> (i32, i32, i32) {
    %c0_i32 = arith.constant 0 : i32
    %c0_i32_0 = arith.constant 0 : i32
    %c0_i32_1 = arith.constant 0 : i32
    return %arg0, %c0_i32, %c0_i32_0 : i32, i32, i32
  }
  func.func @transform_1(%arg0: i32) -> (i32, i32) {
    %c0_i32 = arith.constant 0 : i32
    %c0_i32_0 = arith.constant 0 : i32
    %c0_i32_1 = arith.constant 0 : i32
    return %c0_i32, %c0_i32_0 : i32, i32
  }
  func.func @transform_2(%arg0: i32) -> (i32, i32) {
    %c0_i32 = arith.constant 0 : i32
    %c0_i32_0 = arith.constant 0 : i32
    %c0_i32_1 = arith.constant 0 : i32
    return %c0_i32, %c0_i32_0 : i32, i32
  }
  func.func @transform_3(%arg0: i32) -> (i32, i32, i32) {
    %c0_i32 = arith.constant 0 : i32
    %c0_i32_0 = arith.constant 0 : i32
    %c0_i32_1 = arith.constant 0 : i32
    return %arg0, %c0_i32, %c0_i32_0 : i32, i32, i32
  }
}

</mosaic_0001>

<llo_original>
// kernel: _forward.1
$region0: #{_forward.1}
  #allocation0 [shape = 'u32[]', space=smem, size = 0x4, offset = 0x4, fixed_abs, tag = 'smem constant byte address 0x4 - core index']
  #allocation1 [shape = 'u32[144,128]{1,0:T(1,128)}', space=vmem, size = 0x12000, scoped, tag = 'internal scratch']
  %s0 = inlined_call_operand.vmem [shape: bf16[2,27,64], index: 0, kind: input, shape index: {}]
  %s1 = inlined_call_operand.vmem [shape: bf16[110,32], index: 1, kind: input, shape index: {}]
  %s2 = inlined_call_operand.vmem [shape: f32[190,9], index: 2, kind: input, shape index: {}]
  %s3 = inlined_call_operand.vmem [shape: f32[2,6,1], index: 3, kind: output, shape index: {}]
  %s4 = sld [smem:[#allocation0]]
  $region45: #{_forward.1} parent=0
    _
  %s6 = ssub.s32 1, %s4
  %s7 = scalar_select 0, %s6, %s4
  loop: start=0, step=1, limit=4
  $region2: #{_forward.1} parent=0 // loop_pre_header
    _
  $region3: #{_forward.1} parent=0 // loop_header
    %s9 = sphi 0, %s13
    %p10 = scmp.ge.s32.totalorder %s9, 4
    %s19 = sphi 0, %s21
    %s22 = sphi 0, %s19
    %s23 = sphi 0, %s22
    %s39 = sphi 0, %s23
    %s43 = sphi 0, %s43
    %s45 = sphi 0, %s43
    %s46 = sphi 0, %s45
    %s60 = sphi 0, %s46
    %s64 = sphi 0, %s64
    %s66 = sphi 0, %s64
    %s67 = sphi 0, %s66
    %s81 = sphi 0, %s67
    %s87 = sphi 0, %s89
    %s90 = sphi 0, %s87
    %s91 = sphi 0, %s90
    %s107 = sphi 0, %s91
  $region4: #{_forward.1} parent=0 // loop_header_branch
    %12 = sbr.rel (%p10) target = $region8
  $region5: #{_forward.1} parent=0 // loop_body
    %s14 = ssub.s32 %s9, 1
    %s15 = ssub.s32 %s9, 2
    %s16 = sadd.s32 %s9, 1
    %s17 = ssub.s32 %s9, %s16
    %p18 = scmp.eq.s32.totalorder %s17, 0
    %s20 = sadd.s32 %s19, 1
    %s21 = scalar_select %p18, %s19, %s20
    %p24 = pneg %p18
    %p25 = scmp.eq.s32.totalorder %s9, 1
    %p26 = por %p24, %p25
    %p27 = scmp.ne.s32.totalorder %s19, %s22
    %p28 = scmp.eq.s32.totalorder %s9, 0
    %p29 = por %p27, %p28
    %p30 = scmp.ne.s32.totalorder %s19, %s22
    %p31 = scmp.eq.s32.totalorder %s14, 1
    %p32 = por %p30, %p31
    %p33 = scmp.ne.s32.totalorder %s22, %s23
    %p34 = scmp.eq.s32.totalorder %s14, 0
    %p35 = por %p33, %p34
    %p36 = scmp.ne.s32.totalorder %s22, %s23
    %p37 = scmp.eq.s32.totalorder %s15, 1
    %p38 = por %p36, %p37
    %p40 = scmp.ne.s32.totalorder %s23, %s39
    %p41 = scmp.eq.s32.totalorder %s15, 0
    %p42 = por %p40, %p41
    %s44 = sadd.s32 %s43, 1
    %p47 = scmp.eq.s32.totalorder %s9, 1
    %p48 = scmp.ne.s32.totalorder %s43, %s45
    %p49 = scmp.eq.s32.totalorder %s9, 0
    %p50 = por %p48, %p49
    %p51 = scmp.ne.s32.totalorder %s43, %s45
    %p52 = scmp.eq.s32.totalorder %s14, 1
    %p53 = por %p51, %p52
    %p54 = scmp.ne.s32.totalorder %s45, %s46
    %p55 = scmp.eq.s32.totalorder %s14, 0
    %p56 = por %p54, %p55
    %p57 = scmp.ne.s32.totalorder %s45, %s46
    %p58 = scmp.eq.s32.totalorder %s15, 1
    %p59 = por %p57, %p58
    %p61 = scmp.ne.s32.totalorder %s46, %s60
    %p62 = scmp.eq.s32.totalorder %s15, 0
    %p63 = por %p61, %p62
    %s65 = sadd.s32 %s64, 1
    %p68 = scmp.eq.s32.totalorder %s9, 1
    %p69 = scmp.ne.s32.totalorder %s64, %s66
    %p70 = scmp.eq.s32.totalorder %s9, 0
    %p71 = por %p69, %p70
    %p72 = scmp.ne.s32.totalorder %s64, %s66
    %p73 = scmp.eq.s32.totalorder %s14, 1
    %p74 = por %p72, %p73
    %p75 = scmp.ne.s32.totalorder %s66, %s67
    %p76 = scmp.eq.s32.totalorder %s14, 0
    %p77 = por %p75, %p76
    %p78 = scmp.ne.s32.totalorder %s66, %s67
    %p79 = scmp.eq.s32.totalorder %s15, 1
    %p80 = por %p78, %p79
    %p82 = scmp.ne.s32.totalorder %s67, %s81
    %p83 = scmp.eq.s32.totalorder %s15, 0
    %p84 = por %p82, %p83
    %s85 = ssub.s32 %s9, %s16
    %p86 = scmp.eq.s32.totalorder %s85, 0
    %s88 = sadd.s32 %s87, 1
    %s89 = scalar_select %p86, %s87, %s88
    %p92 = pneg %p86
    %p93 = scmp.eq.s32.totalorder %s9, 1
    %p94 = por %p92, %p93
    %p95 = scmp.ne.s32.totalorder %s87, %s90
    %p96 = scmp.eq.s32.totalorder %s9, 0
    %p97 = por %p95, %p96
    %p98 = scmp.ne.s32.totalorder %s87, %s90
    %p99 = scmp.eq.s32.totalorder %s14, 1
    %p100 = por %p98, %p99
    %p101 = scmp.ne.s32.totalorder %s90, %s91
    %p102 = scmp.eq.s32.totalorder %s14, 0
    %p103 = por %p101, %p102
    %p104 = scmp.ne.s32.totalorder %s90, %s91
    %p105 = scmp.eq.s32.totalorder %s15, 1
    %p106 = por %p104, %p105
    %p108 = scmp.ne.s32.totalorder %s91, %s107
    %p109 = scmp.eq.s32.totalorder %s15, 0
    %p110 = por %p108, %p109
    %p111 = scmp.le.s32.totalorder 1, %s9
    %p112 = scmp.lt.s32.totalorder %s9, 3
    %p113 = pnand %p111, %p112
    %p114 = pneg %p113
    // Predicated region
    $region9: #{_forward.1} parent=5 // pred_check
      _
    $region10: #{_forward.1} parent=5 // pred_check_branch
      %116 = sbr.rel (%p113) target = $region12
    $region11: #{_forward.1} parent=5 // pred_region
      %s117 = ssub.s32 %s9, 1
      // Predicated region
      $region13: #{_forward.1} parent=11 // pred_check
        %p118 = pneg %p56
      $region14: #{_forward.1} parent=11 // pred_check_branch
        %120 = sbr.rel (%p118) target = $region16
      $region15: #{_forward.1} parent=11 // pred_region
        _
      $region16: #{_forward.1} parent=11 // pred_fallthru
        _
      // Predicated region
      $region17: #{_forward.1} parent=11 // pred_check
        %p121 = pneg %p77
      $region18: #{_forward.1} parent=11 // pred_check_branch
        %123 = sbr.rel (%p121) target = $region20
      $region19: #{_forward.1} parent=11 // pred_region
        _
      $region20: #{_forward.1} parent=11 // pred_fallthru
        _
    $region12: #{_forward.1} parent=5 // pred_fallthru
      _
    %p124 = scmp.lt.s32.totalorder %s9, 2
    // Predicated region
    $region21: #{_forward.1} parent=5 // pred_check
      %p125 = pneg %p124
    $region22: #{_forward.1} parent=5 // pred_check_branch
      %127 = sbr.rel (%p125) target = $region24
    $region23: #{_forward.1} parent=5 // pred_region
      // Predicated region
      $region25: #{_forward.1} parent=23 // pred_check
        %p128 = pneg %p29
      $region26: #{_forward.1} parent=23 // pred_check_branch
        %130 = sbr.rel (%p128) target = $region28
      $region27: #{_forward.1} parent=23 // pred_region
        %p131 = scmp.lt.s32.totalorder %s9, 1
        %s132 = scalar_select %p131, %s9, 1
        %s133 = smul.addr %s132, 4
        %s134 = smul.addr %s133, 4
        %s135 = scalar_lea.vmem %s0, %s134
      $region28: #{_forward.1} parent=23 // pred_fallthru
        _
    $region24: #{_forward.1} parent=5 // pred_fallthru
      _
    %p136 = scmp.le.s32.totalorder 1, %s9
    %p137 = scmp.lt.s32.totalorder %s9, 3
    %p138 = pnand %p136, %p137
    %p139 = pneg %p138
    // Predicated region
    $region29: #{_forward.1} parent=5 // pred_check
      _
    $region30: #{_forward.1} parent=5 // pred_check_branch
      %141 = sbr.rel (%p138) target = $region32
    $region31: #{_forward.1} parent=5 // pred_region
      %s142 = ssub.s32 %s9, 1
      %p143 = scmp.lt.s32.totalorder %s14, 1
      %s144 = scalar_select %p143, %s14, 1
      %s145 = smul.addr %s144, 4
      %s146 = smul.addr %s145, 4
      %s147 = scalar_lea.vmem %s0, %s146
      %p148 = pneg %p35
      %p149 = pneg %p32
      %p150 = pneg %p56
      %p151 = pneg %p53
      %p152 = pneg %p77
      %p153 = pneg %p74
      %p154 = pneg %p103
      %p155 = pneg %p100
      %p156 = scmp.lt.s32.totalorder %s14, 1
      %s157 = scalar_select %p156, %s14, 1
      %s158 = smul.addr %s157, 8
      %s159 = scalar_lea.vmem %s3, %s158
      %p160 = scmp.lt.s32.totalorder %s14, 1
      %s161 = scalar_select %p160, %s14, 1
      %s162 = smul.addr %s161, 4
      %s163 = smul.addr %s162, 4
      %s164 = scalar_lea.vmem %s0, %s163
      %p165 = scmp.lt.s32.totalorder %s14, 1
      %s166 = scalar_select %p165, %s14, 1
      %s167 = smul.addr %s166, 8
      %s168 = scalar_lea.vmem %s3, %s167
      %v170 = vld [vmem:[%s1] sm:$0xf]
      %v171 = vld [vmem:[%s164] sm:$0xf]
      %v172 = vld [vmem:[%s164 + $0x4] sm:$0xf]
      %v173 = vld [vmem:[%s164 + $0x8] sm:$0xf]
      %v174 = vld [vmem:[%s164 + $0xc] sm:$0x3]
      %v175 = vld [vmem:[%s2] sm:$0xff]
      %177 = vset.pattern.permute.xlu0 0
      %178 = vperm.xlu0 %177, %v175
      %v179 = vpop.permute.xlu0 %178
      %v185 = vunpack.c.l.b16 %v171
      %v186 = vunpack.c.l.b16 %v172
      %v187 = vunpack.c.l.b16 %v173
      %v188 = vunpack.c.l.b16 %v174
      %v189 = vpack.c.b16 %v186, %v185
      %v190 = vpack.c.b16 %v188, %v187
      %vm192 = vcmask 220160
      %v194 = vsel %vm192, %v170, 0
      %vm196 = vcmask 1044480
      %vm197 = vcmask 1045504
      %v198 = vsel %vm196, 4294967295, 65535
      %v199 = vsel %vm197, %v198, 0
      %v201 = vand.u32 %v190, %v199
      %203 = vmatprep.subr.bf16.mxu0 0
      %204 = vmatpush1.bf16.msra.mxu0 0
      %205 = vmatprep.subr.bf16.mxu0 0
      %206 = vmatpush1.bf16.msra.mxu0 0
      %207 = vmatprep.subr.bf16.mxu0 0
      %208 = vmatpush1.bf16.msra.mxu0 0
      %209 = vmatprep.subr.bf16.mxu0 0
      %210 = vmatpush1.bf16.msra.mxu0 0
      %211 = vmatprep.subr.bf16.mxu0 0
      %212 = vmatpush1.bf16.msra.mxu0 0
      %213 = vmatprep.subr.bf16.mxu0 0
      %214 = vmatpush1.bf16.msra.mxu0 0
      %215 = vmatprep.subr.bf16.mxu0 0
      %216 = vmatpush1.bf16.msra.mxu0 %v201
      %217 = vmatprep.subr.bf16.mxu0 0
      %218 = vmatpush1.bf16.msra.mxu0 %v189
      %219 = vmatprep.subr.bf16.mxu0 0
      %220 = vmatpush2.bf16.msra.mxu0 0
      %221 = vmatprep.subr.bf16.mxu0 0
      %222 = vmatpush2.bf16.msra.mxu0 0
      %223 = vmatprep.subr.bf16.mxu0 0
      %224 = vmatpush2.bf16.msra.mxu0 0
      %225 = vmatprep.subr.bf16.mxu0 0
      %226 = vmatpush2.bf16.msra.mxu0 0
      %227 = vmatprep.subr.bf16.mxu0 0
      %228 = vmatpush2.bf16.msra.mxu0 0
      %229 = vmatprep.subr.bf16.mxu0 0
      %230 = vmatpush2.bf16.msra.mxu0 0
      %231 = vmatprep.subr.bf16.mxu0 0
      %232 = vmatpush2.bf16.msra.mxu0 0
      %233 = vmatprep.subr.bf16.mxu0 0
      %234 = vmatpush2.bf16.msra.mxu0 0
      %235 = vmatprep.mubr.bf16.mxu0 0
      %236 = vmatmul.mubr.bf16.gmra.mxu0 %v194
      %v237 = vpop.f32.mrf.mxu0
      %v238 = vadd.f32 %v179, %v237
      %v239 = vpop.f32.mrf.mxu0
      %v240 = vpop.f32.mrf.mxu0
      %v241 = vpop.f32.mrf.mxu0
      %242 = vdwg.mxu0
      %v243 = vmax.f32 %v238, 0.0
      %v244 = vld [vmem:[%s2 + $0x8] sm:$0xff]
      %v245 = vld [vmem:[%s2 + $0x10] sm:$0xff]
      %v246 = vlaneseq
      %v247 = vshrl.u32 %v246, 7
      %v248 = vadd.s32 %v247, 8
      %v249 = vadd.s32 %v247, 16
      %v250 = vadd.s32 %v247, 24
      %v251 = vadd.s32 %v247, 32
      %v252 = vadd.s32 %v247, 40
      %v253 = vadd.s32 %v247, 48
      %v254 = vadd.s32 %v247, 56
      %v255 = vlaneseq
      %v256 = vand.u32 %v255, 127
      %v257 = vshra.s32 %v256, 2
      %v258 = vand.u32 %v256, 3
      %v259 = vmul.u32 %v257, 2
      %v260 = vadd.s32 %v259, 4294967295
      %v261 = vmul.u32 %v258, 2
      %v262 = vadd.s32 %v261, 4294967295
      %vm263 = vcmp.ge.s32.totalorder %v260, 0
      %vm264 = vcmp.lt.s32.totalorder %v260, 8
      %vm265 = vmand %vm263, %vm264
      %vm266 = vcmp.ge.s32.totalorder %v262, 0
      %vm267 = vmand %vm265, %vm266
      %vm268 = vcmp.lt.s32.totalorder %v262, 8
      %vm269 = vmand %vm267, %vm268
      %v270 = vmul.u32 %v260, 8
      %v271 = vadd.s32 %v270, %v262
      %vm272 = vcmp.eq.s32.totalorder %v247, %v271
      %vm273 = vcmp.eq.s32.totalorder %v248, %v271
      %vm274 = vcmp.eq.s32.totalorder %v249, %v271
      %vm275 = vcmp.eq.s32.totalorder %v250, %v271
      %vm276 = vcmp.eq.s32.totalorder %v251, %v271
      %vm277 = vcmp.eq.s32.totalorder %v252, %v271
      %vm278 = vcmp.eq.s32.totalorder %v253, %v271
      %vm279 = vcmp.eq.s32.totalorder %v254, %v271
      %vm280 = vmand %vm269, %vm272
      %vm281 = vmand %vm269, %vm273
      %vm282 = vmand %vm269, %vm274
      %vm283 = vmand %vm269, %vm275
      %vm284 = vmand %vm269, %vm276
      %vm285 = vmand %vm269, %vm277
      %vm286 = vmand %vm269, %vm278
      %vm287 = vmand %vm269, %vm279
      %v288 = vsel %vm280, 1.0, 0.0
      %v289 = vsel %vm281, 1.0, 0.0
      %v290 = vsel %vm282, 1.0, 0.0
      %v291 = vsel %vm283, 1.0, 0.0
      %v292 = vsel %vm284, 1.0, 0.0
      %v293 = vsel %vm285, 1.0, 0.0
      %v294 = vsel %vm286, 1.0, 0.0
      %v295 = vsel %vm287, 1.0, 0.0
      %vm296 = vcmask 523264
      %v298 = vsel %vm296, %v243, 0
      %300 = vmatprep.subr.mxu0 0.0
      %301 = vmatpush1.msra.mxu0 0.0
      %302 = vmatprep.subr.mxu0 0.0
      %303 = vmatpush1.msra.mxu0 0.0
      %304 = vmatprep.subr.mxu0 0.0
      %305 = vmatpush1.msra.mxu0 0.0
      %306 = vmatprep.subr.mxu0 0.0
      %307 = vmatpush1.msra.mxu0 0.0
      %308 = vmatprep.subr.mxu0 0.0
      %309 = vmatpush1.msra.mxu0 0.0
      %310 = vmatprep.subr.mxu0 0.0
      %311 = vmatpush1.msra.mxu0 0.0
      %312 = vmatprep.subr.mxu0 0.0
      %313 = vmatpush1.msra.mxu0 0.0
      %314 = vmatprep.subr.mxu0 0.0
      %315 = vmatpush1.msra.mxu0 0.0
      %316 = vmatprep.subr.mxu0 0.0
      %317 = vmatpush1.msra.mxu0 %v295
      %318 = vmatprep.subr.mxu0 0.0
      %319 = vmatpush1.msra.mxu0 %v294
      %320 = vmatprep.subr.mxu0 0.0
      %321 = vmatpush1.msra.mxu0 %v293
      %322 = vmatprep.subr.mxu0 0.0
      %323 = vmatpush1.msra.mxu0 %v292
      %324 = vmatprep.subr.mxu0 0.0
      %325 = vmatpush1.msra.mxu0 %v291
      %326 = vmatprep.subr.mxu0 0.0
      %327 = vmatpush1.msra.mxu0 %v290
      %328 = vmatprep.subr.mxu0 0.0
      %329 = vmatpush1.msra.mxu0 %v289
      %330 = vmatprep.subr.mxu0 0.0
      %331 = vmatpush1.msra.mxu0 %v288
      %332 = vmatprep.subr.mxu0 0.0
      %333 = vmatpush2.msra.mxu0 0.0
      %334 = vmatprep.subr.mxu0 0.0
      %335 = vmatpush2.msra.mxu0 0.0
      %336 = vmatprep.subr.mxu0 0.0
      %337 = vmatpush2.msra.mxu0 0.0
      %338 = vmatprep.subr.mxu0 0.0
      %339 = vmatpush2.msra.mxu0 0.0
      %340 = vmatprep.subr.mxu0 0.0
      %341 = vmatpush2.msra.mxu0 0.0
      %342 = vmatprep.subr.mxu0 0.0
      %343 = vmatpush2.msra.mxu0 0.0
      %344 = vmatprep.subr.mxu0 0.0
      %345 = vmatpush2.msra.mxu0 0.0
      %346 = vmatprep.subr.mxu0 0.0
      %347 = vmatpush2.msra.mxu0 0.0
      %348 = vmatprep.subr.mxu0 0.0
      %349 = vmatpush2.msra.mxu0 0.0
      %350 = vmatprep.subr.mxu0 0.0
      %351 = vmatpush2.msra.mxu0 0.0
      %352 = vmatprep.subr.mxu0 0.0
      %353 = vmatpush2.msra.mxu0 0.0
      %354 = vmatprep.subr.mxu0 0.0
      %355 = vmatpush2.msra.mxu0 0.0
      %356 = vmatprep.subr.mxu0 0.0
      %357 = vmatpush2.msra.mxu0 0.0
      %358 = vmatprep.subr.mxu0 0.0
      %359 = vmatpush2.msra.mxu0 0.0
      %360 = vmatprep.subr.mxu0 0.0
      %361 = vmatpush2.msra.mxu0 0.0
      %362 = vmatprep.subr.mxu0 0.0
      %363 = vmatpush2.msra.mxu0 0.0
      %364 = vmatprep.mubr.f32.mxu0 0.0
      %365 = vmatmul.mubr.f32.gmra.mxu0 %v298
      %v366 = vpop.f32.mrf.mxu0
      %v367 = vadd.f32 0.0, %v366
      %v368 = vpop.f32.mrf.mxu0
      %369 = vdwg.mxu0
      %371 = vset.pattern.permute.xlu0 0
      %372 = vperm.xlu0 %371, %v244
      %v373 = vpop.permute.xlu0 %372
      %v375 = vmul.f32 %v367, %v373
      %v376 = vadd.f32 %v375, 0.0
      %vm377 = vcmp.ge.s32.totalorder %v261, 0
      %vm378 = vmand %vm265, %vm377
      %vm379 = vcmp.lt.s32.totalorder %v261, 8
      %vm380 = vmand %vm378, %vm379
      %v381 = vadd.s32 %v270, %v261
      %vm382 = vcmp.eq.s32.totalorder %v247, %v381
      %vm383 = vcmp.eq.s32.totalorder %v248, %v381
      %vm384 = vcmp.eq.s32.totalorder %v249, %v381
      %vm385 = vcmp.eq.s32.totalorder %v250, %v381
      %vm386 = vcmp.eq.s32.totalorder %v251, %v381
      %vm387 = vcmp.eq.s32.totalorder %v252, %v381
      %vm388 = vcmp.eq.s32.totalorder %v253, %v381
      %vm389 = vcmp.eq.s32.totalorder %v254, %v381
      %vm390 = vmand %vm380, %vm382
      %vm391 = vmand %vm380, %vm383
      %vm392 = vmand %vm380, %vm384
      %vm393 = vmand %vm380, %vm385
      %vm394 = vmand %vm380, %vm386
      %vm395 = vmand %vm380, %vm387
      %vm396 = vmand %vm380, %vm388
      %vm397 = vmand %vm380, %vm389
      %v398 = vsel %vm390, 1.0, 0.0
      %v399 = vsel %vm391, 1.0, 0.0
      %v400 = vsel %vm392, 1.0, 0.0
      %v401 = vsel %vm393, 1.0, 0.0
      %v402 = vsel %vm394, 1.0, 0.0
      %v403 = vsel %vm395, 1.0, 0.0
      %v404 = vsel %vm396, 1.0, 0.0
      %v405 = vsel %vm397, 1.0, 0.0
      %406 = vmatprep.subr.mxu0 0.0
      %407 = vmatpush1.msra.mxu0 0.0
      %408 = vmatprep.subr.mxu0 0.0
      %409 = vmatpush1.msra.mxu0 0.0
      %410 = vmatprep.subr.mxu0 0.0
      %411 = vmatpush1.msra.mxu0 0.0
      %412 = vmatprep.subr.mxu0 0.0
      %413 = vmatpush1.msra.mxu0 0.0
      %414 = vmatprep.subr.mxu0 0.0
      %415 = vmatpush1.msra.mxu0 0.0
      %416 = vmatprep.subr.mxu0 0.0
      %417 = vmatpush1.msra.mxu0 0.0
      %418 = vmatprep.subr.mxu0 0.0
      %419 = vmatpush1.msra.mxu0 0.0
      %420 = vmatprep.subr.mxu0 0.0
      %421 = vmatpush1.msra.mxu0 0.0
      %422 = vmatprep.subr.mxu0 0.0
      %423 = vmatpush1.msra.mxu0 %v405
      %424 = vmatprep.subr.mxu0 0.0
      %425 = vmatpush1.msra.mxu0 %v404
      %426 = vmatprep.subr.mxu0 0.0
      %427 = vmatpush1.msra.mxu0 %v403
      %428 = vmatprep.subr.mxu0 0.0
      %429 = vmatpush1.msra.mxu0 %v402
      %430 = vmatprep.subr.mxu0 0.0
      %431 = vmatpush1.msra.mxu0 %v401
      %432 = vmatprep.subr.mxu0 0.0
      %433 = vmatpush1.msra.mxu0 %v400
      %434 = vmatprep.subr.mxu0 0.0
      %435 = vmatpush1.msra.mxu0 %v399
      %436 = vmatprep.subr.mxu0 0.0
      %437 = vmatpush1.msra.mxu0 %v398
      %438 = vmatprep.subr.mxu0 0.0
      %439 = vmatpush2.msra.mxu0 0.0
      %440 = vmatprep.subr.mxu0 0.0
      %441 = vmatpush2.msra.mxu0 0.0
      %442 = vmatprep.subr.mxu0 0.0
      %443 = vmatpush2.msra.mxu0 0.0
      %444 = vmatprep.subr.mxu0 0.0
      %445 = vmatpush2.msra.mxu0 0.0
      %446 = vmatprep.subr.mxu0 0.0
      %447 = vmatpush2.msra.mxu0 0.0
      %448 = vmatprep.subr.mxu0 0.0
      %449 = vmatpush2.msra.mxu0 0.0
      %450 = vmatprep.subr.mxu0 0.0
      %451 = vmatpush2.msra.mxu0 0.0
      %452 = vmatprep.subr.mxu0 0.0
      %453 = vmatpush2.msra.mxu0 0.0
      %454 = vmatprep.subr.mxu0 0.0
      %455 = vmatpush2.msra.mxu0 0.0
      %456 = vmatprep.subr.mxu0 0.0
      %457 = vmatpush2.msra.mxu0 0.0
      %458 = vmatprep.subr.mxu0 0.0
      %459 = vmatpush2.msra.mxu0 0.0
      %460 = vmatprep.subr.mxu0 0.0
      %461 = vmatpush2.msra.mxu0 0.0
      %462 = vmatprep.subr.mxu0 0.0
      %463 = vmatpush2.msra.mxu0 0.0
      %464 = vmatprep.subr.mxu0 0.0
      %465 = vmatpush2.msra.mxu0 0.0
      %466 = vmatprep.subr.mxu0 0.0
      %467 = vmatpush2.msra.mxu0 0.0
      %468 = vmatprep.subr.mxu0 0.0
      %469 = vmatpush2.msra.mxu0 0.0
      %470 = vmatprep.mubr.f32.mxu0 0.0
      %471 = vmatmul.mubr.f32.gmra.mxu0 %v298
      %v472 = vpop.f32.mrf.mxu0
      %v473 = vadd.f32 0.0, %v472
      %v474 = vpop.f32.mrf.mxu0
      %475 = vdwg.mxu0
      %476 = vset.pattern.permute.xlu0 1
      %477 = vperm.xlu0 %476, %v244
      %v478 = vpop.permute.xlu0 %477
      %v480 = vmul.f32 %v473, %v478
      %v481 = vadd.f32 %v376, %v480
      %v482 = vadd.s32 %v261, 1
      %vm483 = vcmp.ge.s32.totalorder %v482, 0
      %vm484 = vmand %vm265, %vm483
      %vm485 = vcmp.lt.s32.totalorder %v482, 8
      %vm486 = vmand %vm484, %vm485
      %v487 = vadd.s32 %v270, %v482
      %vm488 = vcmp.eq.s32.totalorder %v247, %v487
      %vm489 = vcmp.eq.s32.totalorder %v248, %v487
      %vm490 = vcmp.eq.s32.totalorder %v249, %v487
      %vm491 = vcmp.eq.s32.totalorder %v250, %v487
      %vm492 = vcmp.eq.s32.totalorder %v251, %v487
      %vm493 = vcmp.eq.s32.totalorder %v252, %v487
      %vm494 = vcmp.eq.s32.totalorder %v253, %v487
      %vm495 = vcmp.eq.s32.totalorder %v254, %v487
      %vm496 = vmand %vm486, %vm488
      %vm497 = vmand %vm486, %vm489
      %vm498 = vmand %vm486, %vm490
      %vm499 = vmand %vm486, %vm491
      %vm500 = vmand %vm486, %vm492
      %vm501 = vmand %vm486, %vm493
      %vm502 = vmand %vm486, %vm494
      %vm503 = vmand %vm486, %vm495
      %v504 = vsel %vm496, 1.0, 0.0
      %v505 = vsel %vm497, 1.0, 0.0
      %v506 = vsel %vm498, 1.0, 0.0
      %v507 = vsel %vm499, 1.0, 0.0
      %v508 = vsel %vm500, 1.0, 0.0
      %v509 = vsel %vm501, 1.0, 0.0
      %v510 = vsel %vm502, 1.0, 0.0
      %v511 = vsel %vm503, 1.0, 0.0
      %512 = vmatprep.subr.mxu0 0.0
      %513 = vmatpush1.msra.mxu0 0.0
      %514 = vmatprep.subr.mxu0 0.0
      %515 = vmatpush1.msra.mxu0 0.0
      %516 = vmatprep.subr.mxu0 0.0
      %517 = vmatpush1.msra.mxu0 0.0
      %518 = vmatprep.subr.mxu0 0.0
      %519 = vmatpush1.msra.mxu0 0.0
      %520 = vmatprep.subr.mxu0 0.0
      %521 = vmatpush1.msra.mxu0 0.0
      %522 = vmatprep.subr.mxu0 0.0
      %523 = vmatpush1.msra.mxu0 0.0
      %524 = vmatprep.subr.mxu0 0.0
      %525 = vmatpush1.msra.mxu0 0.0
      %526 = vmatprep.subr.mxu0 0.0
      %527 = vmatpush1.msra.mxu0 0.0
      %528 = vmatprep.subr.mxu0 0.0
      %529 = vmatpush1.msra.mxu0 %v511
      %530 = vmatprep.subr.mxu0 0.0
      %531 = vmatpush1.msra.mxu0 %v510
      %532 = vmatprep.subr.mxu0 0.0
      %533 = vmatpush1.msra.mxu0 %v509
      %534 = vmatprep.subr.mxu0 0.0
      %535 = vmatpush1.msra.mxu0 %v508
      %536 = vmatprep.subr.mxu0 0.0
      %537 = vmatpush1.msra.mxu0 %v507
      %538 = vmatprep.subr.mxu0 0.0
      %539 = vmatpush1.msra.mxu0 %v506
      %540 = vmatprep.subr.mxu0 0.0
      %541 = vmatpush1.msra.mxu0 %v505
      %542 = vmatprep.subr.mxu0 0.0
      %543 = vmatpush1.msra.mxu0 %v504
      %544 = vmatprep.subr.mxu0 0.0
      %545 = vmatpush2.msra.mxu0 0.0
      %546 = vmatprep.subr.mxu0 0.0
      %547 = vmatpush2.msra.mxu0 0.0
      %548 = vmatprep.subr.mxu0 0.0
      %549 = vmatpush2.msra.mxu0 0.0
      %550 = vmatprep.subr.mxu0 0.0
      %551 = vmatpush2.msra.mxu0 0.0
      %552 = vmatprep.subr.mxu0 0.0
      %553 = vmatpush2.msra.mxu0 0.0
      %554 = vmatprep.subr.mxu0 0.0
      %555 = vmatpush2.msra.mxu0 0.0
      %556 = vmatprep.subr.mxu0 0.0
      %557 = vmatpush2.msra.mxu0 0.0
      %558 = vmatprep.subr.mxu0 0.0
      %559 = vmatpush2.msra.mxu0 0.0
      %560 = vmatprep.subr.mxu0 0.0
      %561 = vmatpush2.msra.mxu0 0.0
      %562 = vmatprep.subr.mxu0 0.0
      %563 = vmatpush2.msra.mxu0 0.0
      %564 = vmatprep.subr.mxu0 0.0
      %565 = vmatpush2.msra.mxu0 0.0
      %566 = vmatprep.subr.mxu0 0.0
      %567 = vmatpush2.msra.mxu0 0.0
      %568 = vmatprep.subr.mxu0 0.0
      %569 = vmatpush2.msra.mxu0 0.0
      %570 = vmatprep.subr.mxu0 0.0
      %571 = vmatpush2.msra.mxu0 0.0
      %572 = vmatprep.subr.mxu0 0.0
      %573 = vmatpush2.msra.mxu0 0.0
      %574 = vmatprep.subr.mxu0 0.0
      %575 = vmatpush2.msra.mxu0 0.0
      %576 = vmatprep.mubr.f32.mxu0 0.0
      %577 = vmatmul.mubr.f32.gmra.mxu0 %v298
      %v578 = vpop.f32.mrf.mxu0
      %v579 = vadd.f32 0.0, %v578
      %v580 = vpop.f32.mrf.mxu0
      %581 = vdwg.mxu0
      %582 = vset.pattern.permute.xlu0 2
      %583 = vperm.xlu0 %582, %v244
      %v584 = vpop.permute.xlu0 %583
      %v586 = vmul.f32 %v579, %v584
      %v587 = vadd.f32 %v481, %v586
      %vm588 = vcmp.ge.s32.totalorder %v259, 0
      %vm589 = vcmp.lt.s32.totalorder %v259, 8
      %vm590 = vmand %vm588, %vm589
      %vm591 = vmand %vm590, %vm266
      %vm592 = vmand %vm591, %vm268
      %v593 = vmul.u32 %v259, 8
      %v594 = vadd.s32 %v593, %v262
      %vm595 = vcmp.eq.s32.totalorder %v247, %v594
      %vm596 = vcmp.eq.s32.totalorder %v248, %v594
      %vm597 = vcmp.eq.s32.totalorder %v249, %v594
      %vm598 = vcmp.eq.s32.totalorder %v250, %v594
      %vm599 = vcmp.eq.s32.totalorder %v251, %v594
      %vm600 = vcmp.eq.s32.totalorder %v252, %v594
      %vm601 = vcmp.eq.s32.totalorder %v253, %v594
      %vm602 = vcmp.eq.s32.totalorder %v254, %v594
      %vm603 = vmand %vm592, %vm595
      %vm604 = vmand %vm592, %vm596
      %vm605 = vmand %vm592, %vm597
      %vm606 = vmand %vm592, %vm598
      %vm607 = vmand %vm592, %vm599
      %vm608 = vmand %vm592, %vm600
      %vm609 = vmand %vm592, %vm601
      %vm610 = vmand %vm592, %vm602
      %v611 = vsel %vm603, 1.0, 0.0
      %v612 = vsel %vm604, 1.0, 0.0
      %v613 = vsel %vm605, 1.0, 0.0
      %v614 = vsel %vm606, 1.0, 0.0
      %v615 = vsel %vm607, 1.0, 0.0
      %v616 = vsel %vm608, 1.0, 0.0
      %v617 = vsel %vm609, 1.0, 0.0
      %v618 = vsel %vm610, 1.0, 0.0
      %619 = vmatprep.subr.mxu0 0.0
      %620 = vmatpush1.msra.mxu0 0.0
      %621 = vmatprep.subr.mxu0 0.0
      %622 = vmatpush1.msra.mxu0 0.0
      %623 = vmatprep.subr.mxu0 0.0
      %624 = vmatpush1.msra.mxu0 0.0
      %625 = vmatprep.subr.mxu0 0.0
      %626 = vmatpush1.msra.mxu0 0.0
      %627 = vmatprep.subr.mxu0 0.0
      %628 = vmatpush1.msra.mxu0 0.0
      %629 = vmatprep.subr.mxu0 0.0
      %630 = vmatpush1.msra.mxu0 0.0
      %631 = vmatprep.subr.mxu0 0.0
      %632 = vmatpush1.msra.mxu0 0.0
      %633 = vmatprep.subr.mxu0 0.0
      %634 = vmatpush1.msra.mxu0 0.0
      %635 = vmatprep.subr.mxu0 0.0
      %636 = vmatpush1.msra.mxu0 %v618
      %637 = vmatprep.subr.mxu0 0.0
      %638 = vmatpush1.msra.mxu0 %v617
      %639 = vmatprep.subr.mxu0 0.0
      %640 = vmatpush1.msra.mxu0 %v616
      %641 = vmatprep.subr.mxu0 0.0
      %642 = vmatpush1.msra.mxu0 %v615
      %643 = vmatprep.subr.mxu0 0.0
      %644 = vmatpush1.msra.mxu0 %v614
      %645 = vmatprep.subr.mxu0 0.0
      %646 = vmatpush1.msra.mxu0 %v613
      %647 = vmatprep.subr.mxu0 0.0
      %648 = vmatpush1.msra.mxu0 %v612
      %649 = vmatprep.subr.mxu0 0.0
      %650 = vmatpush1.msra.mxu0 %v611
      %651 = vmatprep.subr.mxu0 0.0
      %652 = vmatpush2.msra.mxu0 0.0
      %653 = vmatprep.subr.mxu0 0.0
      %654 = vmatpush2.msra.mxu0 0.0
      %655 = vmatprep.subr.mxu0 0.0
      %656 = vmatpush2.msra.mxu0 0.0
      %657 = vmatprep.subr.mxu0 0.0
      %658 = vmatpush2.msra.mxu0 0.0
      %659 = vmatprep.subr.mxu0 0.0
      %660 = vmatpush2.msra.mxu0 0.0
      %661 = vmatprep.subr.mxu0 0.0
      %662 = vmatpush2.msra.mxu0 0.0
      %663 = vmatprep.subr.mxu0 0.0
      %664 = vmatpush2.msra.mxu0 0.0
      %665 = vmatprep.subr.mxu0 0.0
      %666 = vmatpush2.msra.mxu0 0.0
      %667 = vmatprep.subr.mxu0 0.0
      %668 = vmatpush2.msra.mxu0 0.0
      %669 = vmatprep.subr.mxu0 0.0
      %670 = vmatpush2.msra.mxu0 0.0
      %671 = vmatprep.subr.mxu0 0.0
      %672 = vmatpush2.msra.mxu0 0.0
      %673 = vmatprep.subr.mxu0 0.0
      %674 = vmatpush2.msra.mxu0 0.0
      %675 = vmatprep.subr.mxu0 0.0
      %676 = vmatpush2.msra.mxu0 0.0
      %677 = vmatprep.subr.mxu0 0.0
      %678 = vmatpush2.msra.mxu0 0.0
      %679 = vmatprep.subr.mxu0 0.0
      %680 = vmatpush2.msra.mxu0 0.0
      %681 = vmatprep.subr.mxu0 0.0
      %682 = vmatpush2.msra.mxu0 0.0
      %683 = vmatprep.mubr.f32.mxu0 0.0
      %684 = vmatmul.mubr.f32.gmra.mxu0 %v298
      %v685 = vpop.f32.mrf.mxu0
      %v686 = vadd.f32 0.0, %v685
      %v687 = vpop.f32.mrf.mxu0
      %688 = vdwg.mxu0
      %689 = vset.pattern.permute.xlu0 3
      %690 = vperm.xlu0 %689, %v244
      %v691 = vpop.permute.xlu0 %690
      %v693 = vmul.f32 %v686, %v691
      %v694 = vadd.f32 %v587, %v693
      %vm695 = vmand %vm590, %vm377
      %vm696 = vmand %vm695, %vm379
      %v697 = vadd.s32 %v593, %v261
      %vm698 = vcmp.eq.s32.totalorder %v247, %v697
      %vm699 = vcmp.eq.s32.totalorder %v248, %v697
      %vm700 = vcmp.eq.s32.totalorder %v249, %v697
      %vm701 = vcmp.eq.s32.totalorder %v250, %v697
      %vm702 = vcmp.eq.s32.totalorder %v251, %v697
      %vm703 = vcmp.eq.s32.totalorder %v252, %v697
      %vm704 = vcmp.eq.s32.totalorder %v253, %v697
      %vm705 = vcmp.eq.s32.totalorder %v254, %v697
      %vm706 = vmand %vm696, %vm698
      %vm707 = vmand %vm696, %vm699
      %vm708 = vmand %vm696, %vm700
      %vm709 = vmand %vm696, %vm701
      %vm710 = vmand %vm696, %vm702
      %vm711 = vmand %vm696, %vm703
      %vm712 = vmand %vm696, %vm704
      %vm713 = vmand %vm696, %vm705
      %v714 = vsel %vm706, 1.0, 0.0
      %v715 = vsel %vm707, 1.0, 0.0
      %v716 = vsel %vm708, 1.0, 0.0
      %v717 = vsel %vm709, 1.0, 0.0
      %v718 = vsel %vm710, 1.0, 0.0
      %v719 = vsel %vm711, 1.0, 0.0
      %v720 = vsel %vm712, 1.0, 0.0
      %v721 = vsel %vm713, 1.0, 0.0
      %722 = vmatprep.subr.mxu0 0.0
      %723 = vmatpush1.msra.mxu0 0.0
      %724 = vmatprep.subr.mxu0 0.0
      %725 = vmatpush1.msra.mxu0 0.0
      %726 = vmatprep.subr.mxu0 0.0
      %727 = vmatpush1.msra.mxu0 0.0
      %728 = vmatprep.subr.mxu0 0.0
      %729 = vmatpush1.msra.mxu0 0.0
      %730 = vmatprep.subr.mxu0 0.0
      %731 = vmatpush1.msra.mxu0 0.0
      %732 = vmatprep.subr.mxu0 0.0
      %733 = vmatpush1.msra.mxu0 0.0
      %734 = vmatprep.subr.mxu0 0.0
      %735 = vmatpush1.msra.mxu0 0.0
      %736 = vmatprep.subr.mxu0 0.0
      %737 = vmatpush1.msra.mxu0 0.0
      %738 = vmatprep.subr.mxu0 0.0
      %739 = vmatpush1.msra.mxu0 %v721
      %740 = vmatprep.subr.mxu0 0.0
      %741 = vmatpush1.msra.mxu0 %v720
      %742 = vmatprep.subr.mxu0 0.0
      %743 = vmatpush1.msra.mxu0 %v719
      %744 = vmatprep.subr.mxu0 0.0
      %745 = vmatpush1.msra.mxu0 %v718
      %746 = vmatprep.subr.mxu0 0.0
      %747 = vmatpush1.msra.mxu0 %v717
      %748 = vmatprep.subr.mxu0 0.0
      %749 = vmatpush1.msra.mxu0 %v716
      %750 = vmatprep.subr.mxu0 0.0
      %751 = vmatpush1.msra.mxu0 %v715
      %752 = vmatprep.subr.mxu0 0.0
      %753 = vmatpush1.msra.mxu0 %v714
      %754 = vmatprep.subr.mxu0 0.0
      %755 = vmatpush2.msra.mxu0 0.0
      %756 = vmatprep.subr.mxu0 0.0
      %757 = vmatpush2.msra.mxu0 0.0
      %758 = vmatprep.subr.mxu0 0.0
      %759 = vmatpush2.msra.mxu0 0.0
      %760 = vmatprep.subr.mxu0 0.0
      %761 = vmatpush2.msra.mxu0 0.0
      %762 = vmatprep.subr.mxu0 0.0
      %763 = vmatpush2.msra.mxu0 0.0
      %764 = vmatprep.subr.mxu0 0.0
      %765 = vmatpush2.msra.mxu0 0.0
      %766 = vmatprep.subr.mxu0 0.0
      %767 = vmatpush2.msra.mxu0 0.0
      %768 = vmatprep.subr.mxu0 0.0
      %769 = vmatpush2.msra.mxu0 0.0
      %770 = vmatprep.subr.mxu0 0.0
      %771 = vmatpush2.msra.mxu0 0.0
      %772 = vmatprep.subr.mxu0 0.0
      %773 = vmatpush2.msra.mxu0 0.0
      %774 = vmatprep.subr.mxu0 0.0
      %775 = vmatpush2.msra.mxu0 0.0
      %776 = vmatprep.subr.mxu0 0.0
      %777 = vmatpush2.msra.mxu0 0.0
      %778 = vmatprep.subr.mxu0 0.0
      %779 = vmatpush2.msra.mxu0 0.0
      %780 = vmatprep.subr.mxu0 0.0
      %781 = vmatpush2.msra.mxu0 0.0
      %782 = vmatprep.subr.mxu0 0.0
      %783 = vmatpush2.msra.mxu0 0.0
      %784 = vmatprep.subr.mxu0 0.0
      %785 = vmatpush2.msra.mxu0 0.0
      %786 = vmatprep.mubr.f32.mxu0 0.0
      %787 = vmatmul.mubr.f32.gmra.mxu0 %v298
      %v788 = vpop.f32.mrf.mxu0
      %v789 = vadd.f32 0.0, %v788
      %v790 = vpop.f32.mrf.mxu0
      %791 = vdwg.mxu0
      %792 = vset.pattern.permute.xlu0 4
      %793 = vperm.xlu0 %792, %v244
      %v794 = vpop.permute.xlu0 %793
      %v796 = vmul.f32 %v789, %v794
      %v797 = vadd.f32 %v694, %v796
      %vm798 = vmand %vm590, %vm483
      %vm799 = vmand %vm798, %vm485
      %v800 = vadd.s32 %v593, %v482
      %vm801 = vcmp.eq.s32.totalorder %v247, %v800
      %vm802 = vcmp.eq.s32.totalorder %v248, %v800
      %vm803 = vcmp.eq.s32.totalorder %v249, %v800
      %vm804 = vcmp.eq.s32.totalorder %v250, %v800
      %vm805 = vcmp.eq.s32.totalorder %v251, %v800
      %vm806 = vcmp.eq.s32.totalorder %v252, %v800
      %vm807 = vcmp.eq.s32.totalorder %v253, %v800
      %vm808 = vcmp.eq.s32.totalorder %v254, %v800
      %vm809 = vmand %vm799, %vm801
      %vm810 = vmand %vm799, %vm802
      %vm811 = vmand %vm799, %vm803
      %vm812 = vmand %vm799, %vm804
      %vm813 = vmand %vm799, %vm805
      %vm814 = vmand %vm799, %vm806
      %vm815 = vmand %vm799, %vm807
      %vm816 = vmand %vm799, %vm808
      %v817 = vsel %vm809, 1.0, 0.0
      %v818 = vsel %vm810, 1.0, 0.0
      %v819 = vsel %vm811, 1.0, 0.0
      %v820 = vsel %vm812, 1.0, 0.0
      %v821 = vsel %vm813, 1.0, 0.0
      %v822 = vsel %vm814, 1.0, 0.0
      %v823 = vsel %vm815, 1.0, 0.0
      %v824 = vsel %vm816, 1.0, 0.0
      %825 = vmatprep.subr.mxu0 0.0
      %826 = vmatpush1.msra.mxu0 0.0
      %827 = vmatprep.subr.mxu0 0.0
      %828 = vmatpush1.msra.mxu0 0.0
      %829 = vmatprep.subr.mxu0 0.0
      %830 = vmatpush1.msra.mxu0 0.0
      %831 = vmatprep.subr.mxu0 0.0
      %832 = vmatpush1.msra.mxu0 0.0
      %833 = vmatprep.subr.mxu0 0.0
      %834 = vmatpush1.msra.mxu0 0.0
      %835 = vmatprep.subr.mxu0 0.0
      %836 = vmatpush1.msra.mxu0 0.0
      %837 = vmatprep.subr.mxu0 0.0
      %838 = vmatpush1.msra.mxu0 0.0
      %839 = vmatprep.subr.mxu0 0.0
      %840 = vmatpush1.msra.mxu0 0.0
      %841 = vmatprep.subr.mxu0 0.0
      %842 = vmatpush1.msra.mxu0 %v824
      %843 = vmatprep.subr.mxu0 0.0
      %844 = vmatpush1.msra.mxu0 %v823
      %845 = vmatprep.subr.mxu0 0.0
      %846 = vmatpush1.msra.mxu0 %v822
      %847 = vmatprep.subr.mxu0 0.0
      %848 = vmatpush1.msra.mxu0 %v821
      %849 = vmatprep.subr.mxu0 0.0
      %850 = vmatpush1.msra.mxu0 %v820
      %851 = vmatprep.subr.mxu0 0.0
      %852 = vmatpush1.msra.mxu0 %v819
      %853 = vmatprep.subr.mxu0 0.0
      %854 = vmatpush1.msra.mxu0 %v818
      %855 = vmatprep.subr.mxu0 0.0
      %856 = vmatpush1.msra.mxu0 %v817
      %857 = vmatprep.subr.mxu0 0.0
      %858 = vmatpush2.msra.mxu0 0.0
      %859 = vmatprep.subr.mxu0 0.0
      %860 = vmatpush2.msra.mxu0 0.0
      %861 = vmatprep.subr.mxu0 0.0
      %862 = vmatpush2.msra.mxu0 0.0
      %863 = vmatprep.subr.mxu0 0.0
      %864 = vmatpush2.msra.mxu0 0.0
      %865 = vmatprep.subr.mxu0 0.0
      %866 = vmatpush2.msra.mxu0 0.0
      %867 = vmatprep.subr.mxu0 0.0
      %868 = vmatpush2.msra.mxu0 0.0
      %869 = vmatprep.subr.mxu0 0.0
      %870 = vmatpush2.msra.mxu0 0.0
      %871 = vmatprep.subr.mxu0 0.0
      %872 = vmatpush2.msra.mxu0 0.0
      %873 = vmatprep.subr.mxu0 0.0
      %874 = vmatpush2.msra.mxu0 0.0
      %875 = vmatprep.subr.mxu0 0.0
      %876 = vmatpush2.msra.mxu0 0.0
      %877 = vmatprep.subr.mxu0 0.0
      %878 = vmatpush2.msra.mxu0 0.0
      %879 = vmatprep.subr.mxu0 0.0
      %880 = vmatpush2.msra.mxu0 0.0
      %881 = vmatprep.subr.mxu0 0.0
      %882 = vmatpush2.msra.mxu0 0.0
      %883 = vmatprep.subr.mxu0 0.0
      %884 = vmatpush2.msra.mxu0 0.0
      %885 = vmatprep.subr.mxu0 0.0
      %886 = vmatpush2.msra.mxu0 0.0
      %887 = vmatprep.subr.mxu0 0.0
      %888 = vmatpush2.msra.mxu0 0.0
      %889 = vmatprep.mubr.f32.mxu0 0.0
      %890 = vmatmul.mubr.f32.gmra.mxu0 %v298
      %v891 = vpop.f32.mrf.mxu0
      %v892 = vadd.f32 0.0, %v891
      %v893 = vpop.f32.mrf.mxu0
      %894 = vdwg.mxu0
      %895 = vset.pattern.permute.xlu0 5
      %896 = vperm.xlu0 %895, %v244
      %v897 = vpop.permute.xlu0 %896
      %v899 = vmul.f32 %v892, %v897
      %v900 = vadd.f32 %v797, %v899
      %v901 = vadd.s32 %v259, 1
      %vm902 = vcmp.ge.s32.totalorder %v901, 0
      %vm903 = vcmp.lt.s32.totalorder %v901, 8
      %vm904 = vmand %vm902, %vm903
      %vm905 = vmand %vm904, %vm266
      %vm906 = vmand %vm905, %vm268
      %v907 = vmul.u32 %v901, 8
      %v908 = vadd.s32 %v907, %v262
      %vm909 = vcmp.eq.s32.totalorder %v247, %v908
      %vm910 = vcmp.eq.s32.totalorder %v248, %v908
      %vm911 = vcmp.eq.s32.totalorder %v249, %v908
      %vm912 = vcmp.eq.s32.totalorder %v250, %v908
      %vm913 = vcmp.eq.s32.totalorder %v251, %v908
      %vm914 = vcmp.eq.s32.totalorder %v252, %v908
      %vm915 = vcmp.eq.s32.totalorder %v253, %v908
      %vm916 = vcmp.eq.s32.totalorder %v254, %v908
      %vm917 = vmand %vm906, %vm909
      %vm918 = vmand %vm906, %vm910
      %vm919 = vmand %vm906, %vm911
      %vm920 = vmand %vm906, %vm912
      %vm921 = vmand %vm906, %vm913
      %vm922 = vmand %vm906, %vm914
      %vm923 = vmand %vm906, %vm915
      %vm924 = vmand %vm906, %vm916
      %v925 = vsel %vm917, 1.0, 0.0
      %v926 = vsel %vm918, 1.0, 0.0
      %v927 = vsel %vm919, 1.0, 0.0
      %v928 = vsel %vm920, 1.0, 0.0
      %v929 = vsel %vm921, 1.0, 0.0
      %v930 = vsel %vm922, 1.0, 0.0
      %v931 = vsel %vm923, 1.0, 0.0
      %v932 = vsel %vm924, 1.0, 0.0
      %933 = vmatprep.subr.mxu0 0.0
      %934 = vmatpush1.msra.mxu0 0.0
      %935 = vmatprep.subr.mxu0 0.0
      %936 = vmatpush1.msra.mxu0 0.0
      %937 = vmatprep.subr.mxu0 0.0
      %938 = vmatpush1.msra.mxu0 0.0
      %939 = vmatprep.subr.mxu0 0.0
      %940 = vmatpush1.msra.mxu0 0.0
      %941 = vmatprep.subr.mxu0 0.0
      %942 = vmatpush1.msra.mxu0 0.0
      %943 = vmatprep.subr.mxu0 0.0
      %944 = vmatpush1.msra.mxu0 0.0
      %945 = vmatprep.subr.mxu0 0.0
      %946 = vmatpush1.msra.mxu0 0.0
      %947 = vmatprep.subr.mxu0 0.0
      %948 = vmatpush1.msra.mxu0 0.0
      %949 = vmatprep.subr.mxu0 0.0
      %950 = vmatpush1.msra.mxu0 %v932
      %951 = vmatprep.subr.mxu0 0.0
      %952 = vmatpush1.msra.mxu0 %v931
      %953 = vmatprep.subr.mxu0 0.0
      %954 = vmatpush1.msra.mxu0 %v930
      %955 = vmatprep.subr.mxu0 0.0
      %956 = vmatpush1.msra.mxu0 %v929
      %957 = vmatprep.subr.mxu0 0.0
      %958 = vmatpush1.msra.mxu0 %v928
      %959 = vmatprep.subr.mxu0 0.0
      %960 = vmatpush1.msra.mxu0 %v927
      %961 = vmatprep.subr.mxu0 0.0
      %962 = vmatpush1.msra.mxu0 %v926
      %963 = vmatprep.subr.mxu0 0.0
      %964 = vmatpush1.msra.mxu0 %v925
      %965 = vmatprep.subr.mxu0 0.0
      %966 = vmatpush2.msra.mxu0 0.0
      %967 = vmatprep.subr.mxu0 0.0
      %968 = vmatpush2.msra.mxu0 0.0
      %969 = vmatprep.subr.mxu0 0.0
      %970 = vmatpush2.msra.mxu0 0.0
      %971 = vmatprep.subr.mxu0 0.0
      %972 = vmatpush2.msra.mxu0 0.0
      %973 = vmatprep.subr.mxu0 0.0
      %974 = vmatpush2.msra.mxu0 0.0
      %975 = vmatprep.subr.mxu0 0.0
      %976 = vmatpush2.msra.mxu0 0.0
      %977 = vmatprep.subr.mxu0 0.0
      %978 = vmatpush2.msra.mxu0 0.0
      %979 = vmatprep.subr.mxu0 0.0
      %980 = vmatpush2.msra.mxu0 0.0
      %981 = vmatprep.subr.mxu0 0.0
      %982 = vmatpush2.msra.mxu0 0.0
      %983 = vmatprep.subr.mxu0 0.0
      %984 = vmatpush2.msra.mxu0 0.0
      %985 = vmatprep.subr.mxu0 0.0
      %986 = vmatpush2.msra.mxu0 0.0
      %987 = vmatprep.subr.mxu0 0.0
      %988 = vmatpush2.msra.mxu0 0.0
      %989 = vmatprep.subr.mxu0 0.0
      %990 = vmatpush2.msra.mxu0 0.0
      %991 = vmatprep.subr.mxu0 0.0
      %992 = vmatpush2.msra.mxu0 0.0
      %993 = vmatprep.subr.mxu0 0.0
      %994 = vmatpush2.msra.mxu0 0.0
      %995 = vmatprep.subr.mxu0 0.0
      %996 = vmatpush2.msra.mxu0 0.0
      %997 = vmatprep.mubr.f32.mxu0 0.0
      %998 = vmatmul.mubr.f32.gmra.mxu0 %v298
      %v999 = vpop.f32.mrf.mxu0
      %v1000 = vadd.f32 0.0, %v999
      %v1001 = vpop.f32.mrf.mxu0
      %1002 = vdwg.mxu0
      %1003 = vset.pattern.permute.xlu0 6
      %1004 = vperm.xlu0 %1003, %v244
      %v1005 = vpop.permute.xlu0 %1004
      %v1007 = vmul.f32 %v1000, %v1005
      %v1008 = vadd.f32 %v900, %v1007
      %vm1009 = vmand %vm904, %vm377
      %vm1010 = vmand %vm1009, %vm379
      %v1011 = vadd.s32 %v907, %v261
      %vm1012 = vcmp.eq.s32.totalorder %v247, %v1011
      %vm1013 = vcmp.eq.s32.totalorder %v248, %v1011
      %vm1014 = vcmp.eq.s32.totalorder %v249, %v1011
      %vm1015 = vcmp.eq.s32.totalorder %v250, %v1011
      %vm1016 = vcmp.eq.s32.totalorder %v251, %v1011
      %vm1017 = vcmp.eq.s32.totalorder %v252, %v1011
      %vm1018 = vcmp.eq.s32.totalorder %v253, %v1011
      %vm1019 = vcmp.eq.s32.totalorder %v254, %v1011
      %vm1020 = vmand %vm1010, %vm1012
      %vm1021 = vmand %vm1010, %vm1013
      %vm1022 = vmand %vm1010, %vm1014
      %vm1023 = vmand %vm1010, %vm1015
      %vm1024 = vmand %vm1010, %vm1016
      %vm1025 = vmand %vm1010, %vm1017
      %vm1026 = vmand %vm1010, %vm1018
      %vm1027 = vmand %vm1010, %vm1019
      %v1028 = vsel %vm1020, 1.0, 0.0
      %v1029 = vsel %vm1021, 1.0, 0.0
      %v1030 = vsel %vm1022, 1.0, 0.0
      %v1031 = vsel %vm1023, 1.0, 0.0
      %v1032 = vsel %vm1024, 1.0, 0.0
      %v1033 = vsel %vm1025, 1.0, 0.0
      %v1034 = vsel %vm1026, 1.0, 0.0
      %v1035 = vsel %vm1027, 1.0, 0.0
      %1036 = vmatprep.subr.mxu0 0.0
      %1037 = vmatpush1.msra.mxu0 0.0
      %1038 = vmatprep.subr.mxu0 0.0
      %1039 = vmatpush1.msra.mxu0 0.0
      %1040 = vmatprep.subr.mxu0 0.0
      %1041 = vmatpush1.msra.mxu0 0.0
      %1042 = vmatprep.subr.mxu0 0.0
      %1043 = vmatpush1.msra.mxu0 0.0
      %1044 = vmatprep.subr.mxu0 0.0
      %1045 = vmatpush1.msra.mxu0 0.0
      %1046 = vmatprep.subr.mxu0 0.0
      %1047 = vmatpush1.msra.mxu0 0.0
      %1048 = vmatprep.subr.mxu0 0.0
      %1049 = vmatpush1.msra.mxu0 0.0
      %1050 = vmatprep.subr.mxu0 0.0
      %1051 = vmatpush1.msra.mxu0 0.0
      %1052 = vmatprep.subr.mxu0 0.0
      %1053 = vmatpush1.msra.mxu0 %v1035
      %1054 = vmatprep.subr.mxu0 0.0
      %1055 = vmatpush1.msra.mxu0 %v1034
      %1056 = vmatprep.subr.mxu0 0.0
      %1057 = vmatpush1.msra.mxu0 %v1033
      %1058 = vmatprep.subr.mxu0 0.0
      %1059 = vmatpush1.msra.mxu0 %v1032
      %1060 = vmatprep.subr.mxu0 0.0
      %1061 = vmatpush1.msra.mxu0 %v1031
      %1062 = vmatprep.subr.mxu0 0.0
      %1063 = vmatpush1.msra.mxu0 %v1030
      %1064 = vmatprep.subr.mxu0 0.0
      %1065 = vmatpush1.msra.mxu0 %v1029
      %1066 = vmatprep.subr.mxu0 0.0
      %1067 = vmatpush1.msra.mxu0 %v1028
      %1068 = vmatprep.subr.mxu0 0.0
      %1069 = vmatpush2.msra.mxu0 0.0
      %1070 = vmatprep.subr.mxu0 0.0
      %1071 = vmatpush2.msra.mxu0 0.0
      %1072 = vmatprep.subr.mxu0 0.0
      %1073 = vmatpush2.msra.mxu0 0.0
      %1074 = vmatprep.subr.mxu0 0.0
      %1075 = vmatpush2.msra.mxu0 0.0
      %1076 = vmatprep.subr.mxu0 0.0
      %1077 = vmatpush2.msra.mxu0 0.0
      %1078 = vmatprep.subr.mxu0 0.0
      %1079 = vmatpush2.msra.mxu0 0.0
      %1080 = vmatprep.subr.mxu0 0.0
      %1081 = vmatpush2.msra.mxu0 0.0
      %1082 = vmatprep.subr.mxu0 0.0
      %1083 = vmatpush2.msra.mxu0 0.0
      %1084 = vmatprep.subr.mxu0 0.0
      %1085 = vmatpush2.msra.mxu0 0.0
      %1086 = vmatprep.subr.mxu0 0.0
      %1087 = vmatpush2.msra.mxu0 0.0
      %1088 = vmatprep.subr.mxu0 0.0
      %1089 = vmatpush2.msra.mxu0 0.0
      %1090 = vmatprep.subr.mxu0 0.0
      %1091 = vmatpush2.msra.mxu0 0.0
      %1092 = vmatprep.subr.mxu0 0.0
      %1093 = vmatpush2.msra.mxu0 0.0
      %1094 = vmatprep.subr.mxu0 0.0
      %1095 = vmatpush2.msra.mxu0 0.0
      %1096 = vmatprep.subr.mxu0 0.0
      %1097 = vmatpush2.msra.mxu0 0.0
      %1098 = vmatprep.subr.mxu0 0.0
      %1099 = vmatpush2.msra.mxu0 0.0
      %1100 = vmatprep.mubr.f32.mxu0 0.0
      %1101 = vmatmul.mubr.f32.gmra.mxu0 %v298
      %v1102 = vpop.f32.mrf.mxu0
      %v1103 = vadd.f32 0.0, %v1102
      %v1104 = vpop.f32.mrf.mxu0
      %1105 = vdwg.mxu0
      %1106 = vset.pattern.permute.xlu0 7
      %1107 = vperm.xlu0 %1106, %v244
      %v1108 = vpop.permute.xlu0 %1107
      %v1110 = vmul.f32 %v1103, %v1108
      %v1111 = vadd.f32 %v1008, %v1110
      %vm1112 = vmand %vm904, %vm483
      %vm1113 = vmand %vm1112, %vm485
      %v1114 = vadd.s32 %v907, %v482
      %vm1115 = vcmp.eq.s32.totalorder %v247, %v1114
      %vm1116 = vcmp.eq.s32.totalorder %v248, %v1114
      %vm1117 = vcmp.eq.s32.totalorder %v249, %v1114
      %vm1118 = vcmp.eq.s32.totalorder %v250, %v1114
      %vm1119 = vcmp.eq.s32.totalorder %v251, %v1114
      %vm1120 = vcmp.eq.s32.totalorder %v252, %v1114
      %vm1121 = vcmp.eq.s32.totalorder %v253, %v1114
      %vm1122 = vcmp.eq.s32.totalorder %v254, %v1114
      %vm1123 = vmand %vm1113, %vm1115
      %vm1124 = vmand %vm1113, %vm1116
      %vm1125 = vmand %vm1113, %vm1117
      %vm1126 = vmand %vm1113, %vm1118
      %vm1127 = vmand %vm1113, %vm1119
      %vm1128 = vmand %vm1113, %vm1120
      %vm1129 = vmand %vm1113, %vm1121
      %vm1130 = vmand %vm1113, %vm1122
      %v1131 = vsel %vm1123, 1.0, 0.0
      %v1132 = vsel %vm1124, 1.0, 0.0
      %v1133 = vsel %vm1125, 1.0, 0.0
      %v1134 = vsel %vm1126, 1.0, 0.0
      %v1135 = vsel %vm1127, 1.0, 0.0
      %v1136 = vsel %vm1128, 1.0, 0.0
      %v1137 = vsel %vm1129, 1.0, 0.0
      %v1138 = vsel %vm1130, 1.0, 0.0
      %1139 = vmatprep.subr.mxu0 0.0
      %1140 = vmatpush1.msra.mxu0 0.0
      %1141 = vmatprep.subr.mxu0 0.0
      %1142 = vmatpush1.msra.mxu0 0.0
      %1143 = vmatprep.subr.mxu0 0.0
      %1144 = vmatpush1.msra.mxu0 0.0
      %1145 = vmatprep.subr.mxu0 0.0
      %1146 = vmatpush1.msra.mxu0 0.0
      %1147 = vmatprep.subr.mxu0 0.0
      %1148 = vmatpush1.msra.mxu0 0.0
      %1149 = vmatprep.subr.mxu0 0.0
      %1150 = vmatpush1.msra.mxu0 0.0
      %1151 = vmatprep.subr.mxu0 0.0
      %1152 = vmatpush1.msra.mxu0 0.0
      %1153 = vmatprep.subr.mxu0 0.0
      %1154 = vmatpush1.msra.mxu0 0.0
      %1155 = vmatprep.subr.mxu0 0.0
      %1156 = vmatpush1.msra.mxu0 %v1138
      %1157 = vmatprep.subr.mxu0 0.0
      %1158 = vmatpush1.msra.mxu0 %v1137
      %1159 = vmatprep.subr.mxu0 0.0
      %1160 = vmatpush1.msra.mxu0 %v1136
      %1161 = vmatprep.subr.mxu0 0.0
      %1162 = vmatpush1.msra.mxu0 %v1135
      %1163 = vmatprep.subr.mxu0 0.0
      %1164 = vmatpush1.msra.mxu0 %v1134
      %1165 = vmatprep.subr.mxu0 0.0
      %1166 = vmatpush1.msra.mxu0 %v1133
      %1167 = vmatprep.subr.mxu0 0.0
      %1168 = vmatpush1.msra.mxu0 %v1132
      %1169 = vmatprep.subr.mxu0 0.0
      %1170 = vmatpush1.msra.mxu0 %v1131
      %1171 = vmatprep.subr.mxu0 0.0
      %1172 = vmatpush2.msra.mxu0 0.0
      %1173 = vmatprep.subr.mxu0 0.0
      %1174 = vmatpush2.msra.mxu0 0.0
      %1175 = vmatprep.subr.mxu0 0.0
      %1176 = vmatpush2.msra.mxu0 0.0
      %1177 = vmatprep.subr.mxu0 0.0
      %1178 = vmatpush2.msra.mxu0 0.0
      %1179 = vmatprep.subr.mxu0 0.0
      %1180 = vmatpush2.msra.mxu0 0.0
      %1181 = vmatprep.subr.mxu0 0.0
      %1182 = vmatpush2.msra.mxu0 0.0
      %1183 = vmatprep.subr.mxu0 0.0
      %1184 = vmatpush2.msra.mxu0 0.0
      %1185 = vmatprep.subr.mxu0 0.0
      %1186 = vmatpush2.msra.mxu0 0.0
      %1187 = vmatprep.subr.mxu0 0.0
      %1188 = vmatpush2.msra.mxu0 0.0
      %1189 = vmatprep.subr.mxu0 0.0
      %1190 = vmatpush2.msra.mxu0 0.0
      %1191 = vmatprep.subr.mxu0 0.0
      %1192 = vmatpush2.msra.mxu0 0.0
      %1193 = vmatprep.subr.mxu0 0.0
      %1194 = vmatpush2.msra.mxu0 0.0
      %1195 = vmatprep.subr.mxu0 0.0
      %1196 = vmatpush2.msra.mxu0 0.0
      %1197 = vmatprep.subr.mxu0 0.0
      %1198 = vmatpush2.msra.mxu0 0.0
      %1199 = vmatprep.subr.mxu0 0.0
      %1200 = vmatpush2.msra.mxu0 0.0
      %1201 = vmatprep.subr.mxu0 0.0
      %1202 = vmatpush2.msra.mxu0 0.0
      %1203 = vmatprep.mubr.f32.mxu0 0.0
      %1204 = vmatmul.mubr.f32.gmra.mxu0 %v298
      %v1205 = vpop.f32.mrf.mxu0
      %v1206 = vadd.f32 0.0, %v1205
      %v1207 = vpop.f32.mrf.mxu0
      %1208 = vdwg.mxu0
      %1209 = vset.pattern.permute.xlu0 8
      %1210 = vperm.xlu0 %1209, %v244
      %v1211 = vpop.permute.xlu0 %1210
      %v1213 = vmul.f32 %v1206, %v1211
      %v1214 = vadd.f32 %v1111, %v1213
      %1216 = vset.pattern.permute.xlu0 0
      %1217 = vperm.xlu0 %1216, %v245
      %v1218 = vpop.permute.xlu0 %1217
      %v1220 = vadd.f32 %v1214, %v1218
      %v1221 = vmax.f32 %v1220, 0.0
      %v1222 = vld [vmem:[%s1 + $0x4] sm:$0xf]
      %v1223 = vld [vmem:[%s1 + $0x8] sm:$0xf]
      %v1224 = vpack.c.bf16 %v1221, %v1221
      %v1225 = vld [vmem:[%s2 + $0x18] sm:$0xff]
      %v1226 = vld [vmem:[%s2 + $0x20] sm:$0xff]
      %1228 = vset.pattern.permute.xlu0 0
      %1229 = vperm.xlu0 %1228, %v1225
      %v1230 = vpop.permute.xlu0 %1229
      %1233 = vset.pattern.permute.xlu0 0
      %1234 = vperm.xlu0 %1233, %v1226
      %v1235 = vpop.permute.xlu0 %1234
      %v1239 = vunpack.c.l.b16 %v1222
      %v1240 = vunpack.c.l.b16 %v1223
      %v1241 = vpack.c.b16 %v1240, %v1239
      %vm1242 = vcmask 64512
      %v1244 = vsel %vm1242, %v1241, 0
      %vm1246 = vcmask 1043456
      %v1248 = vsel %vm1246, %v1224, 0
      %1250 = vmatprep.subr.bf16.mxu0 0
      %1251 = vmatpush1.bf16.msra.mxu0 0
      %1252 = vmatprep.subr.bf16.mxu0 0
      %1253 = vmatpush1.bf16.msra.mxu0 0
      %1254 = vmatprep.subr.bf16.mxu0 0
      %1255 = vmatpush1.bf16.msra.mxu0 0
      %1256 = vmatprep.subr.bf16.mxu0 0
      %1257 = vmatpush1.bf16.msra.mxu0 0
      %1258 = vmatprep.subr.bf16.mxu0 0
      %1259 = vmatpush1.bf16.msra.mxu0 0
      %1260 = vmatprep.subr.bf16.mxu0 0
      %1261 = vmatpush1.bf16.msra.mxu0 0
      %1262 = vmatprep.subr.bf16.mxu0 0
      %1263 = vmatpush1.bf16.msra.mxu0 0
      %1264 = vmatprep.subr.bf16.mxu0 0
      %1265 = vmatpush1.bf16.msra.mxu0 %v1248
      %1266 = vmatprep.subr.bf16.mxu0 0
      %1267 = vmatpush2.bf16.msra.mxu0 0
      %1268 = vmatprep.subr.bf16.mxu0 0
      %1269 = vmatpush2.bf16.msra.mxu0 0
      %1270 = vmatprep.subr.bf16.mxu0 0
      %1271 = vmatpush2.bf16.msra.mxu0 0
      %1272 = vmatprep.subr.bf16.mxu0 0
      %1273 = vmatpush2.bf16.msra.mxu0 0
      %1274 = vmatprep.subr.bf16.mxu0 0
      %1275 = vmatpush2.bf16.msra.mxu0 0
      %1276 = vmatprep.subr.bf16.mxu0 0
      %1277 = vmatpush2.bf16.msra.mxu0 0
      %1278 = vmatprep.subr.bf16.mxu0 0
      %1279 = vmatpush2.bf16.msra.mxu0 0
      %1280 = vmatprep.subr.bf16.mxu0 0
      %1281 = vmatpush2.bf16.msra.mxu0 0
      %1282 = vmatprep.mubr.bf16.mxu0 0
      %1283 = vmatmul.mubr.bf16.gmra.mxu0 %v1244
      %v1284 = vpop.f32.mrf.mxu0
      %v1285 = vadd.f32 %v1230, %v1284
      %v1286 = vpop.f32.mrf.mxu0
      %v1287 = vpop.f32.mrf.mxu0
      %v1288 = vadd.f32 %v1235, %v1287
      %v1289 = vpop.f32.mrf.mxu0
      %1290 = vdwg.mxu0
      %v1291 = vmax.f32 %v1285, 0.0
      %v1292 = vmax.f32 %v1288, 0.0
      %v1293 = vld [vmem:[%s1 + $0xc] sm:$0xf]
      %v1294 = vld [vmem:[%s1 + $0x10] sm:$0xf]
      %v1295 = vld [vmem:[%s1 + $0x14] sm:$0xf]
      %v1296 = vld [vmem:[%s1 + $0x18] sm:$0xf]
      %v1297 = vpack.c.bf16 %v1292, %v1291
      %v1298 = vld [vmem:[%s2 + $0x28] sm:$0xff]
      %v1299 = vld [vmem:[%s2 + $0x30] sm:$0xff]
      %v1300 = vld [vmem:[%s2 + $0x38] sm:$0xff]
      %v1301 = vld [vmem:[%s2 + $0x40] sm:$0xff]
      %1303 = vset.pattern.permute.xlu0 0
      %1304 = vperm.xlu0 %1303, %v1298
      %v1305 = vpop.permute.xlu0 %1304
      %1308 = vset.pattern.permute.xlu0 0
      %1309 = vperm.xlu0 %1308, %v1299
      %v1310 = vpop.permute.xlu0 %1309
      %1313 = vset.pattern.permute.xlu0 0
      %1314 = vperm.xlu0 %1313, %v1300
      %v1315 = vpop.permute.xlu0 %1314
      %1318 = vset.pattern.permute.xlu0 0
      %1319 = vperm.xlu0 %1318, %v1301
      %v1320 = vpop.permute.xlu0 %1319
      %v1326 = vunpack.c.l.b16 %v1293
      %v1327 = vunpack.c.l.b16 %v1294
      %v1328 = vunpack.c.l.b16 %v1295
      %v1329 = vunpack.c.l.b16 %v1296
      %v1330 = vpack.c.b16 %v1327, %v1326
      %v1331 = vpack.c.b16 %v1329, %v1328
      %vm1332 = vcmask 130048
      %v1334 = vsel %vm1332, %v1330, 0
      %v1337 = vsel %vm1332, %v1331, 0
      %1339 = vmatprep.subr.bf16.mxu0 0
      %1340 = vmatpush1.bf16.msra.mxu0 0
      %1341 = vmatprep.subr.bf16.mxu0 0
      %1342 = vmatpush1.bf16.msra.mxu0 0
      %1343 = vmatprep.subr.bf16.mxu0 0
      %1344 = vmatpush1.bf16.msra.mxu0 0
      %1345 = vmatprep.subr.bf16.mxu0 0
      %1346 = vmatpush1.bf16.msra.mxu0 0
      %1347 = vmatprep.subr.bf16.mxu0 0
      %1348 = vmatpush1.bf16.msra.mxu0 0
      %1349 = vmatprep.subr.bf16.mxu0 0
      %1350 = vmatpush1.bf16.msra.mxu0 0
      %1351 = vmatprep.subr.bf16.mxu0 0
      %1352 = vmatpush1.bf16.msra.mxu0 0
      %1353 = vmatprep.subr.bf16.mxu0 0
      %1354 = vmatpush1.bf16.msra.mxu0 %v1297
      %1355 = vmatprep.subr.bf16.mxu0 0
      %1356 = vmatpush2.bf16.msra.mxu0 0
      %1357 = vmatprep.subr.bf16.mxu0 0
      %1358 = vmatpush2.bf16.msra.mxu0 0
      %1359 = vmatprep.subr.bf16.mxu0 0
      %1360 = vmatpush2.bf16.msra.mxu0 0
      %1361 = vmatprep.subr.bf16.mxu0 0
      %1362 = vmatpush2.bf16.msra.mxu0 0
      %1363 = vmatprep.subr.bf16.mxu0 0
      %1364 = vmatpush2.bf16.msra.mxu0 0
      %1365 = vmatprep.subr.bf16.mxu0 0
      %1366 = vmatpush2.bf16.msra.mxu0 0
      %1367 = vmatprep.subr.bf16.mxu0 0
      %1368 = vmatpush2.bf16.msra.mxu0 0
      %1369 = vmatprep.subr.bf16.mxu0 0
      %1370 = vmatpush2.bf16.msra.mxu0 0
      %1371 = vmatprep.mubr.bf16.mxu0 0
      %1372 = vmatmul.mubr.bf16.gmra.mxu0 %v1334
      %v1373 = vpop.f32.mrf.mxu0
      %v1374 = vadd.f32 %v1305, %v1373
      %v1375 = vpop.f32.mrf.mxu0
      %v1376 = vpop.f32.mrf.mxu0
      %v1377 = vadd.f32 %v1310, %v1376
      %v1378 = vpop.f32.mrf.mxu0
      %1379 = vmatprep.mubr.bf16.mxu0 0
      %1380 = vmatmul.mubr.bf16.gmra.mxu0 %v1337
      %v1381 = vpop.f32.mrf.mxu0
      %v1382 = vadd.f32 %v1315, %v1381
      %v1383 = vpop.f32.mrf.mxu0
      %v1384 = vpop.f32.mrf.mxu0
      %v1385 = vadd.f32 %v1320, %v1384
      %v1386 = vpop.f32.mrf.mxu0
      %1387 = vdwg.mxu0
      %v1388 = vmax.f32 %v1374, 0.0
      %v1389 = vmax.f32 %v1377, 0.0
      %v1390 = vmax.f32 %v1382, 0.0
      %v1391 = vmax.f32 %v1385, 0.0
      %v1392 = vld [vmem:[%s2 + $0x48] sm:$0xff]
      %v1393 = vld [vmem:[%s2 + $0x50] sm:$0xff]
      %v1394 = vld [vmem:[%s2 + $0x58] sm:$0xff]
      %v1395 = vld [vmem:[%s2 + $0x60] sm:$0xff]
      %v1396 = vld [vmem:[%s2 + $0x68] sm:$0xff]
      %v1397 = vld [vmem:[%s2 + $0x70] sm:$0xff]
      %v1398 = vld [vmem:[%s2 + $0x78] sm:$0xff]
      %v1399 = vld [vmem:[%s2 + $0x80] sm:$0xff]
      %v1400 = vadd.s32 %v257, 4294967295
      %v1401 = vadd.s32 %v258, 4294967295
      %vm1402 = vcmp.ge.s32.totalorder %v1400, 0
      %vm1403 = vcmp.lt.s32.totalorder %v1400, 4
      %vm1404 = vmand %vm1402, %vm1403
      %vm1405 = vcmp.ge.s32.totalorder %v1401, 0
      %vm1406 = vmand %vm1404, %vm1405
      %vm1407 = vcmp.lt.s32.totalorder %v1401, 4
      %vm1408 = vmand %vm1406, %vm1407
      %v1409 = vmul.u32 %v1400, 4
      %v1410 = vadd.s32 %v1409, %v1401
      %vm1411 = vcmp.eq.s32.totalorder %v247, %v1410
      %vm1412 = vcmp.eq.s32.totalorder %v248, %v1410
      %vm1413 = vmand %vm1408, %vm1411
      %vm1414 = vmand %vm1408, %vm1412
      %v1415 = vsel %vm1413, 1.0, 0.0
      %v1416 = vsel %vm1414, 1.0, 0.0
      %v1418 = vsel %vm1332, %v1388, 0
      %v1421 = vsel %vm1332, %v1389, 0
      %v1424 = vsel %vm1332, %v1390, 0
      %v1427 = vsel %vm1332, %v1391, 0
      %1429 = vmatprep.subr.mxu0 0.0
      %1430 = vmatpush1.msra.mxu0 0.0
      %1431 = vmatprep.subr.mxu0 0.0
      %1432 = vmatpush1.msra.mxu0 0.0
      %1433 = vmatprep.subr.mxu0 0.0
      %1434 = vmatpush1.msra.mxu0 0.0
      %1435 = vmatprep.subr.mxu0 0.0
      %1436 = vmatpush1.msra.mxu0 0.0
      %1437 = vmatprep.subr.mxu0 0.0
      %1438 = vmatpush1.msra.mxu0 0.0
      %1439 = vmatprep.subr.mxu0 0.0
      %1440 = vmatpush1.msra.mxu0 0.0
      %1441 = vmatprep.subr.mxu0 0.0
      %1442 = vmatpush1.msra.mxu0 0.0
      %1443 = vmatprep.subr.mxu0 0.0
      %1444 = vmatpush1.msra.mxu0 0.0
      %1445 = vmatprep.subr.mxu0 0.0
      %1446 = vmatpush1.msra.mxu0 0.0
      %1447 = vmatprep.subr.mxu0 0.0
      %1448 = vmatpush1.msra.mxu0 0.0
      %1449 = vmatprep.subr.mxu0 0.0
      %1450 = vmatpush1.msra.mxu0 0.0
      %1451 = vmatprep.subr.mxu0 0.0
      %1452 = vmatpush1.msra.mxu0 0.0
      %1453 = vmatprep.subr.mxu0 0.0
      %1454 = vmatpush1.msra.mxu0 0.0
      %1455 = vmatprep.subr.mxu0 0.0
      %1456 = vmatpush1.msra.mxu0 0.0
      %1457 = vmatprep.subr.mxu0 0.0
      %1458 = vmatpush1.msra.mxu0 %v1416
      %1459 = vmatprep.subr.mxu0 0.0
      %1460 = vmatpush1.msra.mxu0 %v1415
      %1461 = vmatprep.subr.mxu0 0.0
      %1462 = vmatpush2.msra.mxu0 0.0
      %1463 = vmatprep.subr.mxu0 0.0
      %1464 = vmatpush2.msra.mxu0 0.0
      %1465 = vmatprep.subr.mxu0 0.0
      %1466 = vmatpush2.msra.mxu0 0.0
      %1467 = vmatprep.subr.mxu0 0.0
      %1468 = vmatpush2.msra.mxu0 0.0
      %1469 = vmatprep.subr.mxu0 0.0
      %1470 = vmatpush2.msra.mxu0 0.0
      %1471 = vmatprep.subr.mxu0 0.0
      %1472 = vmatpush2.msra.mxu0 0.0
      %1473 = vmatprep.subr.mxu0 0.0
      %1474 = vmatpush2.msra.mxu0 0.0
      %1475 = vmatprep.subr.mxu0 0.0
      %1476 = vmatpush2.msra.mxu0 0.0
      %1477 = vmatprep.subr.mxu0 0.0
      %1478 = vmatpush2.msra.mxu0 0.0
      %1479 = vmatprep.subr.mxu0 0.0
      %1480 = vmatpush2.msra.mxu0 0.0
      %1481 = vmatprep.subr.mxu0 0.0
      %1482 = vmatpush2.msra.mxu0 0.0
      %1483 = vmatprep.subr.mxu0 0.0
      %1484 = vmatpush2.msra.mxu0 0.0
      %1485 = vmatprep.subr.mxu0 0.0
      %1486 = vmatpush2.msra.mxu0 0.0
      %1487 = vmatprep.subr.mxu0 0.0
      %1488 = vmatpush2.msra.mxu0 0.0
      %1489 = vmatprep.subr.mxu0 0.0
      %1490 = vmatpush2.msra.mxu0 0.0
      %1491 = vmatprep.subr.mxu0 0.0
      %1492 = vmatpush2.msra.mxu0 0.0
      %1493 = vmatprep.mubr.f32.mxu0 0.0
      %1494 = vmatmul.mubr.f32.gmra.mxu0 %v1418
      %v1495 = vpop.f32.mrf.mxu0
      %v1496 = vadd.f32 0.0, %v1495
      %v1497 = vpop.f32.mrf.mxu0
      %1498 = vmatprep.mubr.f32.mxu0 0.0
      %1499 = vmatmul.mubr.f32.gmra.mxu0 %v1421
      %v1500 = vpop.f32.mrf.mxu0
      %v1501 = vadd.f32 0.0, %v1500
      %v1502 = vpop.f32.mrf.mxu0
      %1503 = vmatprep.mubr.f32.mxu0 0.0
      %1504 = vmatmul.mubr.f32.gmra.mxu0 %v1424
      %v1505 = vpop.f32.mrf.mxu0
      %v1506 = vadd.f32 0.0, %v1505
      %v1507 = vpop.f32.mrf.mxu0
      %1508 = vmatprep.mubr.f32.mxu0 0.0
      %1509 = vmatmul.mubr.f32.gmra.mxu0 %v1427
      %v1510 = vpop.f32.mrf.mxu0
      %v1511 = vadd.f32 0.0, %v1510
      %v1512 = vpop.f32.mrf.mxu0
      %1513 = vdwg.mxu0
      %1515 = vset.pattern.permute.xlu0 0
      %1516 = vperm.xlu0 %1515, %v1392
      %v1517 = vpop.permute.xlu0 %1516
      %1520 = vset.pattern.permute.xlu0 0
      %1521 = vperm.xlu0 %1520, %v1393
      %v1522 = vpop.permute.xlu0 %1521
      %1525 = vset.pattern.permute.xlu0 0
      %1526 = vperm.xlu0 %1525, %v1394
      %v1527 = vpop.permute.xlu0 %1526
      %1530 = vset.pattern.permute.xlu0 0
      %1531 = vperm.xlu0 %1530, %v1395
      %v1532 = vpop.permute.xlu0 %1531
      %v1534 = vmul.f32 %v1496, %v1517
      %v1535 = vmul.f32 %v1501, %v1522
      %v1536 = vmul.f32 %v1506, %v1527
      %v1537 = vmul.f32 %v1511, %v1532
      %v1538 = vadd.f32 %v1534, 0.0
      %v1539 = vadd.f32 %v1535, 0.0
      %v1540 = vadd.f32 %v1536, 0.0
      %v1541 = vadd.f32 %v1537, 0.0
      %vm1542 = vcmp.ge.s32.totalorder %v258, 0
      %vm1543 = vmand %vm1404, %vm1542
      %vm1544 = vcmp.lt.s32.totalorder %v258, 4
      %vm1545 = vmand %vm1543, %vm1544
      %v1546 = vadd.s32 %v1409, %v258
      %vm1547 = vcmp.eq.s32.totalorder %v247, %v1546
      %vm1548 = vcmp.eq.s32.totalorder %v248, %v1546
      %vm1549 = vmand %vm1545, %vm1547
      %vm1550 = vmand %vm1545, %vm1548
      %v1551 = vsel %vm1549, 1.0, 0.0
      %v1552 = vsel %vm1550, 1.0, 0.0
      %1553 = vmatprep.subr.mxu0 0.0
      %1554 = vmatpush1.msra.mxu0 0.0
      %1555 = vmatprep.subr.mxu0 0.0
      %1556 = vmatpush1.msra.mxu0 0.0
      %1557 = vmatprep.subr.mxu0 0.0
      %1558 = vmatpush1.msra.mxu0 0.0
      %1559 = vmatprep.subr.mxu0 0.0
      %1560 = vmatpush1.msra.mxu0 0.0
      %1561 = vmatprep.subr.mxu0 0.0
      %1562 = vmatpush1.msra.mxu0 0.0
      %1563 = vmatprep.subr.mxu0 0.0
      %1564 = vmatpush1.msra.mxu0 0.0
      %1565 = vmatprep.subr.mxu0 0.0
      %1566 = vmatpush1.msra.mxu0 0.0
      %1567 = vmatprep.subr.mxu0 0.0
      %1568 = vmatpush1.msra.mxu0 0.0
      %1569 = vmatprep.subr.mxu0 0.0
      %1570 = vmatpush1.msra.mxu0 0.0
      %1571 = vmatprep.subr.mxu0 0.0
      %1572 = vmatpush1.msra.mxu0 0.0
      %1573 = vmatprep.subr.mxu0 0.0
      %1574 = vmatpush1.msra.mxu0 0.0
      %1575 = vmatprep.subr.mxu0 0.0
      %1576 = vmatpush1.msra.mxu0 0.0
      %1577 = vmatprep.subr.mxu0 0.0
      %1578 = vmatpush1.msra.mxu0 0.0
      %1579 = vmatprep.subr.mxu0 0.0
      %1580 = vmatpush1.msra.mxu0 0.0
      %1581 = vmatprep.subr.mxu0 0.0
      %1582 = vmatpush1.msra.mxu0 %v1552
      %1583 = vmatprep.subr.mxu0 0.0
      %1584 = vmatpush1.msra.mxu0 %v1551
      %1585 = vmatprep.subr.mxu0 0.0
      %1586 = vmatpush2.msra.mxu0 0.0
      %1587 = vmatprep.subr.mxu0 0.0
      %1588 = vmatpush2.msra.mxu0 0.0
      %1589 = vmatprep.subr.mxu0 0.0
      %1590 = vmatpush2.msra.mxu0 0.0
      %1591 = vmatprep.subr.mxu0 0.0
      %1592 = vmatpush2.msra.mxu0 0.0
      %1593 = vmatprep.subr.mxu0 0.0
      %1594 = vmatpush2.msra.mxu0 0.0
      %1595 = vmatprep.subr.mxu0 0.0
      %1596 = vmatpush2.msra.mxu0 0.0
      %1597 = vmatprep.subr.mxu0 0.0
      %1598 = vmatpush2.msra.mxu0 0.0
      %1599 = vmatprep.subr.mxu0 0.0
      %1600 = vmatpush2.msra.mxu0 0.0
      %1601 = vmatprep.subr.mxu0 0.0
      %1602 = vmatpush2.msra.mxu0 0.0
      %1603 = vmatprep.subr.mxu0 0.0
      %1604 = vmatpush2.msra.mxu0 0.0
      %1605 = vmatprep.subr.mxu0 0.0
      %1606 = vmatpush2.msra.mxu0 0.0
      %1607 = vmatprep.subr.mxu0 0.0
      %1608 = vmatpush2.msra.mxu0 0.0
      %1609 = vmatprep.subr.mxu0 0.0
      %1610 = vmatpush2.msra.mxu0 0.0
      %1611 = vmatprep.subr.mxu0 0.0
      %1612 = vmatpush2.msra.mxu0 0.0
      %1613 = vmatprep.subr.mxu0 0.0
      %1614 = vmatpush2.msra.mxu0 0.0
      %1615 = vmatprep.subr.mxu0 0.0
      %1616 = vmatpush2.msra.mxu0 0.0
      %1617 = vmatprep.mubr.f32.mxu0 0.0
      %1618 = vmatmul.mubr.f32.gmra.mxu0 %v1418
      %v1619 = vpop.f32.mrf.mxu0
      %v1620 = vadd.f32 0.0, %v1619
      %v1621 = vpop.f32.mrf.mxu0
      %1622 = vmatprep.mubr.f32.mxu0 0.0
      %1623 = vmatmul.mubr.f32.gmra.mxu0 %v1421
      %v1624 = vpop.f32.mrf.mxu0
      %v1625 = vadd.f32 0.0, %v1624
      %v1626 = vpop.f32.mrf.mxu0
      %1627 = vmatprep.mubr.f32.mxu0 0.0
      %1628 = vmatmul.mubr.f32.gmra.mxu0 %v1424
      %v1629 = vpop.f32.mrf.mxu0
      %v1630 = vadd.f32 0.0, %v1629
      %v1631 = vpop.f32.mrf.mxu0
      %1632 = vmatprep.mubr.f32.mxu0 0.0
      %1633 = vmatmul.mubr.f32.gmra.mxu0 %v1427
      %v1634 = vpop.f32.mrf.mxu0
      %v1635 = vadd.f32 0.0, %v1634
      %v1636 = vpop.f32.mrf.mxu0
      %1637 = vdwg.mxu0
      %1638 = vset.pattern.permute.xlu0 1
      %1639 = vperm.xlu0 %1638, %v1392
      %v1640 = vpop.permute.xlu0 %1639
      %1642 = vset.pattern.permute.xlu0 1
      %1643 = vperm.xlu0 %1642, %v1393
      %v1644 = vpop.permute.xlu0 %1643
      %1646 = vset.pattern.permute.xlu0 1
      %1647 = vperm.xlu0 %1646, %v1394
      %v1648 = vpop.permute.xlu0 %1647
      %1650 = vset.pattern.permute.xlu0 1
      %1651 = vperm.xlu0 %1650, %v1395
      %v1652 = vpop.permute.xlu0 %1651
      %v1654 = vmul.f32 %v1620, %v1640
      %v1655 = vmul.f32 %v1625, %v1644
      %v1656 = vmul.f32 %v1630, %v1648
      %v1657 = vmul.f32 %v1635, %v1652
      %v1658 = vadd.f32 %v1538, %v1654
      %v1659 = vadd.f32 %v1539, %v1655
      %v1660 = vadd.f32 %v1540, %v1656
      %v1661 = vadd.f32 %v1541, %v1657
      %v1662 = vadd.s32 %v258, 1
      %vm1663 = vcmp.ge.s32.totalorder %v1662, 0
      %vm1664 = vmand %vm1404, %vm1663
      %vm1665 = vcmp.lt.s32.totalorder %v1662, 4
      %vm1666 = vmand %vm1664, %vm1665
      %v1667 = vadd.s32 %v1409, %v1662
      %vm1668 = vcmp.eq.s32.totalorder %v247, %v1667
      %vm1669 = vcmp.eq.s32.totalorder %v248, %v1667
      %vm1670 = vmand %vm1666, %vm1668
      %vm1671 = vmand %vm1666, %vm1669
      %v1672 = vsel %vm1670, 1.0, 0.0
      %v1673 = vsel %vm1671, 1.0, 0.0
      %1674 = vmatprep.subr.mxu0 0.0
      %1675 = vmatpush1.msra.mxu0 0.0
      %1676 = vmatprep.subr.mxu0 0.0
      %1677 = vmatpush1.msra.mxu0 0.0
      %1678 = vmatprep.subr.mxu0 0.0
      %1679 = vmatpush1.msra.mxu0 0.0
      %1680 = vmatprep.subr.mxu0 0.0
      %1681 = vmatpush1.msra.mxu0 0.0
      %1682 = vmatprep.subr.mxu0 0.0
      %1683 = vmatpush1.msra.mxu0 0.0
      %1684 = vmatprep.subr.mxu0 0.0
      %1685 = vmatpush1.msra.mxu0 0.0
      %1686 = vmatprep.subr.mxu0 0.0
      %1687 = vmatpush1.msra.mxu0 0.0
      %1688 = vmatprep.subr.mxu0 0.0
      %1689 = vmatpush1.msra.mxu0 0.0
      %1690 = vmatprep.subr.mxu0 0.0
      %1691 = vmatpush1.msra.mxu0 0.0
      %1692 = vmatprep.subr.mxu0 0.0
      %1693 = vmatpush1.msra.mxu0 0.0
      %1694 = vmatprep.subr.mxu0 0.0
      %1695 = vmatpush1.msra.mxu0 0.0
      %1696 = vmatprep.subr.mxu0 0.0
      %1697 = vmatpush1.msra.mxu0 0.0
      %1698 = vmatprep.subr.mxu0 0.0
      %1699 = vmatpush1.msra.mxu0 0.0
      %1700 = vmatprep.subr.mxu0 0.0
      %1701 = vmatpush1.msra.mxu0 0.0
      %1702 = vmatprep.subr.mxu0 0.0
      %1703 = vmatpush1.msra.mxu0 %v1673
      %1704 = vmatprep.subr.mxu0 0.0
      %1705 = vmatpush1.msra.mxu0 %v1672
      %1706 = vmatprep.subr.mxu0 0.0
      %1707 = vmatpush2.msra.mxu0 0.0
      %1708 = vmatprep.subr.mxu0 0.0
      %1709 = vmatpush2.msra.mxu0 0.0
      %1710 = vmatprep.subr.mxu0 0.0
      %1711 = vmatpush2.msra.mxu0 0.0
      %1712 = vmatprep.subr.mxu0 0.0
      %1713 = vmatpush2.msra.mxu0 0.0
      %1714 = vmatprep.subr.mxu0 0.0
      %1715 = vmatpush2.msra.mxu0 0.0
      %1716 = vmatprep.subr.mxu0 0.0
      %1717 = vmatpush2.msra.mxu0 0.0
      %1718 = vmatprep.subr.mxu0 0.0
      %1719 = vmatpush2.msra.mxu0 0.0
      %1720 = vmatprep.subr.mxu0 0.0
      %1721 = vmatpush2.msra.mxu0 0.0
      %1722 = vmatprep.subr.mxu0 0.0
      %1723 = vmatpush2.msra.mxu0 0.0
      %1724 = vmatprep.subr.mxu0 0.0
      %1725 = vmatpush2.msra.mxu0 0.0
      %1726 = vmatprep.subr.mxu0 0.0
      %1727 = vmatpush2.msra.mxu0 0.0
      %1728 = vmatprep.subr.mxu0 0.0
      %1729 = vmatpush2.msra.mxu0 0.0
      %1730 = vmatprep.subr.mxu0 0.0
      %1731 = vmatpush2.msra.mxu0 0.0
      %1732 = vmatprep.subr.mxu0 0.0
      %1733 = vmatpush2.msra.mxu0 0.0
      %1734 = vmatprep.subr.mxu0 0.0
      %1735 = vmatpush2.msra.mxu0 0.0
      %1736 = vmatprep.subr.mxu0 0.0
      %1737 = vmatpush2.msra.mxu0 0.0
      %1738 = vmatprep.mubr.f32.mxu0 0.0
      %1739 = vmatmul.mubr.f32.gmra.mxu0 %v1418
      %v1740 = vpop.f32.mrf.mxu0
      %v1741 = vadd.f32 0.0, %v1740
      %v1742 = vpop.f32.mrf.mxu0
      %1743 = vmatprep.mubr.f32.mxu0 0.0
      %1744 = vmatmul.mubr.f32.gmra.mxu0 %v1421
      %v1745 = vpop.f32.mrf.mxu0
      %v1746 = vadd.f32 0.0, %v1745
      %v1747 = vpop.f32.mrf.mxu0
      %1748 = vmatprep.mubr.f32.mxu0 0.0
      %1749 = vmatmul.mubr.f32.gmra.mxu0 %v1424
      %v1750 = vpop.f32.mrf.mxu0
      %v1751 = vadd.f32 0.0, %v1750
      %v1752 = vpop.f32.mrf.mxu0
      %1753 = vmatprep.mubr.f32.mxu0 0.0
      %1754 = vmatmul.mubr.f32.gmra.mxu0 %v1427
      %v1755 = vpop.f32.mrf.mxu0
      %v1756 = vadd.f32 0.0, %v1755
      %v1757 = vpop.f32.mrf.mxu0
      %1758 = vdwg.mxu0
      %1759 = vset.pattern.permute.xlu0 2
      %1760 = vperm.xlu0 %1759, %v1392
      %v1761 = vpop.permute.xlu0 %1760
      %1763 = vset.pattern.permute.xlu0 2
      %1764 = vperm.xlu0 %1763, %v1393
      %v1765 = vpop.permute.xlu0 %1764
      %1767 = vset.pattern.permute.xlu0 2
      %1768 = vperm.xlu0 %1767, %v1394
      %v1769 = vpop.permute.xlu0 %1768
      %1771 = vset.pattern.permute.xlu0 2
      %1772 = vperm.xlu0 %1771, %v1395
      %v1773 = vpop.permute.xlu0 %1772
      %v1775 = vmul.f32 %v1741, %v1761
      %v1776 = vmul.f32 %v1746, %v1765
      %v1777 = vmul.f32 %v1751, %v1769
      %v1778 = vmul.f32 %v1756, %v1773
      %v1779 = vadd.f32 %v1658, %v1775
      %v1780 = vadd.f32 %v1659, %v1776
      %v1781 = vadd.f32 %v1660, %v1777
      %v1782 = vadd.f32 %v1661, %v1778
      %vm1783 = vcmp.ge.s32.totalorder %v257, 0
      %vm1784 = vcmp.lt.s32.totalorder %v257, 4
      %vm1785 = vmand %vm1783, %vm1784
      %vm1786 = vmand %vm1785, %vm1405
      %vm1787 = vmand %vm1786, %vm1407
      %v1788 = vmul.u32 %v257, 4
      %v1789 = vadd.s32 %v1788, %v1401
      %vm1790 = vcmp.eq.s32.totalorder %v247, %v1789
      %vm1791 = vcmp.eq.s32.totalorder %v248, %v1789
      %vm1792 = vmand %vm1787, %vm1790
      %vm1793 = vmand %vm1787, %vm1791
      %v1794 = vsel %vm1792, 1.0, 0.0
      %v1795 = vsel %vm1793, 1.0, 0.0
      %1796 = vmatprep.subr.mxu0 0.0
      %1797 = vmatpush1.msra.mxu0 0.0
      %1798 = vmatprep.subr.mxu0 0.0
      %1799 = vmatpush1.msra.mxu0 0.0
      %1800 = vmatprep.subr.mxu0 0.0
      %1801 = vmatpush1.msra.mxu0 0.0
      %1802 = vmatprep.subr.mxu0 0.0
      %1803 = vmatpush1.msra.mxu0 0.0
      %1804 = vmatprep.subr.mxu0 0.0
      %1805 = vmatpush1.msra.mxu0 0.0
      %1806 = vmatprep.subr.mxu0 0.0
      %1807 = vmatpush1.msra.mxu0 0.0
      %1808 = vmatprep.subr.mxu0 0.0
      %1809 = vmatpush1.msra.mxu0 0.0
      %1810 = vmatprep.subr.mxu0 0.0
      %1811 = vmatpush1.msra.mxu0 0.0
      %1812 = vmatprep.subr.mxu0 0.0
      %1813 = vmatpush1.msra.mxu0 0.0
      %1814 = vmatprep.subr.mxu0 0.0
      %1815 = vmatpush1.msra.mxu0 0.0
      %1816 = vmatprep.subr.mxu0 0.0
      %1817 = vmatpush1.msra.mxu0 0.0
      %1818 = vmatprep.subr.mxu0 0.0
      %1819 = vmatpush1.msra.mxu0 0.0
      %1820 = vmatprep.subr.mxu0 0.0
      %1821 = vmatpush1.msra.mxu0 0.0
      %1822 = vmatprep.subr.mxu0 0.0
      %1823 = vmatpush1.msra.mxu0 0.0
      %1824 = vmatprep.subr.mxu0 0.0
      %1825 = vmatpush1.msra.mxu0 %v1795
      %1826 = vmatprep.subr.mxu0 0.0
      %1827 = vmatpush1.msra.mxu0 %v1794
      %1828 = vmatprep.subr.mxu0 0.0
      %1829 = vmatpush2.msra.mxu0 0.0
      %1830 = vmatprep.subr.mxu0 0.0
      %1831 = vmatpush2.msra.mxu0 0.0
      %1832 = vmatprep.subr.mxu0 0.0
      %1833 = vmatpush2.msra.mxu0 0.0
      %1834 = vmatprep.subr.mxu0 0.0
      %1835 = vmatpush2.msra.mxu0 0.0
      %1836 = vmatprep.subr.mxu0 0.0
      %1837 = vmatpush2.msra.mxu0 0.0
      %1838 = vmatprep.subr.mxu0 0.0
      %1839 = vmatpush2.msra.mxu0 0.0
      %1840 = vmatprep.subr.mxu0 0.0
      %1841 = vmatpush2.msra.mxu0 0.0
      %1842 = vmatprep.subr.mxu0 0.0
      %1843 = vmatpush2.msra.mxu0 0.0
      %1844 = vmatprep.subr.mxu0 0.0
      %1845 = vmatpush2.msra.mxu0 0.0
      %1846 = vmatprep.subr.mxu0 0.0
      %1847 = vmatpush2.msra.mxu0 0.0
      %1848 = vmatprep.subr.mxu0 0.0
      %1849 = vmatpush2.msra.mxu0 0.0
      %1850 = vmatprep.subr.mxu0 0.0
      %1851 = vmatpush2.msra.mxu0 0.0
      %1852 = vmatprep.subr.mxu0 0.0
      %1853 = vmatpush2.msra.mxu0 0.0
      %1854 = vmatprep.subr.mxu0 0.0
      %1855 = vmatpush2.msra.mxu0 0.0
      %1856 = vmatprep.subr.mxu0 0.0
      %1857 = vmatpush2.msra.mxu0 0.0
      %1858 = vmatprep.subr.mxu0 0.0
      %1859 = vmatpush2.msra.mxu0 0.0
      %1860 = vmatprep.mubr.f32.mxu0 0.0
      %1861 = vmatmul.mubr.f32.gmra.mxu0 %v1418
      %v1862 = vpop.f32.mrf.mxu0
      %v1863 = vadd.f32 0.0, %v1862
      %v1864 = vpop.f32.mrf.mxu0
      %1865 = vmatprep.mubr.f32.mxu0 0.0
      %1866 = vmatmul.mubr.f32.gmra.mxu0 %v1421
      %v1867 = vpop.f32.mrf.mxu0
      %v1868 = vadd.f32 0.0, %v1867
      %v1869 = vpop.f32.mrf.mxu0
      %1870 = vmatprep.mubr.f32.mxu0 0.0
      %1871 = vmatmul.mubr.f32.gmra.mxu0 %v1424
      %v1872 = vpop.f32.mrf.mxu0
      %v1873 = vadd.f32 0.0, %v1872
      %v1874 = vpop.f32.mrf.mxu0
      %1875 = vmatprep.mubr.f32.mxu0 0.0
      %1876 = vmatmul.mubr.f32.gmra.mxu0 %v1427
      %v1877 = vpop.f32.mrf.mxu0
      %v1878 = vadd.f32 0.0, %v1877
      %v1879 = vpop.f32.mrf.mxu0
      %1880 = vdwg.mxu0
      %1881 = vset.pattern.permute.xlu0 3
      %1882 = vperm.xlu0 %1881, %v1392
      %v1883 = vpop.permute.xlu0 %1882
      %1885 = vset.pattern.permute.xlu0 3
      %1886 = vperm.xlu0 %1885, %v1393
      %v1887 = vpop.permute.xlu0 %1886
      %1889 = vset.pattern.permute.xlu0 3
      %1890 = vperm.xlu0 %1889, %v1394
      %v1891 = vpop.permute.xlu0 %1890
      %1893 = vset.pattern.permute.xlu0 3
      %1894 = vperm.xlu0 %1893, %v1395
      %v1895 = vpop.permute.xlu0 %1894
      %v1897 = vmul.f32 %v1863, %v1883
      %v1898 = vmul.f32 %v1868, %v1887
      %v1899 = vmul.f32 %v1873, %v1891
      %v1900 = vmul.f32 %v1878, %v1895
      %v1901 = vadd.f32 %v1779, %v1897
      %v1902 = vadd.f32 %v1780, %v1898
      %v1903 = vadd.f32 %v1781, %v1899
      %v1904 = vadd.f32 %v1782, %v1900
      %vm1905 = vmand %vm1785, %vm1542
      %vm1906 = vmand %vm1905, %vm1544
      %v1907 = vadd.s32 %v1788, %v258
      %vm1908 = vcmp.eq.s32.totalorder %v247, %v1907
      %vm1909 = vcmp.eq.s32.totalorder %v248, %v1907
      %vm1910 = vmand %vm1906, %vm1908
      %vm1911 = vmand %vm1906, %vm1909
      %v1912 = vsel %vm1910, 1.0, 0.0
      %v1913 = vsel %vm1911, 1.0, 0.0
      %1914 = vmatprep.subr.mxu0 0.0
      %1915 = vmatpush1.msra.mxu0 0.0
      %1916 = vmatprep.subr.mxu0 0.0
      %1917 = vmatpush1.msra.mxu0 0.0
      %1918 = vmatprep.subr.mxu0 0.0
      %1919 = vmatpush1.msra.mxu0 0.0
      %1920 = vmatprep.subr.mxu0 0.0
      %1921 = vmatpush1.msra.mxu0 0.0
      %1922 = vmatprep.subr.mxu0 0.0
      %1923 = vmatpush1.msra.mxu0 0.0
      %1924 = vmatprep.subr.mxu0 0.0
      %1925 = vmatpush1.msra.mxu0 0.0
      %1926 = vmatprep.subr.mxu0 0.0
      %1927 = vmatpush1.msra.mxu0 0.0
      %1928 = vmatprep.subr.mxu0 0.0
      %1929 = vmatpush1.msra.mxu0 0.0
      %1930 = vmatprep.subr.mxu0 0.0
      %1931 = vmatpush1.msra.mxu0 0.0
      %1932 = vmatprep.subr.mxu0 0.0
      %1933 = vmatpush1.msra.mxu0 0.0
      %1934 = vmatprep.subr.mxu0 0.0
      %1935 = vmatpush1.msra.mxu0 0.0
      %1936 = vmatprep.subr.mxu0 0.0
      %1937 = vmatpush1.msra.mxu0 0.0
      %1938 = vmatprep.subr.mxu0 0.0
      %1939 = vmatpush1.msra.mxu0 0.0
      %1940 = vmatprep.subr.mxu0 0.0
      %1941 = vmatpush1.msra.mxu0 0.0
      %1942 = vmatprep.subr.mxu0 0.0
      %1943 = vmatpush1.msra.mxu0 %v1913
      %1944 = vmatprep.subr.mxu0 0.0
      %1945 = vmatpush1.msra.mxu0 %v1912
      %1946 = vmatprep.subr.mxu0 0.0
      %1947 = vmatpush2.msra.mxu0 0.0
      %1948 = vmatprep.subr.mxu0 0.0
      %1949 = vmatpush2.msra.mxu0 0.0
      %1950 = vmatprep.subr.mxu0 0.0
      %1951 = vmatpush2.msra.mxu0 0.0
      %1952 = vmatprep.subr.mxu0 0.0
      %1953 = vmatpush2.msra.mxu0 0.0
      %1954 = vmatprep.subr.mxu0 0.0
      %1955 = vmatpush2.msra.mxu0 0.0
      %1956 = vmatprep.subr.mxu0 0.0
      %1957 = vmatpush2.msra.mxu0 0.0
      %1958 = vmatprep.subr.mxu0 0.0
      %1959 = vmatpush2.msra.mxu0 0.0
      %1960 = vmatprep.subr.mxu0 0.0
      %1961 = vmatpush2.msra.mxu0 0.0
      %1962 = vmatprep.subr.mxu0 0.0
      %1963 = vmatpush2.msra.mxu0 0.0
      %1964 = vmatprep.subr.mxu0 0.0
      %1965 = vmatpush2.msra.mxu0 0.0
      %1966 = vmatprep.subr.mxu0 0.0
      %1967 = vmatpush2.msra.mxu0 0.0
      %1968 = vmatprep.subr.mxu0 0.0
      %1969 = vmatpush2.msra.mxu0 0.0
      %1970 = vmatprep.subr.mxu0 0.0
      %1971 = vmatpush2.msra.mxu0 0.0
      %1972 = vmatprep.subr.mxu0 0.0
      %1973 = vmatpush2.msra.mxu0 0.0
      %1974 = vmatprep.subr.mxu0 0.0
      %1975 = vmatpush2.msra.mxu0 0.0
      %1976 = vmatprep.subr.mxu0 0.0
      %1977 = vmatpush2.msra.mxu0 0.0
      %1978 = vmatprep.mubr.f32.mxu0 0.0
      %1979 = vmatmul.mubr.f32.gmra.mxu0 %v1418
      %v1980 = vpop.f32.mrf.mxu0
      %v1981 = vadd.f32 0.0, %v1980
      %v1982 = vpop.f32.mrf.mxu0
      %1983 = vmatprep.mubr.f32.mxu0 0.0
      %1984 = vmatmul.mubr.f32.gmra.mxu0 %v1421
      %v1985 = vpop.f32.mrf.mxu0
      %v1986 = vadd.f32 0.0, %v1985
      %v1987 = vpop.f32.mrf.mxu0
      %1988 = vmatprep.mubr.f32.mxu0 0.0
      %1989 = vmatmul.mubr.f32.gmra.mxu0 %v1424
      %v1990 = vpop.f32.mrf.mxu0
      %v1991 = vadd.f32 0.0, %v1990
      %v1992 = vpop.f32.mrf.mxu0
      %1993 = vmatprep.mubr.f32.mxu0 0.0
      %1994 = vmatmul.mubr.f32.gmra.mxu0 %v1427
      %v1995 = vpop.f32.mrf.mxu0
      %v1996 = vadd.f32 0.0, %v1995
      %v1997 = vpop.f32.mrf.mxu0
      %1998 = vdwg.mxu0
      %1999 = vset.pattern.permute.xlu0 4
      %2000 = vperm.xlu0 %1999, %v1392
      %v2001 = vpop.permute.xlu0 %2000
      %2003 = vset.pattern.permute.xlu0 4
      %2004 = vperm.xlu0 %2003, %v1393
      %v2005 = vpop.permute.xlu0 %2004
      %2007 = vset.pattern.permute.xlu0 4
      %2008 = vperm.xlu0 %2007, %v1394
      %v2009 = vpop.permute.xlu0 %2008
      %2011 = vset.pattern.permute.xlu0 4
      %2012 = vperm.xlu0 %2011, %v1395
      %v2013 = vpop.permute.xlu0 %2012
      %v2015 = vmul.f32 %v1981, %v2001
      %v2016 = vmul.f32 %v1986, %v2005
      %v2017 = vmul.f32 %v1991, %v2009
      %v2018 = vmul.f32 %v1996, %v2013
      %v2019 = vadd.f32 %v1901, %v2015
      %v2020 = vadd.f32 %v1902, %v2016
      %v2021 = vadd.f32 %v1903, %v2017
      %v2022 = vadd.f32 %v1904, %v2018
      %vm2023 = vmand %vm1785, %vm1663
      %vm2024 = vmand %vm2023, %vm1665
      %v2025 = vadd.s32 %v1788, %v1662
      %vm2026 = vcmp.eq.s32.totalorder %v247, %v2025
      %vm2027 = vcmp.eq.s32.totalorder %v248, %v2025
      %vm2028 = vmand %vm2024, %vm2026
      %vm2029 = vmand %vm2024, %vm2027
      %v2030 = vsel %vm2028, 1.0, 0.0
      %v2031 = vsel %vm2029, 1.0, 0.0
      %2032 = vmatprep.subr.mxu0 0.0
      %2033 = vmatpush1.msra.mxu0 0.0
      %2034 = vmatprep.subr.mxu0 0.0
      %2035 = vmatpush1.msra.mxu0 0.0
      %2036 = vmatprep.subr.mxu0 0.0
      %2037 = vmatpush1.msra.mxu0 0.0
      %2038 = vmatprep.subr.mxu0 0.0
      %2039 = vmatpush1.msra.mxu0 0.0
      %2040 = vmatprep.subr.mxu0 0.0
      %2041 = vmatpush1.msra.mxu0 0.0
      %2042 = vmatprep.subr.mxu0 0.0
      %2043 = vmatpush1.msra.mxu0 0.0
      %2044 = vmatprep.subr.mxu0 0.0
      %2045 = vmatpush1.msra.mxu0 0.0
      %2046 = vmatprep.subr.mxu0 0.0
      %2047 = vmatpush1.msra.mxu0 0.0
      %2048 = vmatprep.subr.mxu0 0.0
      %2049 = vmatpush1.msra.mxu0 0.0
      %2050 = vmatprep.subr.mxu0 0.0
      %2051 = vmatpush1.msra.mxu0 0.0
      %2052 = vmatprep.subr.mxu0 0.0
      %2053 = vmatpush1.msra.mxu0 0.0
      %2054 = vmatprep.subr.mxu0 0.0
      %2055 = vmatpush1.msra.mxu0 0.0
      %2056 = vmatprep.subr.mxu0 0.0
      %2057 = vmatpush1.msra.mxu0 0.0
      %2058 = vmatprep.subr.mxu0 0.0
      %2059 = vmatpush1.msra.mxu0 0.0
      %2060 = vmatprep.subr.mxu0 0.0
      %2061 = vmatpush1.msra.mxu0 %v2031
      %2062 = vmatprep.subr.mxu0 0.0
      %2063 = vmatpush1.msra.mxu0 %v2030
      %2064 = vmatprep.subr.mxu0 0.0
      %2065 = vmatpush2.msra.mxu0 0.0
      %2066 = vmatprep.subr.mxu0 0.0
      %2067 = vmatpush2.msra.mxu0 0.0
      %2068 = vmatprep.subr.mxu0 0.0
      %2069 = vmatpush2.msra.mxu0 0.0
      %2070 = vmatprep.subr.mxu0 0.0
      %2071 = vmatpush2.msra.mxu0 0.0
      %2072 = vmatprep.subr.mxu0 0.0
      %2073 = vmatpush2.msra.mxu0 0.0
      %2074 = vmatprep.subr.mxu0 0.0
      %2075 = vmatpush2.msra.mxu0 0.0
      %2076 = vmatprep.subr.mxu0 0.0
      %2077 = vmatpush2.msra.mxu0 0.0
      %2078 = vmatprep.subr.mxu0 0.0
      %2079 = vmatpush2.msra.mxu0 0.0
      %2080 = vmatprep.subr.mxu0 0.0
      %2081 = vmatpush2.msra.mxu0 0.0
      %2082 = vmatprep.subr.mxu0 0.0
      %2083 = vmatpush2.msra.mxu0 0.0
      %2084 = vmatprep.subr.mxu0 0.0
      %2085 = vmatpush2.msra.mxu0 0.0
      %2086 = vmatprep.subr.mxu0 0.0
      %2087 = vmatpush2.msra.mxu0 0.0
      %2088 = vmatprep.subr.mxu0 0.0
      %2089 = vmatpush2.msra.mxu0 0.0
      %2090 = vmatprep.subr.mxu0 0.0
      %2091 = vmatpush2.msra.mxu0 0.0
      %2092 = vmatprep.subr.mxu0 0.0
      %2093 = vmatpush2.msra.mxu0 0.0
      %2094 = vmatprep.subr.mxu0 0.0
      %2095 = vmatpush2.msra.mxu0 0.0
      %2096 = vmatprep.mubr.f32.mxu0 0.0
      %2097 = vmatmul.mubr.f32.gmra.mxu0 %v1418
      %v2098 = vpop.f32.mrf.mxu0
      %v2099 = vadd.f32 0.0, %v2098
      %v2100 = vpop.f32.mrf.mxu0
      %2101 = vmatprep.mubr.f32.mxu0 0.0
      %2102 = vmatmul.mubr.f32.gmra.mxu0 %v1421
      %v2103 = vpop.f32.mrf.mxu0
      %v2104 = vadd.f32 0.0, %v2103
      %v2105 = vpop.f32.mrf.mxu0
      %2106 = vmatprep.mubr.f32.mxu0 0.0
      %2107 = vmatmul.mubr.f32.gmra.mxu0 %v1424
      %v2108 = vpop.f32.mrf.mxu0
      %v2109 = vadd.f32 0.0, %v2108
      %v2110 = vpop.f32.mrf.mxu0
      %2111 = vmatprep.mubr.f32.mxu0 0.0
      %2112 = vmatmul.mubr.f32.gmra.mxu0 %v1427
      %v2113 = vpop.f32.mrf.mxu0
      %v2114 = vadd.f32 0.0, %v2113
      %v2115 = vpop.f32.mrf.mxu0
      %2116 = vdwg.mxu0
      %2117 = vset.pattern.permute.xlu0 5
      %2118 = vperm.xlu0 %2117, %v1392
      %v2119 = vpop.permute.xlu0 %2118
      %2121 = vset.pattern.permute.xlu0 5
      %2122 = vperm.xlu0 %2121, %v1393
      %v2123 = vpop.permute.xlu0 %2122
      %2125 = vset.pattern.permute.xlu0 5
      %2126 = vperm.xlu0 %2125, %v1394
      %v2127 = vpop.permute.xlu0 %2126
      %2129 = vset.pattern.permute.xlu0 5
      %2130 = vperm.xlu0 %2129, %v1395
      %v2131 = vpop.permute.xlu0 %2130
      %v2133 = vmul.f32 %v2099, %v2119
      %v2134 = vmul.f32 %v2104, %v2123
      %v2135 = vmul.f32 %v2109, %v2127
      %v2136 = vmul.f32 %v2114, %v2131
      %v2137 = vadd.f32 %v2019, %v2133
      %v2138 = vadd.f32 %v2020, %v2134
      %v2139 = vadd.f32 %v2021, %v2135
      %v2140 = vadd.f32 %v2022, %v2136
      %v2141 = vadd.s32 %v257, 1
      %vm2142 = vcmp.ge.s32.totalorder %v2141, 0
      %vm2143 = vcmp.lt.s32.totalorder %v2141, 4
      %vm2144 = vmand %vm2142, %vm2143
      %vm2145 = vmand %vm2144, %vm1405
      %vm2146 = vmand %vm2145, %vm1407
      %v2147 = vmul.u32 %v2141, 4
      %v2148 = vadd.s32 %v2147, %v1401
      %vm2149 = vcmp.eq.s32.totalorder %v247, %v2148
      %vm2150 = vcmp.eq.s32.totalorder %v248, %v2148
      %vm2151 = vmand %vm2146, %vm2149
      %vm2152 = vmand %vm2146, %vm2150
      %v2153 = vsel %vm2151, 1.0, 0.0
      %v2154 = vsel %vm2152, 1.0, 0.0
      %2155 = vmatprep.subr.mxu0 0.0
      %2156 = vmatpush1.msra.mxu0 0.0
      %2157 = vmatprep.subr.mxu0 0.0
      %2158 = vmatpush1.msra.mxu0 0.0
      %2159 = vmatprep.subr.mxu0 0.0
      %2160 = vmatpush1.msra.mxu0 0.0
      %2161 = vmatprep.subr.mxu0 0.0
      %2162 = vmatpush1.msra.mxu0 0.0
      %2163 = vmatprep.subr.mxu0 0.0
      %2164 = vmatpush1.msra.mxu0 0.0
      %2165 = vmatprep.subr.mxu0 0.0
      %2166 = vmatpush1.msra.mxu0 0.0
      %2167 = vmatprep.subr.mxu0 0.0
      %2168 = vmatpush1.msra.mxu0 0.0
      %2169 = vmatprep.subr.mxu0 0.0
      %2170 = vmatpush1.msra.mxu0 0.0
      %2171 = vmatprep.subr.mxu0 0.0
      %2172 = vmatpush1.msra.mxu0 0.0
      %2173 = vmatprep.subr.mxu0 0.0
      %2174 = vmatpush1.msra.mxu0 0.0
      %2175 = vmatprep.subr.mxu0 0.0
      %2176 = vmatpush1.msra.mxu0 0.0
      %2177 = vmatprep.subr.mxu0 0.0
      %2178 = vmatpush1.msra.mxu0 0.0
      %2179 = vmatprep.subr.mxu0 0.0
      %2180 = vmatpush1.msra.mxu0 0.0
      %2181 = vmatprep.subr.mxu0 0.0
      %2182 = vmatpush1.msra.mxu0 0.0
      %2183 = vmatprep.subr.mxu0 0.0
      %2184 = vmatpush1.msra.mxu0 %v2154
      %2185 = vmatprep.subr.mxu0 0.0
      %2186 = vmatpush1.msra.mxu0 %v2153
      %2187 = vmatprep.subr.mxu0 0.0
      %2188 = vmatpush2.msra.mxu0 0.0
      %2189 = vmatprep.subr.mxu0 0.0
      %2190 = vmatpush2.msra.mxu0 0.0
      %2191 = vmatprep.subr.mxu0 0.0
      %2192 = vmatpush2.msra.mxu0 0.0
      %2193 = vmatprep.subr.mxu0 0.0
      %2194 = vmatpush2.msra.mxu0 0.0
      %2195 = vmatprep.subr.mxu0 0.0
      %2196 = vmatpush2.msra.mxu0 0.0
      %2197 = vmatprep.subr.mxu0 0.0
      %2198 = vmatpush2.msra.mxu0 0.0
      %2199 = vmatprep.subr.mxu0 0.0
      %2200 = vmatpush2.msra.mxu0 0.0
      %2201 = vmatprep.subr.mxu0 0.0
      %2202 = vmatpush2.msra.mxu0 0.0
      %2203 = vmatprep.subr.mxu0 0.0
      %2204 = vmatpush2.msra.mxu0 0.0
      %2205 = vmatprep.subr.mxu0 0.0
      %2206 = vmatpush2.msra.mxu0 0.0
      %2207 = vmatprep.subr.mxu0 0.0
      %2208 = vmatpush2.msra.mxu0 0.0
      %2209 = vmatprep.subr.mxu0 0.0
      %2210 = vmatpush2.msra.mxu0 0.0
      %2211 = vmatprep.subr.mxu0 0.0
      %2212 = vmatpush2.msra.mxu0 0.0
      %2213 = vmatprep.subr.mxu0 0.0
      %2214 = vmatpush2.msra.mxu0 0.0
      %2215 = vmatprep.subr.mxu0 0.0
      %2216 = vmatpush2.msra.mxu0 0.0
      %2217 = vmatprep.subr.mxu0 0.0
      %2218 = vmatpush2.msra.mxu0 0.0
      %2219 = vmatprep.mubr.f32.mxu0 0.0
      %2220 = vmatmul.mubr.f32.gmra.mxu0 %v1418
      %v2221 = vpop.f32.mrf.mxu0
      %v2222 = vadd.f32 0.0, %v2221
      %v2223 = vpop.f32.mrf.mxu0
      %2224 = vmatprep.mubr.f32.mxu0 0.0
      %2225 = vmatmul.mubr.f32.gmra.mxu0 %v1421
      %v2226 = vpop.f32.mrf.mxu0
      %v2227 = vadd.f32 0.0, %v2226
      %v2228 = vpop.f32.mrf.mxu0
      %2229 = vmatprep.mubr.f32.mxu0 0.0
      %2230 = vmatmul.mubr.f32.gmra.mxu0 %v1424
      %v2231 = vpop.f32.mrf.mxu0
      %v2232 = vadd.f32 0.0, %v2231
      %v2233 = vpop.f32.mrf.mxu0
      %2234 = vmatprep.mubr.f32.mxu0 0.0
      %2235 = vmatmul.mubr.f32.gmra.mxu0 %v1427
      %v2236 = vpop.f32.mrf.mxu0
      %v2237 = vadd.f32 0.0, %v2236
      %v2238 = vpop.f32.mrf.mxu0
      %2239 = vdwg.mxu0
      %2240 = vset.pattern.permute.xlu0 6
      %2241 = vperm.xlu0 %2240, %v1392
      %v2242 = vpop.permute.xlu0 %2241
      %2244 = vset.pattern.permute.xlu0 6
      %2245 = vperm.xlu0 %2244, %v1393
      %v2246 = vpop.permute.xlu0 %2245
      %2248 = vset.pattern.permute.xlu0 6
      %2249 = vperm.xlu0 %2248, %v1394
      %v2250 = vpop.permute.xlu0 %2249
      %2252 = vset.pattern.permute.xlu0 6
      %2253 = vperm.xlu0 %2252, %v1395
      %v2254 = vpop.permute.xlu0 %2253
      %v2256 = vmul.f32 %v2222, %v2242
      %v2257 = vmul.f32 %v2227, %v2246
      %v2258 = vmul.f32 %v2232, %v2250
      %v2259 = vmul.f32 %v2237, %v2254
      %v2260 = vadd.f32 %v2137, %v2256
      %v2261 = vadd.f32 %v2138, %v2257
      %v2262 = vadd.f32 %v2139, %v2258
      %v2263 = vadd.f32 %v2140, %v2259
      %vm2264 = vmand %vm2144, %vm1542
      %vm2265 = vmand %vm2264, %vm1544
      %v2266 = vadd.s32 %v2147, %v258
      %vm2267 = vcmp.eq.s32.totalorder %v247, %v2266
      %vm2268 = vcmp.eq.s32.totalorder %v248, %v2266
      %vm2269 = vmand %vm2265, %vm2267
      %vm2270 = vmand %vm2265, %vm2268
      %v2271 = vsel %vm2269, 1.0, 0.0
      %v2272 = vsel %vm2270, 1.0, 0.0
      %2273 = vmatprep.subr.mxu0 0.0
      %2274 = vmatpush1.msra.mxu0 0.0
      %2275 = vmatprep.subr.mxu0 0.0
      %2276 = vmatpush1.msra.mxu0 0.0
      %2277 = vmatprep.subr.mxu0 0.0
      %2278 = vmatpush1.msra.mxu0 0.0
      %2279 = vmatprep.subr.mxu0 0.0
      %2280 = vmatpush1.msra.mxu0 0.0
      %2281 = vmatprep.subr.mxu0 0.0
      %2282 = vmatpush1.msra.mxu0 0.0
      %2283 = vmatprep.subr.mxu0 0.0
      %2284 = vmatpush1.msra.mxu0 0.0
      %2285 = vmatprep.subr.mxu0 0.0
      %2286 = vmatpush1.msra.mxu0 0.0
      %2287 = vmatprep.subr.mxu0 0.0
      %2288 = vmatpush1.msra.mxu0 0.0
      %2289 = vmatprep.subr.mxu0 0.0
      %2290 = vmatpush1.msra.mxu0 0.0
      %2291 = vmatprep.subr.mxu0 0.0
      %2292 = vmatpush1.msra.mxu0 0.0
      %2293 = vmatprep.subr.mxu0 0.0
      %2294 = vmatpush1.msra.mxu0 0.0
      %2295 = vmatprep.subr.mxu0 0.0
      %2296 = vmatpush1.msra.mxu0 0.0
      %2297 = vmatprep.subr.mxu0 0.0
      %2298 = vmatpush1.msra.mxu0 0.0
      %2299 = vmatprep.subr.mxu0 0.0
      %2300 = vmatpush1.msra.mxu0 0.0
      %2301 = vmatprep.subr.mxu0 0.0
      %2302 = vmatpush1.msra.mxu0 %v2272
      %2303 = vmatprep.subr.mxu0 0.0
      %2304 = vmatpush1.msra.mxu0 %v2271
      %2305 = vmatprep.subr.mxu0 0.0
      %2306 = vmatpush2.msra.mxu0 0.0
      %2307 = vmatprep.subr.mxu0 0.0
      %2308 = vmatpush2.msra.mxu0 0.0
      %2309 = vmatprep.subr.mxu0 0.0
      %2310 = vmatpush2.msra.mxu0 0.0
      %2311 = vmatprep.subr.mxu0 0.0
      %2312 = vmatpush2.msra.mxu0 0.0
      %2313 = vmatprep.subr.mxu0 0.0
      %2314 = vmatpush2.msra.mxu0 0.0
      %2315 = vmatprep.subr.mxu0 0.0
      %2316 = vmatpush2.msra.mxu0 0.0
      %2317 = vmatprep.subr.mxu0 0.0
      %2318 = vmatpush2.msra.mxu0 0.0
      %2319 = vmatprep.subr.mxu0 0.0
      %2320 = vmatpush2.msra.mxu0 0.0
      %2321 = vmatprep.subr.mxu0 0.0
      %2322 = vmatpush2.msra.mxu0 0.0
      %2323 = vmatprep.subr.mxu0 0.0
      %2324 = vmatpush2.msra.mxu0 0.0
      %2325 = vmatprep.subr.mxu0 0.0
      %2326 = vmatpush2.msra.mxu0 0.0
      %2327 = vmatprep.subr.mxu0 0.0
      %2328 = vmatpush2.msra.mxu0 0.0
      %2329 = vmatprep.subr.mxu0 0.0
      %2330 = vmatpush2.msra.mxu0 0.0
      %2331 = vmatprep.subr.mxu0 0.0
      %2332 = vmatpush2.msra.mxu0 0.0
      %2333 = vmatprep.subr.mxu0 0.0
      %2334 = vmatpush2.msra.mxu0 0.0
      %2335 = vmatprep.subr.mxu0 0.0
      %2336 = vmatpush2.msra.mxu0 0.0
      %2337 = vmatprep.mubr.f32.mxu0 0.0
      %2338 = vmatmul.mubr.f32.gmra.mxu0 %v1418
      %v2339 = vpop.f32.mrf.mxu0
      %v2340 = vadd.f32 0.0, %v2339
      %v2341 = vpop.f32.mrf.mxu0
      %2342 = vmatprep.mubr.f32.mxu0 0.0
      %2343 = vmatmul.mubr.f32.gmra.mxu0 %v1421
      %v2344 = vpop.f32.mrf.mxu0
      %v2345 = vadd.f32 0.0, %v2344
      %v2346 = vpop.f32.mrf.mxu0
      %2347 = vmatprep.mubr.f32.mxu0 0.0
      %2348 = vmatmul.mubr.f32.gmra.mxu0 %v1424
      %v2349 = vpop.f32.mrf.mxu0
      %v2350 = vadd.f32 0.0, %v2349
      %v2351 = vpop.f32.mrf.mxu0
      %2352 = vmatprep.mubr.f32.mxu0 0.0
      %2353 = vmatmul.mubr.f32.gmra.mxu0 %v1427
      %v2354 = vpop.f32.mrf.mxu0
      %v2355 = vadd.f32 0.0, %v2354
      %v2356 = vpop.f32.mrf.mxu0
      %2357 = vdwg.mxu0
      %2358 = vset.pattern.permute.xlu0 7
      %2359 = vperm.xlu0 %2358, %v1392
      %v2360 = vpop.permute.xlu0 %2359
      %2362 = vset.pattern.permute.xlu0 7
      %2363 = vperm.xlu0 %2362, %v1393
      %v2364 = vpop.permute.xlu0 %2363
      %2366 = vset.pattern.permute.xlu0 7
      %2367 = vperm.xlu0 %2366, %v1394
      %v2368 = vpop.permute.xlu0 %2367
      %2370 = vset.pattern.permute.xlu0 7
      %2371 = vperm.xlu0 %2370, %v1395
      %v2372 = vpop.permute.xlu0 %2371
      %v2374 = vmul.f32 %v2340, %v2360
      %v2375 = vmul.f32 %v2345, %v2364
      %v2376 = vmul.f32 %v2350, %v2368
      %v2377 = vmul.f32 %v2355, %v2372
      %v2378 = vadd.f32 %v2260, %v2374
      %v2379 = vadd.f32 %v2261, %v2375
      %v2380 = vadd.f32 %v2262, %v2376
      %v2381 = vadd.f32 %v2263, %v2377
      %vm2382 = vmand %vm2144, %vm1663
      %vm2383 = vmand %vm2382, %vm1665
      %v2384 = vadd.s32 %v2147, %v1662
      %vm2385 = vcmp.eq.s32.totalorder %v247, %v2384
      %vm2386 = vcmp.eq.s32.totalorder %v248, %v2384
      %vm2387 = vmand %vm2383, %vm2385
      %vm2388 = vmand %vm2383, %vm2386
      %v2389 = vsel %vm2387, 1.0, 0.0
      %v2390 = vsel %vm2388, 1.0, 0.0
      %2391 = vmatprep.subr.mxu0 0.0
      %2392 = vmatpush1.msra.mxu0 0.0
      %2393 = vmatprep.subr.mxu0 0.0
      %2394 = vmatpush1.msra.mxu0 0.0
      %2395 = vmatprep.subr.mxu0 0.0
      %2396 = vmatpush1.msra.mxu0 0.0
      %2397 = vmatprep.subr.mxu0 0.0
      %2398 = vmatpush1.msra.mxu0 0.0
      %2399 = vmatprep.subr.mxu0 0.0
      %2400 = vmatpush1.msra.mxu0 0.0
      %2401 = vmatprep.subr.mxu0 0.0
      %2402 = vmatpush1.msra.mxu0 0.0
      %2403 = vmatprep.subr.mxu0 0.0
      %2404 = vmatpush1.msra.mxu0 0.0
      %2405 = vmatprep.subr.mxu0 0.0
      %2406 = vmatpush1.msra.mxu0 0.0
      %2407 = vmatprep.subr.mxu0 0.0
      %2408 = vmatpush1.msra.mxu0 0.0
      %2409 = vmatprep.subr.mxu0 0.0
      %2410 = vmatpush1.msra.mxu0 0.0
      %2411 = vmatprep.subr.mxu0 0.0
      %2412 = vmatpush1.msra.mxu0 0.0
      %2413 = vmatprep.subr.mxu0 0.0
      %2414 = vmatpush1.msra.mxu0 0.0
      %2415 = vmatprep.subr.mxu0 0.0
      %2416 = vmatpush1.msra.mxu0 0.0
      %2417 = vmatprep.subr.mxu0 0.0
      %2418 = vmatpush1.msra.mxu0 0.0
      %2419 = vmatprep.subr.mxu0 0.0
      %2420 = vmatpush1.msra.mxu0 %v2390
      %2421 = vmatprep.subr.mxu0 0.0
      %2422 = vmatpush1.msra.mxu0 %v2389
      %2423 = vmatprep.subr.mxu0 0.0
      %2424 = vmatpush2.msra.mxu0 0.0
      %2425 = vmatprep.subr.mxu0 0.0
      %2426 = vmatpush2.msra.mxu0 0.0
      %2427 = vmatprep.subr.mxu0 0.0
      %2428 = vmatpush2.msra.mxu0 0.0
      %2429 = vmatprep.subr.mxu0 0.0
      %2430 = vmatpush2.msra.mxu0 0.0
      %2431 = vmatprep.subr.mxu0 0.0
      %2432 = vmatpush2.msra.mxu0 0.0
      %2433 = vmatprep.subr.mxu0 0.0
      %2434 = vmatpush2.msra.mxu0 0.0
      %2435 = vmatprep.subr.mxu0 0.0
      %2436 = vmatpush2.msra.mxu0 0.0
      %2437 = vmatprep.subr.mxu0 0.0
      %2438 = vmatpush2.msra.mxu0 0.0
      %2439 = vmatprep.subr.mxu0 0.0
      %2440 = vmatpush2.msra.mxu0 0.0
      %2441 = vmatprep.subr.mxu0 0.0
      %2442 = vmatpush2.msra.mxu0 0.0
      %2443 = vmatprep.subr.mxu0 0.0
      %2444 = vmatpush2.msra.mxu0 0.0
      %2445 = vmatprep.subr.mxu0 0.0
      %2446 = vmatpush2.msra.mxu0 0.0
      %2447 = vmatprep.subr.mxu0 0.0
      %2448 = vmatpush2.msra.mxu0 0.0
      %2449 = vmatprep.subr.mxu0 0.0
      %2450 = vmatpush2.msra.mxu0 0.0
      %2451 = vmatprep.subr.mxu0 0.0
      %2452 = vmatpush2.msra.mxu0 0.0
      %2453 = vmatprep.subr.mxu0 0.0
      %2454 = vmatpush2.msra.mxu0 0.0
      %2455 = vmatprep.mubr.f32.mxu0 0.0
      %2456 = vmatmul.mubr.f32.gmra.mxu0 %v1418
      %v2457 = vpop.f32.mrf.mxu0
      %v2458 = vadd.f32 0.0, %v2457
      %v2459 = vpop.f32.mrf.mxu0
      %2460 = vmatprep.mubr.f32.mxu0 0.0
      %2461 = vmatmul.mubr.f32.gmra.mxu0 %v1421
      %v2462 = vpop.f32.mrf.mxu0
      %v2463 = vadd.f32 0.0, %v2462
      %v2464 = vpop.f32.mrf.mxu0
      %2465 = vmatprep.mubr.f32.mxu0 0.0
      %2466 = vmatmul.mubr.f32.gmra.mxu0 %v1424
      %v2467 = vpop.f32.mrf.mxu0
      %v2468 = vadd.f32 0.0, %v2467
      %v2469 = vpop.f32.mrf.mxu0
      %2470 = vmatprep.mubr.f32.mxu0 0.0
      %2471 = vmatmul.mubr.f32.gmra.mxu0 %v1427
      %v2472 = vpop.f32.mrf.mxu0
      %v2473 = vadd.f32 0.0, %v2472
      %v2474 = vpop.f32.mrf.mxu0
      %2475 = vdwg.mxu0
      %2476 = vset.pattern.permute.xlu0 8
      %2477 = vperm.xlu0 %2476, %v1392
      %v2478 = vpop.permute.xlu0 %2477
      %2480 = vset.pattern.permute.xlu0 8
      %2481 = vperm.xlu0 %2480, %v1393
      %v2482 = vpop.permute.xlu0 %2481
      %2484 = vset.pattern.permute.xlu0 8
      %2485 = vperm.xlu0 %2484, %v1394
      %v2486 = vpop.permute.xlu0 %2485
      %2488 = vset.pattern.permute.xlu0 8
      %2489 = vperm.xlu0 %2488, %v1395
      %v2490 = vpop.permute.xlu0 %2489
      %v2492 = vmul.f32 %v2458, %v2478
      %v2493 = vmul.f32 %v2463, %v2482
      %v2494 = vmul.f32 %v2468, %v2486
      %v2495 = vmul.f32 %v2473, %v2490
      %v2496 = vadd.f32 %v2378, %v2492
      %v2497 = vadd.f32 %v2379, %v2493
      %v2498 = vadd.f32 %v2380, %v2494
      %v2499 = vadd.f32 %v2381, %v2495
      %2501 = vset.pattern.permute.xlu0 0
      %2502 = vperm.xlu0 %2501, %v1396
      %v2503 = vpop.permute.xlu0 %2502
      %2506 = vset.pattern.permute.xlu0 0
      %2507 = vperm.xlu0 %2506, %v1397
      %v2508 = vpop.permute.xlu0 %2507
      %2511 = vset.pattern.permute.xlu0 0
      %2512 = vperm.xlu0 %2511, %v1398
      %v2513 = vpop.permute.xlu0 %2512
      %2516 = vset.pattern.permute.xlu0 0
      %2517 = vperm.xlu0 %2516, %v1399
      %v2518 = vpop.permute.xlu0 %2517
      %v2520 = vadd.f32 %v2496, %v2503
      %v2521 = vadd.f32 %v2497, %v2508
      %v2522 = vadd.f32 %v2498, %v2513
      %v2523 = vadd.f32 %v2499, %v2518
      %v2524 = vmax.f32 %v2520, 0.0
      %v2525 = vmax.f32 %v2521, 0.0
      %v2526 = vmax.f32 %v2522, 0.0
      %v2527 = vmax.f32 %v2523, 0.0
      %v2528 = vld [vmem:[%s1 + $0x1c] sm:$0xf]
      %v2529 = vld [vmem:[%s1 + $0x20] sm:$0xf]
      %v2530 = vpack.c.bf16 %v2525, %v2524
      %v2531 = vpack.c.bf16 %v2527, %v2526
      %v2532 = vld [vmem:[%s2 + $0x88] sm:$0xff]
      %v2533 = vld [vmem:[%s2 + $0x90] sm:$0xff]
      %2535 = vset.pattern.permute.xlu0 0
      %2536 = vperm.xlu0 %2535, %v2532
      %v2537 = vpop.permute.xlu0 %2536
      %2540 = vset.pattern.permute.xlu0 0
      %2541 = vperm.xlu0 %2540, %v2533
      %v2542 = vpop.permute.xlu0 %2541
      %v2546 = vunpack.c.l.b16 %v2528
      %v2547 = vunpack.c.l.b16 %v2529
      %v2548 = vpack.c.b16 %v2547, %v2546
      %vm2549 = vcmask 261120
      %v2551 = vsel %vm2549, %v2548, 0
      %2553 = vmatprep.subr.bf16.mxu0 0
      %2554 = vmatpush1.bf16.msra.mxu0 0
      %2555 = vmatprep.subr.bf16.mxu0 0
      %2556 = vmatpush1.bf16.msra.mxu0 0
      %2557 = vmatprep.subr.bf16.mxu0 0
      %2558 = vmatpush1.bf16.msra.mxu0 0
      %2559 = vmatprep.subr.bf16.mxu0 0
      %2560 = vmatpush1.bf16.msra.mxu0 0
      %2561 = vmatprep.subr.bf16.mxu0 0
      %2562 = vmatpush1.bf16.msra.mxu0 0
      %2563 = vmatprep.subr.bf16.mxu0 0
      %2564 = vmatpush1.bf16.msra.mxu0 0
      %2565 = vmatprep.subr.bf16.mxu0 0
      %2566 = vmatpush1.bf16.msra.mxu0 %v2531
      %2567 = vmatprep.subr.bf16.mxu0 0
      %2568 = vmatpush1.bf16.msra.mxu0 %v2530
      %2569 = vmatprep.subr.bf16.mxu0 0
      %2570 = vmatpush2.bf16.msra.mxu0 0
      %2571 = vmatprep.subr.bf16.mxu0 0
      %2572 = vmatpush2.bf16.msra.mxu0 0
      %2573 = vmatprep.subr.bf16.mxu0 0
      %2574 = vmatpush2.bf16.msra.mxu0 0
      %2575 = vmatprep.subr.bf16.mxu0 0
      %2576 = vmatpush2.bf16.msra.mxu0 0
      %2577 = vmatprep.subr.bf16.mxu0 0
      %2578 = vmatpush2.bf16.msra.mxu0 0
      %2579 = vmatprep.subr.bf16.mxu0 0
      %2580 = vmatpush2.bf16.msra.mxu0 0
      %2581 = vmatprep.subr.bf16.mxu0 0
      %2582 = vmatpush2.bf16.msra.mxu0 0
      %2583 = vmatprep.subr.bf16.mxu0 0
      %2584 = vmatpush2.bf16.msra.mxu0 0
      %2585 = vmatprep.mubr.bf16.mxu0 0
      %2586 = vmatmul.mubr.bf16.gmra.mxu0 %v2551
      %v2587 = vpop.f32.mrf.mxu0
      %v2588 = vadd.f32 %v2537, %v2587
      %v2589 = vpop.f32.mrf.mxu0
      %v2590 = vpop.f32.mrf.mxu0
      %v2591 = vadd.f32 %v2542, %v2590
      %v2592 = vpop.f32.mrf.mxu0
      %2593 = vdwg.mxu0
      %v2594 = vadd.f32 %v1291, %v2588
      %v2595 = vadd.f32 %v1292, %v2591
      %v2596 = vld [vmem:[%s1 + $0x24] sm:$0xf]
      %v2597 = vld [vmem:[%s1 + $0x28] sm:$0xf]
      %v2598 = vld [vmem:[%s1 + $0x2c] sm:$0xf]
      %v2599 = vld [vmem:[%s1 + $0x30] sm:$0xf]
      %v2600 = vpack.c.bf16 %v2595, %v2594
      %v2601 = vld [vmem:[%s2 + $0x98] sm:$0xff]
      %v2602 = vld [vmem:[%s2 + $0xa0] sm:$0xff]
      %v2603 = vld [vmem:[%s2 + $0xa8] sm:$0xff]
      %v2604 = vld [vmem:[%s2 + $0xb0] sm:$0xff]
      %2606 = vset.pattern.permute.xlu0 0
      %2607 = vperm.xlu0 %2606, %v2601
      %v2608 = vpop.permute.xlu0 %2607
      %2611 = vset.pattern.permute.xlu0 0
      %2612 = vperm.xlu0 %2611, %v2602
      %v2613 = vpop.permute.xlu0 %2612
      %2616 = vset.pattern.permute.xlu0 0
      %2617 = vperm.xlu0 %2616, %v2603
      %v2618 = vpop.permute.xlu0 %2617
      %2621 = vset.pattern.permute.xlu0 0
      %2622 = vperm.xlu0 %2621, %v2604
      %v2623 = vpop.permute.xlu0 %2622
      %v2629 = vunpack.c.l.b16 %v2596
      %v2630 = vunpack.c.l.b16 %v2597
      %v2631 = vunpack.c.l.b16 %v2598
      %v2632 = vunpack.c.l.b16 %v2599
      %v2633 = vpack.c.b16 %v2630, %v2629
      %v2634 = vpack.c.b16 %v2632, %v2631
      %v2636 = vsel %vm1332, %v2633, 0
      %v2639 = vsel %vm1332, %v2634, 0
      %2641 = vmatprep.subr.bf16.mxu0 0
      %2642 = vmatpush1.bf16.msra.mxu0 0
      %2643 = vmatprep.subr.bf16.mxu0 0
      %2644 = vmatpush1.bf16.msra.mxu0 0
      %2645 = vmatprep.subr.bf16.mxu0 0
      %2646 = vmatpush1.bf16.msra.mxu0 0
      %2647 = vmatprep.subr.bf16.mxu0 0
      %2648 = vmatpush1.bf16.msra.mxu0 0
      %2649 = vmatprep.subr.bf16.mxu0 0
      %2650 = vmatpush1.bf16.msra.mxu0 0
      %2651 = vmatprep.subr.bf16.mxu0 0
      %2652 = vmatpush1.bf16.msra.mxu0 0
      %2653 = vmatprep.subr.bf16.mxu0 0
      %2654 = vmatpush1.bf16.msra.mxu0 0
      %2655 = vmatprep.subr.bf16.mxu0 0
      %2656 = vmatpush1.bf16.msra.mxu0 %v2600
      %2657 = vmatprep.subr.bf16.mxu0 0
      %2658 = vmatpush2.bf16.msra.mxu0 0
      %2659 = vmatprep.subr.bf16.mxu0 0
      %2660 = vmatpush2.bf16.msra.mxu0 0
      %2661 = vmatprep.subr.bf16.mxu0 0
      %2662 = vmatpush2.bf16.msra.mxu0 0
      %2663 = vmatprep.subr.bf16.mxu0 0
      %2664 = vmatpush2.bf16.msra.mxu0 0
      %2665 = vmatprep.subr.bf16.mxu0 0
      %2666 = vmatpush2.bf16.msra.mxu0 0
      %2667 = vmatprep.subr.bf16.mxu0 0
      %2668 = vmatpush2.bf16.msra.mxu0 0
      %2669 = vmatprep.subr.bf16.mxu0 0
      %2670 = vmatpush2.bf16.msra.mxu0 0
      %2671 = vmatprep.subr.bf16.mxu0 0
      %2672 = vmatpush2.bf16.msra.mxu0 0
      %2673 = vmatprep.mubr.bf16.mxu0 0
      %2674 = vmatmul.mubr.bf16.gmra.mxu0 %v2636
      %v2675 = vpop.f32.mrf.mxu0
      %v2676 = vadd.f32 %v2608, %v2675
      %v2677 = vpop.f32.mrf.mxu0
      %v2678 = vpop.f32.mrf.mxu0
      %v2679 = vadd.f32 %v2613, %v2678
      %v2680 = vpop.f32.mrf.mxu0
      %2681 = vmatprep.mubr.bf16.mxu0 0
      %2682 = vmatmul.mubr.bf16.gmra.mxu0 %v2639
      %v2683 = vpop.f32.mrf.mxu0
      %v2684 = vadd.f32 %v2618, %v2683
      %v2685 = vpop.f32.mrf.mxu0
      %v2686 = vpop.f32.mrf.mxu0
      %v2687 = vadd.f32 %v2623, %v2686
      %v2688 = vpop.f32.mrf.mxu0
      %2689 = vdwg.mxu0
      %v2690 = vmax.f32 %v2676, 0.0
      %v2691 = vmax.f32 %v2679, 0.0
      %v2692 = vmax.f32 %v2684, 0.0
      %v2693 = vmax.f32 %v2687, 0.0
      %v2694 = vsel %vm1332, %v2690, 0.0
      %2695 = vadd.xlane.f32.xlu0 %v2694
      %v2696 = vpop.xlane.xlu0 %2695
      %v2697 = vsel %vm1332, %v2691, 0.0
      %2698 = vadd.xlane.f32.xlu0 %v2697
      %v2699 = vpop.xlane.xlu0 %2698
      %v2700 = vsel %vm1332, %v2692, 0.0
      %2701 = vadd.xlane.f32.xlu0 %v2700
      %v2702 = vpop.xlane.xlu0 %2701
      %v2703 = vsel %vm1332, %v2693, 0.0
      %2704 = vadd.xlane.f32.xlu0 %v2703
      %v2705 = vpop.xlane.xlu0 %2704
      %v2706 = vmul.f32 %v2696, 0.0625
      %v2707 = vmul.f32 %v2699, 0.0625
      %v2708 = vmul.f32 %v2702, 0.0625
      %v2709 = vmul.f32 %v2705, 0.0625
      %v2710 = vld [vmem:[%s1 + $0x34] sm:$0x7]
      %v2711 = vpack.c.bf16 %v2707, %v2706
      %v2712 = vpack.c.bf16 %v2709, %v2708
      %v2713 = vld [vmem:[%s2 + $0xb8] sm:$0x3f]
      %v2715 = vsel %vm2549, %v2710, 0
      %2717 = vmatprep.subr.bf16.mxu0 0
      %2718 = vmatpush1.bf16.msra.mxu0 0
      %2719 = vmatprep.subr.bf16.mxu0 0
      %2720 = vmatpush1.bf16.msra.mxu0 0
      %2721 = vmatprep.subr.bf16.mxu0 0
      %2722 = vmatpush1.bf16.msra.mxu0 0
      %2723 = vmatprep.subr.bf16.mxu0 0
      %2724 = vmatpush1.bf16.msra.mxu0 0
      %2725 = vmatprep.subr.bf16.mxu0 0
      %2726 = vmatpush1.bf16.msra.mxu0 0
      %2727 = vmatprep.subr.bf16.mxu0 0
      %2728 = vmatpush1.bf16.msra.mxu0 0
      %2729 = vmatprep.subr.bf16.mxu0 0
      %2730 = vmatpush1.bf16.msra.mxu0 %v2712
      %2731 = vmatprep.subr.bf16.mxu0 0
      %2732 = vmatpush1.bf16.msra.mxu0 %v2711
      %2733 = vmatprep.subr.bf16.mxu0 0
      %2734 = vmatpush2.bf16.msra.mxu0 0
      %2735 = vmatprep.subr.bf16.mxu0 0
      %2736 = vmatpush2.bf16.msra.mxu0 0
      %2737 = vmatprep.subr.bf16.mxu0 0
      %2738 = vmatpush2.bf16.msra.mxu0 0
      %2739 = vmatprep.subr.bf16.mxu0 0
      %2740 = vmatpush2.bf16.msra.mxu0 0
      %2741 = vmatprep.subr.bf16.mxu0 0
      %2742 = vmatpush2.bf16.msra.mxu0 0
      %2743 = vmatprep.subr.bf16.mxu0 0
      %2744 = vmatpush2.bf16.msra.mxu0 0
      %2745 = vmatprep.subr.bf16.mxu0 0
      %2746 = vmatpush2.bf16.msra.mxu0 0
      %2747 = vmatprep.subr.bf16.mxu0 0
      %2748 = vmatpush2.bf16.msra.mxu0 0
      %2749 = vmatprep.mubr.bf16.mxu0 0
      %2750 = vmatmul.mubr.bf16.gmra.mxu0 %v2715
      %v2751 = vpop.f32.mrf.mxu0
      %v2752 = vadd.f32 %v2713, %v2751
      %v2753 = vpop.f32.mrf.mxu0
      %v2754 = vpop.f32.mrf.mxu0
      %v2755 = vpop.f32.mrf.mxu0
      %2756 = vdwg.mxu0
      %vm2757 = vcmask 5120
      %2758 = vst.msk [vmem:[%s168] sm:$0x3f] %vm2757, %v2752
      %p2759 = scmp.lt.s32.totalorder %s14, 1
      %s2760 = scalar_select %p2759, %s14, 1
      %s2761 = smul.addr %s2760, 8
      %s2762 = scalar_lea.vmem %s3, %s2761
      // Predicated region
      $region33: #{_forward.1} parent=31 // pred_check
        %p2763 = pneg %p100
      $region34: #{_forward.1} parent=31 // pred_check_branch
        %2765 = sbr.rel (%p2763) target = $region36
      $region35: #{_forward.1} parent=31 // pred_region
        _
      $region36: #{_forward.1} parent=31 // pred_fallthru
        _
    $region32: #{_forward.1} parent=5 // pred_fallthru
      _
    %p2766 = scmp.le.s32.totalorder 2, %s9
    // Predicated region
    $region37: #{_forward.1} parent=5 // pred_check
      %p2767 = pneg %p2766
    $region38: #{_forward.1} parent=5 // pred_check_branch
      %2769 = sbr.rel (%p2767) target = $region40
    $region39: #{_forward.1} parent=5 // pred_region
      %s2770 = ssub.s32 %s9, 2
      // Predicated region
      $region41: #{_forward.1} parent=39 // pred_check
        %p2771 = pneg %p106
      $region42: #{_forward.1} parent=39 // pred_check_branch
        %2773 = sbr.rel (%p2771) target = $region44
      $region43: #{_forward.1} parent=39 // pred_region
        %p2774 = scmp.lt.s32.totalorder %s15, 1
        %s2775 = scalar_select %p2774, %s15, 1
        %s2776 = smul.addr %s2775, 8
        %s2777 = scalar_lea.vmem %s3, %s2776
      $region44: #{_forward.1} parent=39 // pred_fallthru
        _
    $region40: #{_forward.1} parent=5 // pred_fallthru
      _
  $region6: #{_forward.1} parent=0 // loop_footer
    %s13 = sadd.s32 1, %s9
  $region7: #{_forward.1} parent=0 // loop_footer_branch
    %8 = sbr.rel target = $region3
  $region8: #{_forward.1} parent=0 // loop_exit
    _

</llo_original>
